<compile_context>
chip_gen: v5e
topology: v5e:2x2
jax: 0.10.0
libtpu: 0.0.40
codegen_flags: <defaults>
</compile_context>

<pallas_src>
import functools

import jax
import jax.numpy as jnp
from jax.experimental import pallas as pl
from jax.experimental.pallas import tpu as pltpu

OUT_CHANNELS = 1000  # fixed by the module definition (out_channels=1000)


def _conv1x1_sigmoid_kernel(x_ref, w_ref, b_ref, c_ref, a_ref):
    # x_ref: (C, t)    -- one batch's spatial tile (channels on sublanes)
    # w_ref: (OUT, C)  -- resident 1x1-conv weight
    # b_ref: (OUT, 1)  -- resident bias, broadcast over the spatial lanes
    # c_ref, a_ref: (OUT, t)
    c = jnp.dot(w_ref[...], x_ref[...], preferred_element_type=jnp.float32)
    c = c + b_ref[...]
    c_ref[...] = c.astype(c_ref.dtype)
    # Exact sigmoid via tanh: one EUP push + two VALU ops, no f32 divide.
    a_ref[...] = (0.5 * jnp.tanh(0.5 * c) + 0.5).astype(a_ref.dtype)


def _round_up(x, m):
    return ((x + m - 1) // m) * m


@functools.partial(jax.jit, static_argnames=("t_hw", "out_dtype"))
def attention_mechanism_m(l, weight, bias, *, t_hw=1024, out_dtype=None):
    """Pallas implementation of AttentionMechanismM.forward.

    Args:
      l:      (N, C, H, W) float32 input (NCHW, like PyTorch).
      weight: (OUT_CHANNELS, C) 1x1-conv weight (kernel spatial dims squeezed).
      bias:   (OUT_CHANNELS,)   conv bias.
      t_hw:   spatial tile (pixels per grid step along H*W), multiple of 128.
      out_dtype: optional output dtype (e.g. jnp.bfloat16 halves HBM writeback).

    Returns:
      (a, c) each of shape (N, OUT_CHANNELS, H, W), matching
      `a = sigmoid(conv1x1(l)); return a, c` from the PyTorch module.
    """
    N, C, H, W = l.shape
    HW = H * W
    out_dtype = l.dtype if out_dtype is None else out_dtype

    # NCHW-native: each batch is already a (C, H*W) matrix -> zero transposes,
    # and the reshape is contiguous (no copy).
    x = l.reshape(N, C, HW)

    # Lane-aligned spatial tile (multiple of 128).  No explicit padding: Pallas
    # masks the ragged last block's writeback, so HW need not divide t.
    t = min(t_hw, _round_up(HW, 128))
    num_tiles = pl.cdiv(HW, t)
    # Guarantee >= 2 grid steps so both v7x TensorCores get work.
    if N == 1 and num_tiles == 1 and HW > 128:
        t = max(128, _round_up(pl.cdiv(HW, 2), 128))
        num_tiles = pl.cdiv(HW, t)

    w = weight.reshape(OUT_CHANNELS, C)   # (OUT, C), resident in VMEM
    b = bias.reshape(OUT_CHANNELS, 1)     # (OUT, 1), resident in VMEM

    # Megacore balance: put the larger parallel extent on the leading grid axis.
    hw_leading = num_tiles >= N
    if hw_leading:
        grid = (num_tiles, N)
        xo_map = lambda j, n: (n, 0, j)
        wb_map = lambda j, n: (0, 0)
    else:
        grid = (N, num_tiles)
        xo_map = lambda n, j: (n, 0, j)
        wb_map = lambda n, j: (0, 0)

    out_shape = (
        jax.ShapeDtypeStruct((N, OUT_CHANNELS, HW), out_dtype),  # c
        jax.ShapeDtypeStruct((N, OUT_CHANNELS, HW), out_dtype),  # a
    )

    # VMEM budget: the two double-buffered (OUT, t) f32 outputs dominate.
    # At t=1024 this is ~18.5 MiB + 8 MiB headroom -> clears v5e's 16 MiB
    # default scoped limit and stays well under v7x's 64 MiB physical VMEM.
    itemsize = 4
    vmem_needed = (
        2 * 2 * OUT_CHANNELS * t * itemsize            # two double-buffered outputs
        + 2 * _round_up(C, 8) * t * itemsize           # double-buffered input tile
        + 2 * OUT_CHANNELS * _round_up(C, 128) * itemsize   # weight (lane-padded)
        + 2 * OUT_CHANNELS * 128 * itemsize            # bias   (lane-padded)
    )
    vmem_limit = int(vmem_needed) + (8 << 20)

    # Mem-bound kernel: tell XLA so it doesn't serialize neighbors around it.
    cost = pl.CostEstimate(
        flops=2 * N * OUT_CHANNELS * C * HW,
        transcendentals=N * OUT_CHANNELS * HW,
        bytes_accessed=(N * C * HW + OUT_CHANNELS * (C + 1)
                        + 2 * N * OUT_CHANNELS * HW) * itemsize,
    )

    c_flat, a_flat = pl.pallas_call(
        _conv1x1_sigmoid_kernel,
        out_shape=out_shape,
        grid_spec=pltpu.PrefetchScalarGridSpec(
            num_scalar_prefetch=0,
            grid=grid,
            in_specs=[
                pl.BlockSpec((pl.Squeezed(), C, t), xo_map),
                pl.BlockSpec((OUT_CHANNELS, C), wb_map),
                pl.BlockSpec((OUT_CHANNELS, 1), wb_map),
            ],
            out_specs=[
                pl.BlockSpec((pl.Squeezed(), OUT_CHANNELS, t), xo_map),
                pl.BlockSpec((pl.Squeezed(), OUT_CHANNELS, t), xo_map),
            ],
        ),
        compiler_params=pltpu.CompilerParams(
            dimension_semantics=("parallel", "parallel"),
            vmem_limit_bytes=vmem_limit,
        ),
        cost_estimate=cost,
    )(x, w, b)

    # Contiguous reshapes only (no transpose / extra HBM traffic).
    c_out = c_flat.reshape(N, OUT_CHANNELS, H, W)
    a_out = a_flat.reshape(N, OUT_CHANNELS, H, W)
    return a_out, c_out


if __name__ == "__main__":
    key = jax.random.PRNGKey(0)
    k_x, k_w, k_b = jax.random.split(key, 3)

    # Small shapes consistent with the module: in_features = 4.
    N, C, H, W = 2, 4, 16, 16
    l = jax.random.normal(k_x, (N, C, H, W), dtype=jnp.float32)

    # 1x1 conv parameters: weight (1000, C), bias (1000,)
    weight = jax.random.normal(k_w, (OUT_CHANNELS, C), dtype=jnp.float32) * 0.05
    bias = jax.random.normal(k_b, (OUT_CHANNELS,), dtype=jnp.float32) * 0.05

    a, c = attention_mechanism_m(l, weight, bias)
    jax.block_until_ready((a, c))

    # Cross-check against plain-JAX reference (1x1 conv == channel matmul).
    c_ref = jnp.einsum("nchw,oc->nohw", l, weight) + bias[None, :, None, None]
    a_ref = jax.nn.sigmoid(c_ref)
    assert a.shape == (N, OUT_CHANNELS, H, W) and c.shape == (N, OUT_CHANNELS, H, W)
    assert jnp.allclose(c, c_ref, atol=1e-4, rtol=1e-4)
    assert jnp.allclose(a, a_ref, atol=1e-5, rtol=1e-5)

    print("KERNEL_OK")
</pallas_src>

<mosaic_0001>
module attributes {stable_mosaic.version = 11 : i64} {
  func.func @_conv1x1_sigmoid_kernel(%arg0: i32, %arg1: i32, %arg2: memref<1x4x256xf32, #tpu.memory_space<vmem>>, %arg3: memref<1000x4xf32, #tpu.memory_space<vmem>>, %arg4: memref<1000x1xf32, #tpu.memory_space<vmem>>, %arg5: memref<1x1000x256xf32, #tpu.memory_space<vmem>>, %arg6: memref<1x1000x256xf32, #tpu.memory_space<vmem>>) attributes {dimension_semantics = [#tpu.dimension_semantics<parallel>, #tpu.dimension_semantics<parallel>], iteration_bounds = array<i64: 2, 1>, scalar_prefetch = 0 : i64, scratch_operands = 0 : i64, tpu.core_type = #tpu.core_type<tc>, window_params = [{transform_indices = @transform_0, window_bounds = array<i64: 1, 4, 256>}, {pipeline_mode = #tpu.pipeline_mode<synchronous>, transform_indices = @transform_1, window_bounds = array<i64: 1000, 4>}, {pipeline_mode = #tpu.pipeline_mode<synchronous>, transform_indices = @transform_2, window_bounds = array<i64: 1000, 1>}, {transform_indices = @transform_3, window_bounds = array<i64: 1, 1000, 256>}, {transform_indices = @transform_4, window_bounds = array<i64: 1, 1000, 256>}]} {
    %c0 = arith.constant 0 : index
    %c0_0 = arith.constant 0 : index
    %0 = vector.load %arg3[%c0, %c0_0] : memref<1000x4xf32, #tpu.memory_space<vmem>>, vector<1000x4xf32>
    %c0_1 = arith.constant 0 : index
    %c0_2 = arith.constant 0 : index
    %c0_3 = arith.constant 0 : index
    %1 = vector.load %arg2[%c0_1, %c0_2, %c0_3] : memref<1x4x256xf32, #tpu.memory_space<vmem>>, vector<1x4x256xf32>
    %2 = vector.shape_cast %1 : vector<1x4x256xf32> to vector<4x256xf32>
    %cst = arith.constant dense<0.000000e+00> : vector<1000x256xf32>
    %3 = tpu.matmul %0, %2, %cst {dimension_numbers = #tpu.dot_dimension_numbers<[1], [0], [0], [1], [0, 0, 1, 1], [], []>} : vector<1000x4xf32>, vector<4x256xf32>, vector<1000x256xf32> -> vector<1000x256xf32>
    %c0_4 = arith.constant 0 : index
    %c0_5 = arith.constant 0 : index
    %4 = vector.load %arg4[%c0_4, %c0_5] : memref<1000x1xf32, #tpu.memory_space<vmem>>, vector<1000x1xf32>
    %5 = vector.broadcast %4 : vector<1000x1xf32> to vector<1000x256xf32>
    %6 = arith.addf %3, %5 : vector<1000x256xf32>
    %c0_6 = arith.constant 0 : index
    %c0_7 = arith.constant 0 : index
    %c0_8 = arith.constant 0 : index
    %7 = vector.load %arg5[%c0_6, %c0_7, %c0_8] : memref<1x1000x256xf32, #tpu.memory_space<vmem>>, vector<1x1000x256xf32>
    %8 = vector.shape_cast %7 : vector<1x1000x256xf32> to vector<1000x256xf32>
    %9 = vector.shape_cast %6 : vector<1000x256xf32> to vector<1x1000x256xf32>
    tpu.vector_store %arg5[%c0_6, %c0_7, %c0_8], %9 {strides = array<i32>} : memref<1x1000x256xf32, #tpu.memory_space<vmem>>, vector<1x1000x256xf32>,
    %cst_9 = arith.constant 5.000000e-01 : f32
    %10 = vector.broadcast %cst_9 : f32 to vector<1000x256xf32>
    %11 = arith.mulf %10, %6 : vector<1000x256xf32>
    %12 = math.tanh %11 : vector<1000x256xf32>
    %cst_10 = arith.constant 5.000000e-01 : f32
    %13 = vector.broadcast %cst_10 : f32 to vector<1000x256xf32>
    %14 = arith.mulf %13, %12 : vector<1000x256xf32>
    %cst_11 = arith.constant 5.000000e-01 : f32
    %15 = vector.broadcast %cst_11 : f32 to vector<1000x256xf32>
    %16 = arith.addf %14, %15 : vector<1000x256xf32>
    %c0_12 = arith.constant 0 : index
    %c0_13 = arith.constant 0 : index
    %c0_14 = arith.constant 0 : index
    %17 = vector.load %arg6[%c0_12, %c0_13, %c0_14] : memref<1x1000x256xf32, #tpu.memory_space<vmem>>, vector<1x1000x256xf32>
    %18 = vector.shape_cast %17 : vector<1x1000x256xf32> to vector<1000x256xf32>
    %19 = vector.shape_cast %16 : vector<1000x256xf32> to vector<1x1000x256xf32>
    tpu.vector_store %arg6[%c0_12, %c0_13, %c0_14], %19 {strides = array<i32>} : memref<1x1000x256xf32, #tpu.memory_space<vmem>>, vector<1x1000x256xf32>,
    return
  }
  func.func @transform_0(%arg0: i32, %arg1: i32) -> (i32, i32, i32) {
    %c0_i32 = arith.constant 0 : i32
    %c0_i32_0 = arith.constant 0 : i32
    return %arg0, %c0_i32, %arg1 : i32, i32, i32
  }
  func.func @transform_1(%arg0: i32, %arg1: i32) -> (i32, i32) {
    %c0_i32 = arith.constant 0 : i32
    %c0_i32_0 = arith.constant 0 : i32
    %c0_i32_1 = arith.constant 0 : i32
    return %c0_i32, %c0_i32_0 : i32, i32
  }
  func.func @transform_2(%arg0: i32, %arg1: i32) -> (i32, i32) {
    %c0_i32 = arith.constant 0 : i32
    %c0_i32_0 = arith.constant 0 : i32
    %c0_i32_1 = arith.constant 0 : i32
    return %c0_i32, %c0_i32_0 : i32, i32
  }
  func.func @transform_3(%arg0: i32, %arg1: i32) -> (i32, i32, i32) {
    %c0_i32 = arith.constant 0 : i32
    %c0_i32_0 = arith.constant 0 : i32
    return %arg0, %c0_i32, %arg1 : i32, i32, i32
  }
  func.func @transform_4(%arg0: i32, %arg1: i32) -> (i32, i32, i32) {
    %c0_i32 = arith.constant 0 : i32
    %c0_i32_0 = arith.constant 0 : i32
    return %arg0, %c0_i32, %arg1 : i32, i32, i32
  }
}

</mosaic_0001>

<llo_original>
// kernel: attention_mechanism_m.1
$region0: #{attention_mechanism_m.1}
  #allocation0 [shape = 'u32[]', space=smem, size = 0x4, offset = 0x4, fixed_abs, tag = 'smem constant byte address 0x4 - core index']
  #allocation1 [shape = 'u32[72,128]{1,0:T(1,128)}', space=vmem, size = 0x9000, scoped, tag = 'internal scratch']
  %s0 = inlined_call_operand.vmem [shape: f32[2,4,256], index: 0, kind: input, shape index: {}]
  %s1 = inlined_call_operand.vmem [shape: f32[1000,4], index: 1, kind: input, shape index: {}]
  %s2 = inlined_call_operand.vmem [shape: f32[1000,1], index: 2, kind: input, shape index: {}]
  %s3 = inlined_call_operand.vmem [shape: f32[2,1000,256], index: 3, kind: output, shape index: {0}]
  %s4 = inlined_call_operand.vmem [shape: f32[2,1000,256], index: 4, kind: output, shape index: {1}]
  %5 = xla_tuple %s3, %s4
  %s6 = sld [smem:[#allocation0]]
  $region53: #{attention_mechanism_m.1} parent=0
    _
  %s8 = ssub.s32 1, %s6
  %s9 = scalar_select 0, %s8, %s6
  loop: start=0, step=1, limit=4
  $region2: #{attention_mechanism_m.1} parent=0 // loop_pre_header
    _
  $region3: #{attention_mechanism_m.1} parent=0 // loop_header
    %s11 = sphi 0, %s15
    %p12 = scmp.ge.s32.totalorder %s11, 4
    %s18 = sphi 0, %s30
    %s19 = sphi 0, %s26
    %s20 = sphi 0, %s18
    %s21 = sphi 0, %s19
    %s22 = sphi 0, %s20
    %s23 = sphi 0, %s21
    %s35 = sphi 0, %s37
    %s38 = sphi 0, %s35
    %s39 = sphi 0, %s38
    %s55 = sphi 0, %s39
    %s59 = sphi 0, %s59
    %s61 = sphi 0, %s59
    %s62 = sphi 0, %s61
    %s76 = sphi 0, %s62
    %s80 = sphi 0, %s80
    %s82 = sphi 0, %s80
    %s83 = sphi 0, %s82
    %s97 = sphi 0, %s83
    %s105 = sphi 0, %s107
    %s108 = sphi 0, %s105
    %s109 = sphi 0, %s108
    %s125 = sphi 0, %s109
    %s133 = sphi 0, %s135
    %s136 = sphi 0, %s133
    %s137 = sphi 0, %s136
    %s153 = sphi 0, %s137
  $region4: #{attention_mechanism_m.1} parent=0 // loop_header_branch
    %14 = sbr.rel (%p12) target = $region8
  $region5: #{attention_mechanism_m.1} parent=0 // loop_body
    %s16 = ssub.s32 %s11, 1
    %s17 = ssub.s32 %s11, 2
    %s24 = sadd.s32 1, %s19
    %p25 = scmp.ge.s32.totalorder %s24, 1
    %s26 = scalar_select %p25, 0, %s24
    %s27 = sadd.s32 1, %s18
    %s28 = scalar_select %p25, %s27, %s18
    %p29 = scmp.ge.s32.totalorder %s28, 2
    %s30 = scalar_select %p29, 0, %s28
    %s31 = ssub.s32 %s18, %s30
    %s32 = ssub.s32 %s19, %s26
    %s33 = sor.u32 %s31, %s32
    %p34 = scmp.eq.s32.totalorder %s33, 0
    %s36 = sadd.s32 %s35, 1
    %s37 = scalar_select %p34, %s35, %s36
    %p40 = pneg %p34
    %p41 = scmp.eq.s32.totalorder %s11, 1
    %p42 = por %p40, %p41
    %p43 = scmp.ne.s32.totalorder %s35, %s38
    %p44 = scmp.eq.s32.totalorder %s11, 0
    %p45 = por %p43, %p44
    %p46 = scmp.ne.s32.totalorder %s35, %s38
    %p47 = scmp.eq.s32.totalorder %s16, 1
    %p48 = por %p46, %p47
    %p49 = scmp.ne.s32.totalorder %s38, %s39
    %p50 = scmp.eq.s32.totalorder %s16, 0
    %p51 = por %p49, %p50
    %p52 = scmp.ne.s32.totalorder %s38, %s39
    %p53 = scmp.eq.s32.totalorder %s17, 1
    %p54 = por %p52, %p53
    %p56 = scmp.ne.s32.totalorder %s39, %s55
    %p57 = scmp.eq.s32.totalorder %s17, 0
    %p58 = por %p56, %p57
    %s60 = sadd.s32 %s59, 1
    %p63 = scmp.eq.s32.totalorder %s11, 1
    %p64 = scmp.ne.s32.totalorder %s59, %s61
    %p65 = scmp.eq.s32.totalorder %s11, 0
    %p66 = por %p64, %p65
    %p67 = scmp.ne.s32.totalorder %s59, %s61
    %p68 = scmp.eq.s32.totalorder %s16, 1
    %p69 = por %p67, %p68
    %p70 = scmp.ne.s32.totalorder %s61, %s62
    %p71 = scmp.eq.s32.totalorder %s16, 0
    %p72 = por %p70, %p71
    %p73 = scmp.ne.s32.totalorder %s61, %s62
    %p74 = scmp.eq.s32.totalorder %s17, 1
    %p75 = por %p73, %p74
    %p77 = scmp.ne.s32.totalorder %s62, %s76
    %p78 = scmp.eq.s32.totalorder %s17, 0
    %p79 = por %p77, %p78
    %s81 = sadd.s32 %s80, 1
    %p84 = scmp.eq.s32.totalorder %s11, 1
    %p85 = scmp.ne.s32.totalorder %s80, %s82
    %p86 = scmp.eq.s32.totalorder %s11, 0
    %p87 = por %p85, %p86
    %p88 = scmp.ne.s32.totalorder %s80, %s82
    %p89 = scmp.eq.s32.totalorder %s16, 1
    %p90 = por %p88, %p89
    %p91 = scmp.ne.s32.totalorder %s82, %s83
    %p92 = scmp.eq.s32.totalorder %s16, 0
    %p93 = por %p91, %p92
    %p94 = scmp.ne.s32.totalorder %s82, %s83
    %p95 = scmp.eq.s32.totalorder %s17, 1
    %p96 = por %p94, %p95
    %p98 = scmp.ne.s32.totalorder %s83, %s97
    %p99 = scmp.eq.s32.totalorder %s17, 0
    %p100 = por %p98, %p99
    %s101 = ssub.s32 %s18, %s30
    %s102 = ssub.s32 %s19, %s26
    %s103 = sor.u32 %s101, %s102
    %p104 = scmp.eq.s32.totalorder %s103, 0
    %s106 = sadd.s32 %s105, 1
    %s107 = scalar_select %p104, %s105, %s106
    %p110 = pneg %p104
    %p111 = scmp.eq.s32.totalorder %s11, 1
    %p112 = por %p110, %p111
    %p113 = scmp.ne.s32.totalorder %s105, %s108
    %p114 = scmp.eq.s32.totalorder %s11, 0
    %p115 = por %p113, %p114
    %p116 = scmp.ne.s32.totalorder %s105, %s108
    %p117 = scmp.eq.s32.totalorder %s16, 1
    %p118 = por %p116, %p117
    %p119 = scmp.ne.s32.totalorder %s108, %s109
    %p120 = scmp.eq.s32.totalorder %s16, 0
    %p121 = por %p119, %p120
    %p122 = scmp.ne.s32.totalorder %s108, %s109
    %p123 = scmp.eq.s32.totalorder %s17, 1
    %p124 = por %p122, %p123
    %p126 = scmp.ne.s32.totalorder %s109, %s125
    %p127 = scmp.eq.s32.totalorder %s17, 0
    %p128 = por %p126, %p127
    %s129 = ssub.s32 %s18, %s30
    %s130 = ssub.s32 %s19, %s26
    %s131 = sor.u32 %s129, %s130
    %p132 = scmp.eq.s32.totalorder %s131, 0
    %s134 = sadd.s32 %s133, 1
    %s135 = scalar_select %p132, %s133, %s134
    %p138 = pneg %p132
    %p139 = scmp.eq.s32.totalorder %s11, 1
    %p140 = por %p138, %p139
    %p141 = scmp.ne.s32.totalorder %s133, %s136
    %p142 = scmp.eq.s32.totalorder %s11, 0
    %p143 = por %p141, %p142
    %p144 = scmp.ne.s32.totalorder %s133, %s136
    %p145 = scmp.eq.s32.totalorder %s16, 1
    %p146 = por %p144, %p145
    %p147 = scmp.ne.s32.totalorder %s136, %s137
    %p148 = scmp.eq.s32.totalorder %s16, 0
    %p149 = por %p147, %p148
    %p150 = scmp.ne.s32.totalorder %s136, %s137
    %p151 = scmp.eq.s32.totalorder %s17, 1
    %p152 = por %p150, %p151
    %p154 = scmp.ne.s32.totalorder %s137, %s153
    %p155 = scmp.eq.s32.totalorder %s17, 0
    %p156 = por %p154, %p155
    %p157 = scmp.le.s32.totalorder 1, %s11
    %p158 = scmp.lt.s32.totalorder %s11, 3
    %p159 = pnand %p157, %p158
    %p160 = pneg %p159
    // Predicated region
    $region9: #{attention_mechanism_m.1} parent=5 // pred_check
      _
    $region10: #{attention_mechanism_m.1} parent=5 // pred_check_branch
      %162 = sbr.rel (%p159) target = $region12
    $region11: #{attention_mechanism_m.1} parent=5 // pred_region
      %s163 = ssub.s32 %s11, 1
      // Predicated region
      $region13: #{attention_mechanism_m.1} parent=11 // pred_check
        %p164 = pneg %p72
      $region14: #{attention_mechanism_m.1} parent=11 // pred_check_branch
        %166 = sbr.rel (%p164) target = $region16
      $region15: #{attention_mechanism_m.1} parent=11 // pred_region
        _
      $region16: #{attention_mechanism_m.1} parent=11 // pred_fallthru
        _
      // Predicated region
      $region17: #{attention_mechanism_m.1} parent=11 // pred_check
        %p167 = pneg %p93
      $region18: #{attention_mechanism_m.1} parent=11 // pred_check_branch
        %169 = sbr.rel (%p167) target = $region20
      $region19: #{attention_mechanism_m.1} parent=11 // pred_region
        _
      $region20: #{attention_mechanism_m.1} parent=11 // pred_fallthru
        _
    $region12: #{attention_mechanism_m.1} parent=5 // pred_fallthru
      _
    %p170 = scmp.lt.s32.totalorder %s11, 2
    // Predicated region
    $region21: #{attention_mechanism_m.1} parent=5 // pred_check
      %p171 = pneg %p170
    $region22: #{attention_mechanism_m.1} parent=5 // pred_check_branch
      %173 = sbr.rel (%p171) target = $region24
    $region23: #{attention_mechanism_m.1} parent=5 // pred_region
      // Predicated region
      $region25: #{attention_mechanism_m.1} parent=23 // pred_check
        %p174 = pneg %p45
      $region26: #{attention_mechanism_m.1} parent=23 // pred_check_branch
        %176 = sbr.rel (%p174) target = $region28
      $region27: #{attention_mechanism_m.1} parent=23 // pred_region
        %s177 = smul.u32 2, %s19
        %p178 = scmp.lt.s32.totalorder %s18, 1
        %s179 = scalar_select %p178, %s18, 1
        %p180 = scmp.lt.s32.totalorder %s177, 1
        %s181 = scalar_select %p180, %s177, 1
        %s182 = smul.addr %s179, 2
        %s183 = sadd.s32 %s181, %s182
        %s184 = smul.addr %s183, 4
        %s185 = scalar_lea.vmem %s0, %s184
        %s186 = smul.u32 2, %s19
      $region28: #{attention_mechanism_m.1} parent=23 // pred_fallthru
        _
    $region24: #{attention_mechanism_m.1} parent=5 // pred_fallthru
      _
    %p187 = scmp.le.s32.totalorder 1, %s11
    %p188 = scmp.lt.s32.totalorder %s11, 3
    %p189 = pnand %p187, %p188
    %p190 = pneg %p189
    // Predicated region
    $region29: #{attention_mechanism_m.1} parent=5 // pred_check
      _
    $region30: #{attention_mechanism_m.1} parent=5 // pred_check_branch
      %192 = sbr.rel (%p189) target = $region32
    $region31: #{attention_mechanism_m.1} parent=5 // pred_region
      %s193 = ssub.s32 %s11, 1
      %s194 = smul.u32 2, %s21
      %p195 = scmp.lt.s32.totalorder %s20, 1
      %s196 = scalar_select %p195, %s20, 1
      %p197 = scmp.lt.s32.totalorder %s194, 1
      %s198 = scalar_select %p197, %s194, 1
      %s199 = smul.addr %s196, 2
      %s200 = sadd.s32 %s198, %s199
      %s201 = smul.addr %s200, 4
      %s202 = scalar_lea.vmem %s0, %s201
      %p203 = pneg %p51
      %p204 = pneg %p48
      %p205 = pneg %p72
      %p206 = pneg %p69
      %p207 = pneg %p93
      %p208 = pneg %p90
      %p209 = pneg %p121
      %p210 = pneg %p118
      %s211 = smul.u32 2, %s21
      %p212 = scmp.lt.s32.totalorder %s20, 1
      %s213 = scalar_select %p212, %s20, 1
      %p214 = scmp.lt.s32.totalorder %s211, 1
      %s215 = scalar_select %p214, %s211, 1
      %s216 = smul.addr %s213, 250
      %s217 = sadd.s32 %s215, %s216
      %s218 = smul.addr %s217, 8
      %s219 = scalar_lea.vmem %s3, %s218
      %p220 = pneg %p149
      %p221 = pneg %p146
      %s222 = smul.u32 2, %s21
      %p223 = scmp.lt.s32.totalorder %s20, 1
      %s224 = scalar_select %p223, %s20, 1
      %p225 = scmp.lt.s32.totalorder %s222, 1
      %s226 = scalar_select %p225, %s222, 1
      %s227 = smul.addr %s224, 250
      %s228 = sadd.s32 %s226, %s227
      %s229 = smul.addr %s228, 8
      %s230 = scalar_lea.vmem %s4, %s229
      %s231 = smul.u32 2, %s21
      %p232 = scmp.lt.s32.totalorder %s20, 1
      %s233 = scalar_select %p232, %s20, 1
      %p234 = scmp.lt.s32.totalorder %s231, 1
      %s235 = scalar_select %p234, %s231, 1
      %s236 = smul.addr %s233, 2
      %s237 = sadd.s32 %s235, %s236
      %s238 = smul.addr %s237, 4
      %s239 = scalar_lea.vmem %s0, %s238
      %s240 = smul.u32 2, %s21
      %s241 = smul.u32 2, %s21
      %p242 = scmp.lt.s32.totalorder %s20, 1
      %s243 = scalar_select %p242, %s20, 1
      %p244 = scmp.lt.s32.totalorder %s241, 1
      %s245 = scalar_select %p244, %s241, 1
      %s246 = smul.addr %s243, 250
      %s247 = sadd.s32 %s245, %s246
      %s248 = smul.addr %s247, 8
      %s249 = scalar_lea.vmem %s3, %s248
      %s250 = smul.u32 2, %s21
      %s251 = smul.u32 2, %s21
      %p252 = scmp.lt.s32.totalorder %s20, 1
      %s253 = scalar_select %p252, %s20, 1
      %p254 = scmp.lt.s32.totalorder %s251, 1
      %s255 = scalar_select %p254, %s251, 1
      %s256 = smul.addr %s253, 250
      %s257 = sadd.s32 %s255, %s256
      %s258 = smul.addr %s257, 8
      %s259 = scalar_lea.vmem %s4, %s258
      %s260 = smul.u32 2, %s21
      %v261 = vld [vmem:[%s1] sm:$0xff]
      %v262 = vld [vmem:[%s1 + $0x8] sm:$0xff]
      %v263 = vld [vmem:[%s1 + $0x10] sm:$0xff]
      %v264 = vld [vmem:[%s1 + $0x18] sm:$0xff]
      %v265 = vld [vmem:[%s1 + $0x20] sm:$0xff]
      %v266 = vld [vmem:[%s1 + $0x28] sm:$0xff]
      %v267 = vld [vmem:[%s1 + $0x30] sm:$0xff]
      %v268 = vld [vmem:[%s1 + $0x38] sm:$0xff]
      %v269 = vld [vmem:[%s1 + $0x40] sm:$0xff]
      %v270 = vld [vmem:[%s1 + $0x48] sm:$0xff]
      %v271 = vld [vmem:[%s1 + $0x50] sm:$0xff]
      %v272 = vld [vmem:[%s1 + $0x58] sm:$0xff]
      %v273 = vld [vmem:[%s1 + $0x60] sm:$0xff]
      %v274 = vld [vmem:[%s1 + $0x68] sm:$0xff]
      %v275 = vld [vmem:[%s1 + $0x70] sm:$0xff]
      %v276 = vld [vmem:[%s1 + $0x78] sm:$0xff]
      %v277 = vld [vmem:[%s1 + $0x80] sm:$0xff]
      %v278 = vld [vmem:[%s1 + $0x88] sm:$0xff]
      %v279 = vld [vmem:[%s1 + $0x90] sm:$0xff]
      %v280 = vld [vmem:[%s1 + $0x98] sm:$0xff]
      %v281 = vld [vmem:[%s1 + $0xa0] sm:$0xff]
      %v282 = vld [vmem:[%s1 + $0xa8] sm:$0xff]
      %v283 = vld [vmem:[%s1 + $0xb0] sm:$0xff]
      %v284 = vld [vmem:[%s1 + $0xb8] sm:$0xff]
      %v285 = vld [vmem:[%s1 + $0xc0] sm:$0xff]
      %v286 = vld [vmem:[%s1 + $0xc8] sm:$0xff]
      %v287 = vld [vmem:[%s1 + $0xd0] sm:$0xff]
      %v288 = vld [vmem:[%s1 + $0xd8] sm:$0xff]
      %v289 = vld [vmem:[%s1 + $0xe0] sm:$0xff]
      %v290 = vld [vmem:[%s1 + $0xe8] sm:$0xff]
      %v291 = vld [vmem:[%s1 + $0xf0] sm:$0xff]
      %v292 = vld [vmem:[%s1 + $0xf8] sm:$0xff]
      %v293 = vld [vmem:[%s1 + $0x100] sm:$0xff]
      %v294 = vld [vmem:[%s1 + $0x108] sm:$0xff]
      %v295 = vld [vmem:[%s1 + $0x110] sm:$0xff]
      %v296 = vld [vmem:[%s1 + $0x118] sm:$0xff]
      %v297 = vld [vmem:[%s1 + $0x120] sm:$0xff]
      %v298 = vld [vmem:[%s1 + $0x128] sm:$0xff]
      %v299 = vld [vmem:[%s1 + $0x130] sm:$0xff]
      %v300 = vld [vmem:[%s1 + $0x138] sm:$0xff]
      %v301 = vld [vmem:[%s1 + $0x140] sm:$0xff]
      %v302 = vld [vmem:[%s1 + $0x148] sm:$0xff]
      %v303 = vld [vmem:[%s1 + $0x150] sm:$0xff]
      %v304 = vld [vmem:[%s1 + $0x158] sm:$0xff]
      %v305 = vld [vmem:[%s1 + $0x160] sm:$0xff]
      %v306 = vld [vmem:[%s1 + $0x168] sm:$0xff]
      %v307 = vld [vmem:[%s1 + $0x170] sm:$0xff]
      %v308 = vld [vmem:[%s1 + $0x178] sm:$0xff]
      %v309 = vld [vmem:[%s1 + $0x180] sm:$0xff]
      %v310 = vld [vmem:[%s1 + $0x188] sm:$0xff]
      %v311 = vld [vmem:[%s1 + $0x190] sm:$0xff]
      %v312 = vld [vmem:[%s1 + $0x198] sm:$0xff]
      %v313 = vld [vmem:[%s1 + $0x1a0] sm:$0xff]
      %v314 = vld [vmem:[%s1 + $0x1a8] sm:$0xff]
      %v315 = vld [vmem:[%s1 + $0x1b0] sm:$0xff]
      %v316 = vld [vmem:[%s1 + $0x1b8] sm:$0xff]
      %v317 = vld [vmem:[%s1 + $0x1c0] sm:$0xff]
      %v318 = vld [vmem:[%s1 + $0x1c8] sm:$0xff]
      %v319 = vld [vmem:[%s1 + $0x1d0] sm:$0xff]
      %v320 = vld [vmem:[%s1 + $0x1d8] sm:$0xff]
      %v321 = vld [vmem:[%s1 + $0x1e0] sm:$0xff]
      %v322 = vld [vmem:[%s1 + $0x1e8] sm:$0xff]
      %v323 = vld [vmem:[%s1 + $0x1f0] sm:$0xff]
      %v324 = vld [vmem:[%s1 + $0x1f8] sm:$0xff]
      %v325 = vld [vmem:[%s1 + $0x200] sm:$0xff]
      %v326 = vld [vmem:[%s1 + $0x208] sm:$0xff]
      %v327 = vld [vmem:[%s1 + $0x210] sm:$0xff]
      %v328 = vld [vmem:[%s1 + $0x218] sm:$0xff]
      %v329 = vld [vmem:[%s1 + $0x220] sm:$0xff]
      %v330 = vld [vmem:[%s1 + $0x228] sm:$0xff]
      %v331 = vld [vmem:[%s1 + $0x230] sm:$0xff]
      %v332 = vld [vmem:[%s1 + $0x238] sm:$0xff]
      %v333 = vld [vmem:[%s1 + $0x240] sm:$0xff]
      %v334 = vld [vmem:[%s1 + $0x248] sm:$0xff]
      %v335 = vld [vmem:[%s1 + $0x250] sm:$0xff]
      %v336 = vld [vmem:[%s1 + $0x258] sm:$0xff]
      %v337 = vld [vmem:[%s1 + $0x260] sm:$0xff]
      %v338 = vld [vmem:[%s1 + $0x268] sm:$0xff]
      %v339 = vld [vmem:[%s1 + $0x270] sm:$0xff]
      %v340 = vld [vmem:[%s1 + $0x278] sm:$0xff]
      %v341 = vld [vmem:[%s1 + $0x280] sm:$0xff]
      %v342 = vld [vmem:[%s1 + $0x288] sm:$0xff]
      %v343 = vld [vmem:[%s1 + $0x290] sm:$0xff]
      %v344 = vld [vmem:[%s1 + $0x298] sm:$0xff]
      %v345 = vld [vmem:[%s1 + $0x2a0] sm:$0xff]
      %v346 = vld [vmem:[%s1 + $0x2a8] sm:$0xff]
      %v347 = vld [vmem:[%s1 + $0x2b0] sm:$0xff]
      %v348 = vld [vmem:[%s1 + $0x2b8] sm:$0xff]
      %v349 = vld [vmem:[%s1 + $0x2c0] sm:$0xff]
      %v350 = vld [vmem:[%s1 + $0x2c8] sm:$0xff]
      %v351 = vld [vmem:[%s1 + $0x2d0] sm:$0xff]
      %v352 = vld [vmem:[%s1 + $0x2d8] sm:$0xff]
      %v353 = vld [vmem:[%s1 + $0x2e0] sm:$0xff]
      %v354 = vld [vmem:[%s1 + $0x2e8] sm:$0xff]
      %v355 = vld [vmem:[%s1 + $0x2f0] sm:$0xff]
      %v356 = vld [vmem:[%s1 + $0x2f8] sm:$0xff]
      %v357 = vld [vmem:[%s1 + $0x300] sm:$0xff]
      %v358 = vld [vmem:[%s1 + $0x308] sm:$0xff]
      %v359 = vld [vmem:[%s1 + $0x310] sm:$0xff]
      %v360 = vld [vmem:[%s1 + $0x318] sm:$0xff]
      %v361 = vld [vmem:[%s1 + $0x320] sm:$0xff]
      %v362 = vld [vmem:[%s1 + $0x328] sm:$0xff]
      %v363 = vld [vmem:[%s1 + $0x330] sm:$0xff]
      %v364 = vld [vmem:[%s1 + $0x338] sm:$0xff]
      %v365 = vld [vmem:[%s1 + $0x340] sm:$0xff]
      %v366 = vld [vmem:[%s1 + $0x348] sm:$0xff]
      %v367 = vld [vmem:[%s1 + $0x350] sm:$0xff]
      %v368 = vld [vmem:[%s1 + $0x358] sm:$0xff]
      %v369 = vld [vmem:[%s1 + $0x360] sm:$0xff]
      %v370 = vld [vmem:[%s1 + $0x368] sm:$0xff]
      %v371 = vld [vmem:[%s1 + $0x370] sm:$0xff]
      %v372 = vld [vmem:[%s1 + $0x378] sm:$0xff]
      %v373 = vld [vmem:[%s1 + $0x380] sm:$0xff]
      %v374 = vld [vmem:[%s1 + $0x388] sm:$0xff]
      %v375 = vld [vmem:[%s1 + $0x390] sm:$0xff]
      %v376 = vld [vmem:[%s1 + $0x398] sm:$0xff]
      %v377 = vld [vmem:[%s1 + $0x3a0] sm:$0xff]
      %v378 = vld [vmem:[%s1 + $0x3a8] sm:$0xff]
      %v379 = vld [vmem:[%s1 + $0x3b0] sm:$0xff]
      %v380 = vld [vmem:[%s1 + $0x3b8] sm:$0xff]
      %v381 = vld [vmem:[%s1 + $0x3c0] sm:$0xff]
      %v382 = vld [vmem:[%s1 + $0x3c8] sm:$0xff]
      %v383 = vld [vmem:[%s1 + $0x3d0] sm:$0xff]
      %v384 = vld [vmem:[%s1 + $0x3d8] sm:$0xff]
      %v385 = vld [vmem:[%s1 + $0x3e0] sm:$0xff]
      %v386 = vld [vmem:[%s239] sm:$0xff]
      %v387 = vld [vmem:[%s2] sm:$0xff]
      %v388 = vld [vmem:[%s2 + $0x8] sm:$0xff]
      %v389 = vld [vmem:[%s2 + $0x10] sm:$0xff]
      %v390 = vld [vmem:[%s2 + $0x18] sm:$0xff]
      %v391 = vld [vmem:[%s2 + $0x20] sm:$0xff]
      %v392 = vld [vmem:[%s2 + $0x28] sm:$0xff]
      %v393 = vld [vmem:[%s2 + $0x30] sm:$0xff]
      %v394 = vld [vmem:[%s2 + $0x38] sm:$0xff]
      %v395 = vld [vmem:[%s2 + $0x40] sm:$0xff]
      %v396 = vld [vmem:[%s2 + $0x48] sm:$0xff]
      %v397 = vld [vmem:[%s2 + $0x50] sm:$0xff]
      %v398 = vld [vmem:[%s2 + $0x58] sm:$0xff]
      %v399 = vld [vmem:[%s2 + $0x60] sm:$0xff]
      %v400 = vld [vmem:[%s2 + $0x68] sm:$0xff]
      %v401 = vld [vmem:[%s2 + $0x70] sm:$0xff]
      %v402 = vld [vmem:[%s2 + $0x78] sm:$0xff]
      %v403 = vld [vmem:[%s2 + $0x80] sm:$0xff]
      %v404 = vld [vmem:[%s2 + $0x88] sm:$0xff]
      %v405 = vld [vmem:[%s2 + $0x90] sm:$0xff]
      %v406 = vld [vmem:[%s2 + $0x98] sm:$0xff]
      %v407 = vld [vmem:[%s2 + $0xa0] sm:$0xff]
      %v408 = vld [vmem:[%s2 + $0xa8] sm:$0xff]
      %v409 = vld [vmem:[%s2 + $0xb0] sm:$0xff]
      %v410 = vld [vmem:[%s2 + $0xb8] sm:$0xff]
      %v411 = vld [vmem:[%s2 + $0xc0] sm:$0xff]
      %v412 = vld [vmem:[%s2 + $0xc8] sm:$0xff]
      %v413 = vld [vmem:[%s2 + $0xd0] sm:$0xff]
      %v414 = vld [vmem:[%s2 + $0xd8] sm:$0xff]
      %v415 = vld [vmem:[%s2 + $0xe0] sm:$0xff]
      %v416 = vld [vmem:[%s2 + $0xe8] sm:$0xff]
      %v417 = vld [vmem:[%s2 + $0xf0] sm:$0xff]
      %v418 = vld [vmem:[%s2 + $0xf8] sm:$0xff]
      %v419 = vld [vmem:[%s2 + $0x100] sm:$0xff]
      %v420 = vld [vmem:[%s2 + $0x108] sm:$0xff]
      %v421 = vld [vmem:[%s2 + $0x110] sm:$0xff]
      %v422 = vld [vmem:[%s2 + $0x118] sm:$0xff]
      %v423 = vld [vmem:[%s2 + $0x120] sm:$0xff]
      %v424 = vld [vmem:[%s2 + $0x128] sm:$0xff]
      %v425 = vld [vmem:[%s2 + $0x130] sm:$0xff]
      %v426 = vld [vmem:[%s2 + $0x138] sm:$0xff]
      %v427 = vld [vmem:[%s2 + $0x140] sm:$0xff]
      %v428 = vld [vmem:[%s2 + $0x148] sm:$0xff]
      %v429 = vld [vmem:[%s2 + $0x150] sm:$0xff]
      %v430 = vld [vmem:[%s2 + $0x158] sm:$0xff]
      %v431 = vld [vmem:[%s2 + $0x160] sm:$0xff]
      %v432 = vld [vmem:[%s2 + $0x168] sm:$0xff]
      %v433 = vld [vmem:[%s2 + $0x170] sm:$0xff]
      %v434 = vld [vmem:[%s2 + $0x178] sm:$0xff]
      %v435 = vld [vmem:[%s2 + $0x180] sm:$0xff]
      %v436 = vld [vmem:[%s2 + $0x188] sm:$0xff]
      %v437 = vld [vmem:[%s2 + $0x190] sm:$0xff]
      %v438 = vld [vmem:[%s2 + $0x198] sm:$0xff]
      %v439 = vld [vmem:[%s2 + $0x1a0] sm:$0xff]
      %v440 = vld [vmem:[%s2 + $0x1a8] sm:$0xff]
      %v441 = vld [vmem:[%s2 + $0x1b0] sm:$0xff]
      %v442 = vld [vmem:[%s2 + $0x1b8] sm:$0xff]
      %v443 = vld [vmem:[%s2 + $0x1c0] sm:$0xff]
      %v444 = vld [vmem:[%s2 + $0x1c8] sm:$0xff]
      %v445 = vld [vmem:[%s2 + $0x1d0] sm:$0xff]
      %v446 = vld [vmem:[%s2 + $0x1d8] sm:$0xff]
      %v447 = vld [vmem:[%s2 + $0x1e0] sm:$0xff]
      %v448 = vld [vmem:[%s2 + $0x1e8] sm:$0xff]
      %v449 = vld [vmem:[%s2 + $0x1f0] sm:$0xff]
      %v450 = vld [vmem:[%s2 + $0x1f8] sm:$0xff]
      %v451 = vld [vmem:[%s2 + $0x200] sm:$0xff]
      %v452 = vld [vmem:[%s2 + $0x208] sm:$0xff]
      %v453 = vld [vmem:[%s2 + $0x210] sm:$0xff]
      %v454 = vld [vmem:[%s2 + $0x218] sm:$0xff]
      %v455 = vld [vmem:[%s2 + $0x220] sm:$0xff]
      %v456 = vld [vmem:[%s2 + $0x228] sm:$0xff]
      %v457 = vld [vmem:[%s2 + $0x230] sm:$0xff]
      %v458 = vld [vmem:[%s2 + $0x238] sm:$0xff]
      %v459 = vld [vmem:[%s2 + $0x240] sm:$0xff]
      %v460 = vld [vmem:[%s2 + $0x248] sm:$0xff]
      %v461 = vld [vmem:[%s2 + $0x250] sm:$0xff]
      %v462 = vld [vmem:[%s2 + $0x258] sm:$0xff]
      %v463 = vld [vmem:[%s2 + $0x260] sm:$0xff]
      %v464 = vld [vmem:[%s2 + $0x268] sm:$0xff]
      %v465 = vld [vmem:[%s2 + $0x270] sm:$0xff]
      %v466 = vld [vmem:[%s2 + $0x278] sm:$0xff]
      %v467 = vld [vmem:[%s2 + $0x280] sm:$0xff]
      %v468 = vld [vmem:[%s2 + $0x288] sm:$0xff]
      %v469 = vld [vmem:[%s2 + $0x290] sm:$0xff]
      %v470 = vld [vmem:[%s2 + $0x298] sm:$0xff]
      %v471 = vld [vmem:[%s2 + $0x2a0] sm:$0xff]
      %v472 = vld [vmem:[%s2 + $0x2a8] sm:$0xff]
      %v473 = vld [vmem:[%s2 + $0x2b0] sm:$0xff]
      %v474 = vld [vmem:[%s2 + $0x2b8] sm:$0xff]
      %v475 = vld [vmem:[%s2 + $0x2c0] sm:$0xff]
      %v476 = vld [vmem:[%s2 + $0x2c8] sm:$0xff]
      %v477 = vld [vmem:[%s2 + $0x2d0] sm:$0xff]
      %v478 = vld [vmem:[%s2 + $0x2d8] sm:$0xff]
      %v479 = vld [vmem:[%s2 + $0x2e0] sm:$0xff]
      %v480 = vld [vmem:[%s2 + $0x2e8] sm:$0xff]
      %v481 = vld [vmem:[%s2 + $0x2f0] sm:$0xff]
      %v482 = vld [vmem:[%s2 + $0x2f8] sm:$0xff]
      %v483 = vld [vmem:[%s2 + $0x300] sm:$0xff]
      %v484 = vld [vmem:[%s2 + $0x308] sm:$0xff]
      %v485 = vld [vmem:[%s2 + $0x310] sm:$0xff]
      %v486 = vld [vmem:[%s2 + $0x318] sm:$0xff]
      %v487 = vld [vmem:[%s2 + $0x320] sm:$0xff]
      %v488 = vld [vmem:[%s2 + $0x328] sm:$0xff]
      %v489 = vld [vmem:[%s2 + $0x330] sm:$0xff]
      %v490 = vld [vmem:[%s2 + $0x338] sm:$0xff]
      %v491 = vld [vmem:[%s2 + $0x340] sm:$0xff]
      %v492 = vld [vmem:[%s2 + $0x348] sm:$0xff]
      %v493 = vld [vmem:[%s2 + $0x350] sm:$0xff]
      %v494 = vld [vmem:[%s2 + $0x358] sm:$0xff]
      %v495 = vld [vmem:[%s2 + $0x360] sm:$0xff]
      %v496 = vld [vmem:[%s2 + $0x368] sm:$0xff]
      %v497 = vld [vmem:[%s2 + $0x370] sm:$0xff]
      %v498 = vld [vmem:[%s2 + $0x378] sm:$0xff]
      %v499 = vld [vmem:[%s2 + $0x380] sm:$0xff]
      %v500 = vld [vmem:[%s2 + $0x388] sm:$0xff]
      %v501 = vld [vmem:[%s2 + $0x390] sm:$0xff]
      %v502 = vld [vmem:[%s2 + $0x398] sm:$0xff]
      %v503 = vld [vmem:[%s2 + $0x3a0] sm:$0xff]
      %v504 = vld [vmem:[%s2 + $0x3a8] sm:$0xff]
      %v505 = vld [vmem:[%s2 + $0x3b0] sm:$0xff]
      %v506 = vld [vmem:[%s2 + $0x3b8] sm:$0xff]
      %v507 = vld [vmem:[%s2 + $0x3c0] sm:$0xff]
      %v508 = vld [vmem:[%s2 + $0x3c8] sm:$0xff]
      %v509 = vld [vmem:[%s2 + $0x3d0] sm:$0xff]
      %v510 = vld [vmem:[%s2 + $0x3d8] sm:$0xff]
      %v511 = vld [vmem:[%s2 + $0x3e0] sm:$0xff]
      %513 = vset.pattern.permute.xlu0 0
      %514 = vperm.xlu0 %513, %v387
      %v515 = vpop.permute.xlu0 %514
      %518 = vset.pattern.permute.xlu0 0
      %519 = vperm.xlu0 %518, %v388
      %v520 = vpop.permute.xlu0 %519
      %523 = vset.pattern.permute.xlu0 0
      %524 = vperm.xlu0 %523, %v389
      %v525 = vpop.permute.xlu0 %524
      %528 = vset.pattern.permute.xlu0 0
      %529 = vperm.xlu0 %528, %v390
      %v530 = vpop.permute.xlu0 %529
      %533 = vset.pattern.permute.xlu0 0
      %534 = vperm.xlu0 %533, %v391
      %v535 = vpop.permute.xlu0 %534
      %538 = vset.pattern.permute.xlu0 0
      %539 = vperm.xlu0 %538, %v392
      %v540 = vpop.permute.xlu0 %539
      %543 = vset.pattern.permute.xlu0 0
      %544 = vperm.xlu0 %543, %v393
      %v545 = vpop.permute.xlu0 %544
      %548 = vset.pattern.permute.xlu0 0
      %549 = vperm.xlu0 %548, %v394
      %v550 = vpop.permute.xlu0 %549
      %553 = vset.pattern.permute.xlu0 0
      %554 = vperm.xlu0 %553, %v395
      %v555 = vpop.permute.xlu0 %554
      %558 = vset.pattern.permute.xlu0 0
      %559 = vperm.xlu0 %558, %v396
      %v560 = vpop.permute.xlu0 %559
      %563 = vset.pattern.permute.xlu0 0
      %564 = vperm.xlu0 %563, %v397
      %v565 = vpop.permute.xlu0 %564
      %568 = vset.pattern.permute.xlu0 0
      %569 = vperm.xlu0 %568, %v398
      %v570 = vpop.permute.xlu0 %569
      %573 = vset.pattern.permute.xlu0 0
      %574 = vperm.xlu0 %573, %v399
      %v575 = vpop.permute.xlu0 %574
      %578 = vset.pattern.permute.xlu0 0
      %579 = vperm.xlu0 %578, %v400
      %v580 = vpop.permute.xlu0 %579
      %583 = vset.pattern.permute.xlu0 0
      %584 = vperm.xlu0 %583, %v401
      %v585 = vpop.permute.xlu0 %584
      %588 = vset.pattern.permute.xlu0 0
      %589 = vperm.xlu0 %588, %v402
      %v590 = vpop.permute.xlu0 %589
      %593 = vset.pattern.permute.xlu0 0
      %594 = vperm.xlu0 %593, %v403
      %v595 = vpop.permute.xlu0 %594
      %598 = vset.pattern.permute.xlu0 0
      %599 = vperm.xlu0 %598, %v404
      %v600 = vpop.permute.xlu0 %599
      %603 = vset.pattern.permute.xlu0 0
      %604 = vperm.xlu0 %603, %v405
      %v605 = vpop.permute.xlu0 %604
      %608 = vset.pattern.permute.xlu0 0
      %609 = vperm.xlu0 %608, %v406
      %v610 = vpop.permute.xlu0 %609
      %613 = vset.pattern.permute.xlu0 0
      %614 = vperm.xlu0 %613, %v407
      %v615 = vpop.permute.xlu0 %614
      %618 = vset.pattern.permute.xlu0 0
      %619 = vperm.xlu0 %618, %v408
      %v620 = vpop.permute.xlu0 %619
      %623 = vset.pattern.permute.xlu0 0
      %624 = vperm.xlu0 %623, %v409
      %v625 = vpop.permute.xlu0 %624
      %628 = vset.pattern.permute.xlu0 0
      %629 = vperm.xlu0 %628, %v410
      %v630 = vpop.permute.xlu0 %629
      %633 = vset.pattern.permute.xlu0 0
      %634 = vperm.xlu0 %633, %v411
      %v635 = vpop.permute.xlu0 %634
      %638 = vset.pattern.permute.xlu0 0
      %639 = vperm.xlu0 %638, %v412
      %v640 = vpop.permute.xlu0 %639
      %643 = vset.pattern.permute.xlu0 0
      %644 = vperm.xlu0 %643, %v413
      %v645 = vpop.permute.xlu0 %644
      %648 = vset.pattern.permute.xlu0 0
      %649 = vperm.xlu0 %648, %v414
      %v650 = vpop.permute.xlu0 %649
      %653 = vset.pattern.permute.xlu0 0
      %654 = vperm.xlu0 %653, %v415
      %v655 = vpop.permute.xlu0 %654
      %658 = vset.pattern.permute.xlu0 0
      %659 = vperm.xlu0 %658, %v416
      %v660 = vpop.permute.xlu0 %659
      %663 = vset.pattern.permute.xlu0 0
      %664 = vperm.xlu0 %663, %v417
      %v665 = vpop.permute.xlu0 %664
      %668 = vset.pattern.permute.xlu0 0
      %669 = vperm.xlu0 %668, %v418
      %v670 = vpop.permute.xlu0 %669
      %673 = vset.pattern.permute.xlu0 0
      %674 = vperm.xlu0 %673, %v419
      %v675 = vpop.permute.xlu0 %674
      %678 = vset.pattern.permute.xlu0 0
      %679 = vperm.xlu0 %678, %v420
      %v680 = vpop.permute.xlu0 %679
      %683 = vset.pattern.permute.xlu0 0
      %684 = vperm.xlu0 %683, %v421
      %v685 = vpop.permute.xlu0 %684
      %688 = vset.pattern.permute.xlu0 0
      %689 = vperm.xlu0 %688, %v422
      %v690 = vpop.permute.xlu0 %689
      %693 = vset.pattern.permute.xlu0 0
      %694 = vperm.xlu0 %693, %v423
      %v695 = vpop.permute.xlu0 %694
      %698 = vset.pattern.permute.xlu0 0
      %699 = vperm.xlu0 %698, %v424
      %v700 = vpop.permute.xlu0 %699
      %703 = vset.pattern.permute.xlu0 0
      %704 = vperm.xlu0 %703, %v425
      %v705 = vpop.permute.xlu0 %704
      %708 = vset.pattern.permute.xlu0 0
      %709 = vperm.xlu0 %708, %v426
      %v710 = vpop.permute.xlu0 %709
      %713 = vset.pattern.permute.xlu0 0
      %714 = vperm.xlu0 %713, %v427
      %v715 = vpop.permute.xlu0 %714
      %718 = vset.pattern.permute.xlu0 0
      %719 = vperm.xlu0 %718, %v428
      %v720 = vpop.permute.xlu0 %719
      %723 = vset.pattern.permute.xlu0 0
      %724 = vperm.xlu0 %723, %v429
      %v725 = vpop.permute.xlu0 %724
      %728 = vset.pattern.permute.xlu0 0
      %729 = vperm.xlu0 %728, %v430
      %v730 = vpop.permute.xlu0 %729
      %733 = vset.pattern.permute.xlu0 0
      %734 = vperm.xlu0 %733, %v431
      %v735 = vpop.permute.xlu0 %734
      %738 = vset.pattern.permute.xlu0 0
      %739 = vperm.xlu0 %738, %v432
      %v740 = vpop.permute.xlu0 %739
      %743 = vset.pattern.permute.xlu0 0
      %744 = vperm.xlu0 %743, %v433
      %v745 = vpop.permute.xlu0 %744
      %748 = vset.pattern.permute.xlu0 0
      %749 = vperm.xlu0 %748, %v434
      %v750 = vpop.permute.xlu0 %749
      %753 = vset.pattern.permute.xlu0 0
      %754 = vperm.xlu0 %753, %v435
      %v755 = vpop.permute.xlu0 %754
      %758 = vset.pattern.permute.xlu0 0
      %759 = vperm.xlu0 %758, %v436
      %v760 = vpop.permute.xlu0 %759
      %763 = vset.pattern.permute.xlu0 0
      %764 = vperm.xlu0 %763, %v437
      %v765 = vpop.permute.xlu0 %764
      %768 = vset.pattern.permute.xlu0 0
      %769 = vperm.xlu0 %768, %v438
      %v770 = vpop.permute.xlu0 %769
      %773 = vset.pattern.permute.xlu0 0
      %774 = vperm.xlu0 %773, %v439
      %v775 = vpop.permute.xlu0 %774
      %778 = vset.pattern.permute.xlu0 0
      %779 = vperm.xlu0 %778, %v440
      %v780 = vpop.permute.xlu0 %779
      %783 = vset.pattern.permute.xlu0 0
      %784 = vperm.xlu0 %783, %v441
      %v785 = vpop.permute.xlu0 %784
      %788 = vset.pattern.permute.xlu0 0
      %789 = vperm.xlu0 %788, %v442
      %v790 = vpop.permute.xlu0 %789
      %793 = vset.pattern.permute.xlu0 0
      %794 = vperm.xlu0 %793, %v443
      %v795 = vpop.permute.xlu0 %794
      %798 = vset.pattern.permute.xlu0 0
      %799 = vperm.xlu0 %798, %v444
      %v800 = vpop.permute.xlu0 %799
      %803 = vset.pattern.permute.xlu0 0
      %804 = vperm.xlu0 %803, %v445
      %v805 = vpop.permute.xlu0 %804
      %808 = vset.pattern.permute.xlu0 0
      %809 = vperm.xlu0 %808, %v446
      %v810 = vpop.permute.xlu0 %809
      %813 = vset.pattern.permute.xlu0 0
      %814 = vperm.xlu0 %813, %v447
      %v815 = vpop.permute.xlu0 %814
      %818 = vset.pattern.permute.xlu0 0
      %819 = vperm.xlu0 %818, %v448
      %v820 = vpop.permute.xlu0 %819
      %823 = vset.pattern.permute.xlu0 0
      %824 = vperm.xlu0 %823, %v449
      %v825 = vpop.permute.xlu0 %824
      %828 = vset.pattern.permute.xlu0 0
      %829 = vperm.xlu0 %828, %v450
      %v830 = vpop.permute.xlu0 %829
      %833 = vset.pattern.permute.xlu0 0
      %834 = vperm.xlu0 %833, %v451
      %v835 = vpop.permute.xlu0 %834
      %838 = vset.pattern.permute.xlu0 0
      %839 = vperm.xlu0 %838, %v452
      %v840 = vpop.permute.xlu0 %839
      %843 = vset.pattern.permute.xlu0 0
      %844 = vperm.xlu0 %843, %v453
      %v845 = vpop.permute.xlu0 %844
      %848 = vset.pattern.permute.xlu0 0
      %849 = vperm.xlu0 %848, %v454
      %v850 = vpop.permute.xlu0 %849
      %853 = vset.pattern.permute.xlu0 0
      %854 = vperm.xlu0 %853, %v455
      %v855 = vpop.permute.xlu0 %854
      %858 = vset.pattern.permute.xlu0 0
      %859 = vperm.xlu0 %858, %v456
      %v860 = vpop.permute.xlu0 %859
      %863 = vset.pattern.permute.xlu0 0
      %864 = vperm.xlu0 %863, %v457
      %v865 = vpop.permute.xlu0 %864
      %868 = vset.pattern.permute.xlu0 0
      %869 = vperm.xlu0 %868, %v458
      %v870 = vpop.permute.xlu0 %869
      %873 = vset.pattern.permute.xlu0 0
      %874 = vperm.xlu0 %873, %v459
      %v875 = vpop.permute.xlu0 %874
      %878 = vset.pattern.permute.xlu0 0
      %879 = vperm.xlu0 %878, %v460
      %v880 = vpop.permute.xlu0 %879
      %883 = vset.pattern.permute.xlu0 0
      %884 = vperm.xlu0 %883, %v461
      %v885 = vpop.permute.xlu0 %884
      %888 = vset.pattern.permute.xlu0 0
      %889 = vperm.xlu0 %888, %v462
      %v890 = vpop.permute.xlu0 %889
      %893 = vset.pattern.permute.xlu0 0
      %894 = vperm.xlu0 %893, %v463
      %v895 = vpop.permute.xlu0 %894
      %898 = vset.pattern.permute.xlu0 0
      %899 = vperm.xlu0 %898, %v464
      %v900 = vpop.permute.xlu0 %899
      %903 = vset.pattern.permute.xlu0 0
      %904 = vperm.xlu0 %903, %v465
      %v905 = vpop.permute.xlu0 %904
      %908 = vset.pattern.permute.xlu0 0
      %909 = vperm.xlu0 %908, %v466
      %v910 = vpop.permute.xlu0 %909
      %913 = vset.pattern.permute.xlu0 0
      %914 = vperm.xlu0 %913, %v467
      %v915 = vpop.permute.xlu0 %914
      %918 = vset.pattern.permute.xlu0 0
      %919 = vperm.xlu0 %918, %v468
      %v920 = vpop.permute.xlu0 %919
      %923 = vset.pattern.permute.xlu0 0
      %924 = vperm.xlu0 %923, %v469
      %v925 = vpop.permute.xlu0 %924
      %928 = vset.pattern.permute.xlu0 0
      %929 = vperm.xlu0 %928, %v470
      %v930 = vpop.permute.xlu0 %929
      %933 = vset.pattern.permute.xlu0 0
      %934 = vperm.xlu0 %933, %v471
      %v935 = vpop.permute.xlu0 %934
      %938 = vset.pattern.permute.xlu0 0
      %939 = vperm.xlu0 %938, %v472
      %v940 = vpop.permute.xlu0 %939
      %943 = vset.pattern.permute.xlu0 0
      %944 = vperm.xlu0 %943, %v473
      %v945 = vpop.permute.xlu0 %944
      %948 = vset.pattern.permute.xlu0 0
      %949 = vperm.xlu0 %948, %v474
      %v950 = vpop.permute.xlu0 %949
      %953 = vset.pattern.permute.xlu0 0
      %954 = vperm.xlu0 %953, %v475
      %v955 = vpop.permute.xlu0 %954
      %958 = vset.pattern.permute.xlu0 0
      %959 = vperm.xlu0 %958, %v476
      %v960 = vpop.permute.xlu0 %959
      %963 = vset.pattern.permute.xlu0 0
      %964 = vperm.xlu0 %963, %v477
      %v965 = vpop.permute.xlu0 %964
      %968 = vset.pattern.permute.xlu0 0
      %969 = vperm.xlu0 %968, %v478
      %v970 = vpop.permute.xlu0 %969
      %973 = vset.pattern.permute.xlu0 0
      %974 = vperm.xlu0 %973, %v479
      %v975 = vpop.permute.xlu0 %974
      %978 = vset.pattern.permute.xlu0 0
      %979 = vperm.xlu0 %978, %v480
      %v980 = vpop.permute.xlu0 %979
      %983 = vset.pattern.permute.xlu0 0
      %984 = vperm.xlu0 %983, %v481
      %v985 = vpop.permute.xlu0 %984
      %988 = vset.pattern.permute.xlu0 0
      %989 = vperm.xlu0 %988, %v482
      %v990 = vpop.permute.xlu0 %989
      %993 = vset.pattern.permute.xlu0 0
      %994 = vperm.xlu0 %993, %v483
      %v995 = vpop.permute.xlu0 %994
      %998 = vset.pattern.permute.xlu0 0
      %999 = vperm.xlu0 %998, %v484
      %v1000 = vpop.permute.xlu0 %999
      %1003 = vset.pattern.permute.xlu0 0
      %1004 = vperm.xlu0 %1003, %v485
      %v1005 = vpop.permute.xlu0 %1004
      %1008 = vset.pattern.permute.xlu0 0
      %1009 = vperm.xlu0 %1008, %v486
      %v1010 = vpop.permute.xlu0 %1009
      %1013 = vset.pattern.permute.xlu0 0
      %1014 = vperm.xlu0 %1013, %v487
      %v1015 = vpop.permute.xlu0 %1014
      %1018 = vset.pattern.permute.xlu0 0
      %1019 = vperm.xlu0 %1018, %v488
      %v1020 = vpop.permute.xlu0 %1019
      %1023 = vset.pattern.permute.xlu0 0
      %1024 = vperm.xlu0 %1023, %v489
      %v1025 = vpop.permute.xlu0 %1024
      %1028 = vset.pattern.permute.xlu0 0
      %1029 = vperm.xlu0 %1028, %v490
      %v1030 = vpop.permute.xlu0 %1029
      %1033 = vset.pattern.permute.xlu0 0
      %1034 = vperm.xlu0 %1033, %v491
      %v1035 = vpop.permute.xlu0 %1034
      %1038 = vset.pattern.permute.xlu0 0
      %1039 = vperm.xlu0 %1038, %v492
      %v1040 = vpop.permute.xlu0 %1039
      %1043 = vset.pattern.permute.xlu0 0
      %1044 = vperm.xlu0 %1043, %v493
      %v1045 = vpop.permute.xlu0 %1044
      %1048 = vset.pattern.permute.xlu0 0
      %1049 = vperm.xlu0 %1048, %v494
      %v1050 = vpop.permute.xlu0 %1049
      %1053 = vset.pattern.permute.xlu0 0
      %1054 = vperm.xlu0 %1053, %v495
      %v1055 = vpop.permute.xlu0 %1054
      %1058 = vset.pattern.permute.xlu0 0
      %1059 = vperm.xlu0 %1058, %v496
      %v1060 = vpop.permute.xlu0 %1059
      %1063 = vset.pattern.permute.xlu0 0
      %1064 = vperm.xlu0 %1063, %v497
      %v1065 = vpop.permute.xlu0 %1064
      %1068 = vset.pattern.permute.xlu0 0
      %1069 = vperm.xlu0 %1068, %v498
      %v1070 = vpop.permute.xlu0 %1069
      %1073 = vset.pattern.permute.xlu0 0
      %1074 = vperm.xlu0 %1073, %v499
      %v1075 = vpop.permute.xlu0 %1074
      %1078 = vset.pattern.permute.xlu0 0
      %1079 = vperm.xlu0 %1078, %v500
      %v1080 = vpop.permute.xlu0 %1079
      %1083 = vset.pattern.permute.xlu0 0
      %1084 = vperm.xlu0 %1083, %v501
      %v1085 = vpop.permute.xlu0 %1084
      %1088 = vset.pattern.permute.xlu0 0
      %1089 = vperm.xlu0 %1088, %v502
      %v1090 = vpop.permute.xlu0 %1089
      %1093 = vset.pattern.permute.xlu0 0
      %1094 = vperm.xlu0 %1093, %v503
      %v1095 = vpop.permute.xlu0 %1094
      %1098 = vset.pattern.permute.xlu0 0
      %1099 = vperm.xlu0 %1098, %v504
      %v1100 = vpop.permute.xlu0 %1099
      %1103 = vset.pattern.permute.xlu0 0
      %1104 = vperm.xlu0 %1103, %v505
      %v1105 = vpop.permute.xlu0 %1104
      %1108 = vset.pattern.permute.xlu0 0
      %1109 = vperm.xlu0 %1108, %v506
      %v1110 = vpop.permute.xlu0 %1109
      %1113 = vset.pattern.permute.xlu0 0
      %1114 = vperm.xlu0 %1113, %v507
      %v1115 = vpop.permute.xlu0 %1114
      %1118 = vset.pattern.permute.xlu0 0
      %1119 = vperm.xlu0 %1118, %v508
      %v1120 = vpop.permute.xlu0 %1119
      %1123 = vset.pattern.permute.xlu0 0
      %1124 = vperm.xlu0 %1123, %v509
      %v1125 = vpop.permute.xlu0 %1124
      %1128 = vset.pattern.permute.xlu0 0
      %1129 = vperm.xlu0 %1128, %v510
      %v1130 = vpop.permute.xlu0 %1129
      %1133 = vset.pattern.permute.xlu0 0
      %1134 = vperm.xlu0 %1133, %v511
      %v1135 = vpop.permute.xlu0 %1134
      %1138 = vst [vmem:[#allocation1] ss:$2 sm:$0xff] %v386
      %v1139 = vld.sshfl [vmem:[#allocation1] sm:$0xff pattern:$0x75316420]
      %v1140 = vld.sshfl [vmem:[#allocation1 + $0x8] sm:$0xff pattern:$0x75316420]
      %vm1141 = vcmask 31744
      %v1143 = vsel %vm1141, %v261, 0
      %v1146 = vsel %vm1141, %v262, 0
      %v1149 = vsel %vm1141, %v263, 0
      %v1152 = vsel %vm1141, %v264, 0
      %v1155 = vsel %vm1141, %v265, 0
      %v1158 = vsel %vm1141, %v266, 0
      %v1161 = vsel %vm1141, %v267, 0
      %v1164 = vsel %vm1141, %v268, 0
      %v1167 = vsel %vm1141, %v269, 0
      %v1170 = vsel %vm1141, %v270, 0
      %v1173 = vsel %vm1141, %v271, 0
      %v1176 = vsel %vm1141, %v272, 0
      %v1179 = vsel %vm1141, %v273, 0
      %v1182 = vsel %vm1141, %v274, 0
      %v1185 = vsel %vm1141, %v275, 0
      %v1188 = vsel %vm1141, %v276, 0
      %v1191 = vsel %vm1141, %v277, 0
      %v1194 = vsel %vm1141, %v278, 0
      %v1197 = vsel %vm1141, %v279, 0
      %v1200 = vsel %vm1141, %v280, 0
      %v1203 = vsel %vm1141, %v281, 0
      %v1206 = vsel %vm1141, %v282, 0
      %v1209 = vsel %vm1141, %v283, 0
      %v1212 = vsel %vm1141, %v284, 0
      %v1215 = vsel %vm1141, %v285, 0
      %v1218 = vsel %vm1141, %v286, 0
      %v1221 = vsel %vm1141, %v287, 0
      %v1224 = vsel %vm1141, %v288, 0
      %v1227 = vsel %vm1141, %v289, 0
      %v1230 = vsel %vm1141, %v290, 0
      %v1233 = vsel %vm1141, %v291, 0
      %v1236 = vsel %vm1141, %v292, 0
      %v1239 = vsel %vm1141, %v293, 0
      %v1242 = vsel %vm1141, %v294, 0
      %v1245 = vsel %vm1141, %v295, 0
      %v1248 = vsel %vm1141, %v296, 0
      %v1251 = vsel %vm1141, %v297, 0
      %v1254 = vsel %vm1141, %v298, 0
      %v1257 = vsel %vm1141, %v299, 0
      %v1260 = vsel %vm1141, %v300, 0
      %v1263 = vsel %vm1141, %v301, 0
      %v1266 = vsel %vm1141, %v302, 0
      %v1269 = vsel %vm1141, %v303, 0
      %v1272 = vsel %vm1141, %v304, 0
      %v1275 = vsel %vm1141, %v305, 0
      %v1278 = vsel %vm1141, %v306, 0
      %v1281 = vsel %vm1141, %v307, 0
      %v1284 = vsel %vm1141, %v308, 0
      %v1287 = vsel %vm1141, %v309, 0
      %v1290 = vsel %vm1141, %v310, 0
      %v1293 = vsel %vm1141, %v311, 0
      %v1296 = vsel %vm1141, %v312, 0
      %v1299 = vsel %vm1141, %v313, 0
      %v1302 = vsel %vm1141, %v314, 0
      %v1305 = vsel %vm1141, %v315, 0
      %v1308 = vsel %vm1141, %v316, 0
      %v1311 = vsel %vm1141, %v317, 0
      %v1314 = vsel %vm1141, %v318, 0
      %v1317 = vsel %vm1141, %v319, 0
      %v1320 = vsel %vm1141, %v320, 0
      %v1323 = vsel %vm1141, %v321, 0
      %v1326 = vsel %vm1141, %v322, 0
      %v1329 = vsel %vm1141, %v323, 0
      %v1332 = vsel %vm1141, %v324, 0
      %v1335 = vsel %vm1141, %v325, 0
      %v1338 = vsel %vm1141, %v326, 0
      %v1341 = vsel %vm1141, %v327, 0
      %v1344 = vsel %vm1141, %v328, 0
      %v1347 = vsel %vm1141, %v329, 0
      %v1350 = vsel %vm1141, %v330, 0
      %v1353 = vsel %vm1141, %v331, 0
      %v1356 = vsel %vm1141, %v332, 0
      %v1359 = vsel %vm1141, %v333, 0
      %v1362 = vsel %vm1141, %v334, 0
      %v1365 = vsel %vm1141, %v335, 0
      %v1368 = vsel %vm1141, %v336, 0
      %v1371 = vsel %vm1141, %v337, 0
      %v1374 = vsel %vm1141, %v338, 0
      %v1377 = vsel %vm1141, %v339, 0
      %v1380 = vsel %vm1141, %v340, 0
      %v1383 = vsel %vm1141, %v341, 0
      %v1386 = vsel %vm1141, %v342, 0
      %v1389 = vsel %vm1141, %v343, 0
      %v1392 = vsel %vm1141, %v344, 0
      %v1395 = vsel %vm1141, %v345, 0
      %v1398 = vsel %vm1141, %v346, 0
      %v1401 = vsel %vm1141, %v347, 0
      %v1404 = vsel %vm1141, %v348, 0
      %v1407 = vsel %vm1141, %v349, 0
      %v1410 = vsel %vm1141, %v350, 0
      %v1413 = vsel %vm1141, %v351, 0
      %v1416 = vsel %vm1141, %v352, 0
      %v1419 = vsel %vm1141, %v353, 0
      %v1422 = vsel %vm1141, %v354, 0
      %v1425 = vsel %vm1141, %v355, 0
      %v1428 = vsel %vm1141, %v356, 0
      %v1431 = vsel %vm1141, %v357, 0
      %v1434 = vsel %vm1141, %v358, 0
      %v1437 = vsel %vm1141, %v359, 0
      %v1440 = vsel %vm1141, %v360, 0
      %v1443 = vsel %vm1141, %v361, 0
      %v1446 = vsel %vm1141, %v362, 0
      %v1449 = vsel %vm1141, %v363, 0
      %v1452 = vsel %vm1141, %v364, 0
      %v1455 = vsel %vm1141, %v365, 0
      %v1458 = vsel %vm1141, %v366, 0
      %v1461 = vsel %vm1141, %v367, 0
      %v1464 = vsel %vm1141, %v368, 0
      %v1467 = vsel %vm1141, %v369, 0
      %v1470 = vsel %vm1141, %v370, 0
      %v1473 = vsel %vm1141, %v371, 0
      %v1476 = vsel %vm1141, %v372, 0
      %v1479 = vsel %vm1141, %v373, 0
      %v1482 = vsel %vm1141, %v374, 0
      %v1485 = vsel %vm1141, %v375, 0
      %v1488 = vsel %vm1141, %v376, 0
      %v1491 = vsel %vm1141, %v377, 0
      %v1494 = vsel %vm1141, %v378, 0
      %v1497 = vsel %vm1141, %v379, 0
      %v1500 = vsel %vm1141, %v380, 0
      %v1503 = vsel %vm1141, %v381, 0
      %v1506 = vsel %vm1141, %v382, 0
      %v1509 = vsel %vm1141, %v383, 0
      %v1512 = vsel %vm1141, %v384, 0
      %v1515 = vsel %vm1141, %v385, 0
      %vm1517 = vcmask 1043456
      %v1518 = vsel %vm1517, %v1139, 0
      %v1520 = vsel %vm1517, %v1140, 0
      %1522 = vmatpush.msra.mxu0 0.0
      %1523 = vmatpush.msra.mxu0 0.0
      %1524 = vmatpush.msra.mxu0 0.0
      %1525 = vmatpush.msra.mxu0 0.0
      %1526 = vmatpush.msra.mxu0 0.0
      %1527 = vmatpush.msra.mxu0 0.0
      %1528 = vmatpush.msra.mxu0 0.0
      %1529 = vmatpush.msra.mxu0 0.0
      %1530 = vmatpush.msra.mxu0 0.0
      %1531 = vmatpush.msra.mxu0 0.0
      %1532 = vmatpush.msra.mxu0 0.0
      %1533 = vmatpush.msra.mxu0 0.0
      %1534 = vmatpush.msra.mxu0 0.0
      %1535 = vmatpush.msra.mxu0 0.0
      %1536 = vmatpush.msra.mxu0 0.0
      %1537 = vmatpush.msra.mxu0 %v1518
      %1538 = vmatmul.f32.gmra.mxu0 %v1143
      %v1539 = vpop.f32.mrf.mxu0
      %v1540 = vadd.f32 %v515, %v1539
      %1541 = vmatmul.f32.gmra.mxu0 %v1146
      %v1542 = vpop.f32.mrf.mxu0
      %v1543 = vadd.f32 %v520, %v1542
      %1544 = vmatmul.f32.gmra.mxu0 %v1149
      %v1545 = vpop.f32.mrf.mxu0
      %v1546 = vadd.f32 %v525, %v1545
      %1547 = vmatmul.f32.gmra.mxu0 %v1152
      %v1548 = vpop.f32.mrf.mxu0
      %v1549 = vadd.f32 %v530, %v1548
      %1550 = vmatmul.f32.gmra.mxu0 %v1155
      %v1551 = vpop.f32.mrf.mxu0
      %v1552 = vadd.f32 %v535, %v1551
      %1553 = vmatmul.f32.gmra.mxu0 %v1158
      %v1554 = vpop.f32.mrf.mxu0
      %v1555 = vadd.f32 %v540, %v1554
      %1556 = vmatmul.f32.gmra.mxu0 %v1161
      %v1557 = vpop.f32.mrf.mxu0
      %v1558 = vadd.f32 %v545, %v1557
      %1559 = vmatmul.f32.gmra.mxu0 %v1164
      %v1560 = vpop.f32.mrf.mxu0
      %v1561 = vadd.f32 %v550, %v1560
      %1562 = vmatmul.f32.gmra.mxu0 %v1167
      %v1563 = vpop.f32.mrf.mxu0
      %v1564 = vadd.f32 %v555, %v1563
      %1565 = vmatmul.f32.gmra.mxu0 %v1170
      %v1566 = vpop.f32.mrf.mxu0
      %v1567 = vadd.f32 %v560, %v1566
      %1568 = vmatmul.f32.gmra.mxu0 %v1173
      %v1569 = vpop.f32.mrf.mxu0
      %v1570 = vadd.f32 %v565, %v1569
      %1571 = vmatmul.f32.gmra.mxu0 %v1176
      %v1572 = vpop.f32.mrf.mxu0
      %v1573 = vadd.f32 %v570, %v1572
      %1574 = vmatmul.f32.gmra.mxu0 %v1179
      %v1575 = vpop.f32.mrf.mxu0
      %v1576 = vadd.f32 %v575, %v1575
      %1577 = vmatmul.f32.gmra.mxu0 %v1182
      %v1578 = vpop.f32.mrf.mxu0
      %v1579 = vadd.f32 %v580, %v1578
      %1580 = vmatmul.f32.gmra.mxu0 %v1185
      %v1581 = vpop.f32.mrf.mxu0
      %v1582 = vadd.f32 %v585, %v1581
      %1583 = vmatmul.f32.gmra.mxu0 %v1188
      %v1584 = vpop.f32.mrf.mxu0
      %v1585 = vadd.f32 %v590, %v1584
      %1586 = vmatmul.f32.gmra.mxu0 %v1191
      %v1587 = vpop.f32.mrf.mxu0
      %v1588 = vadd.f32 %v595, %v1587
      %1589 = vmatmul.f32.gmra.mxu0 %v1194
      %v1590 = vpop.f32.mrf.mxu0
      %v1591 = vadd.f32 %v600, %v1590
      %1592 = vmatmul.f32.gmra.mxu0 %v1197
      %v1593 = vpop.f32.mrf.mxu0
      %v1594 = vadd.f32 %v605, %v1593
      %1595 = vmatmul.f32.gmra.mxu0 %v1200
      %v1596 = vpop.f32.mrf.mxu0
      %v1597 = vadd.f32 %v610, %v1596
      %1598 = vmatmul.f32.gmra.mxu0 %v1203
      %v1599 = vpop.f32.mrf.mxu0
      %v1600 = vadd.f32 %v615, %v1599
      %1601 = vmatmul.f32.gmra.mxu0 %v1206
      %v1602 = vpop.f32.mrf.mxu0
      %v1603 = vadd.f32 %v620, %v1602
      %1604 = vmatmul.f32.gmra.mxu0 %v1209
      %v1605 = vpop.f32.mrf.mxu0
      %v1606 = vadd.f32 %v625, %v1605
      %1607 = vmatmul.f32.gmra.mxu0 %v1212
      %v1608 = vpop.f32.mrf.mxu0
      %v1609 = vadd.f32 %v630, %v1608
      %1610 = vmatmul.f32.gmra.mxu0 %v1215
      %v1611 = vpop.f32.mrf.mxu0
      %v1612 = vadd.f32 %v635, %v1611
      %1613 = vmatmul.f32.gmra.mxu0 %v1218
      %v1614 = vpop.f32.mrf.mxu0
      %v1615 = vadd.f32 %v640, %v1614
      %1616 = vmatmul.f32.gmra.mxu0 %v1221
      %v1617 = vpop.f32.mrf.mxu0
      %v1618 = vadd.f32 %v645, %v1617
      %1619 = vmatmul.f32.gmra.mxu0 %v1224
      %v1620 = vpop.f32.mrf.mxu0
      %v1621 = vadd.f32 %v650, %v1620
      %1622 = vmatmul.f32.gmra.mxu0 %v1227
      %v1623 = vpop.f32.mrf.mxu0
      %v1624 = vadd.f32 %v655, %v1623
      %1625 = vmatmul.f32.gmra.mxu0 %v1230
      %v1626 = vpop.f32.mrf.mxu0
      %v1627 = vadd.f32 %v660, %v1626
      %1628 = vmatmul.f32.gmra.mxu0 %v1233
      %v1629 = vpop.f32.mrf.mxu0
      %v1630 = vadd.f32 %v665, %v1629
      %1631 = vmatmul.f32.gmra.mxu0 %v1236
      %v1632 = vpop.f32.mrf.mxu0
      %v1633 = vadd.f32 %v670, %v1632
      %1634 = vmatmul.f32.gmra.mxu0 %v1239
      %v1635 = vpop.f32.mrf.mxu0
      %v1636 = vadd.f32 %v675, %v1635
      %1637 = vmatmul.f32.gmra.mxu0 %v1242
      %v1638 = vpop.f32.mrf.mxu0
      %v1639 = vadd.f32 %v680, %v1638
      %1640 = vmatmul.f32.gmra.mxu0 %v1245
      %v1641 = vpop.f32.mrf.mxu0
      %v1642 = vadd.f32 %v685, %v1641
      %1643 = vmatmul.f32.gmra.mxu0 %v1248
      %v1644 = vpop.f32.mrf.mxu0
      %v1645 = vadd.f32 %v690, %v1644
      %1646 = vmatmul.f32.gmra.mxu0 %v1251
      %v1647 = vpop.f32.mrf.mxu0
      %v1648 = vadd.f32 %v695, %v1647
      %1649 = vmatmul.f32.gmra.mxu0 %v1254
      %v1650 = vpop.f32.mrf.mxu0
      %v1651 = vadd.f32 %v700, %v1650
      %1652 = vmatmul.f32.gmra.mxu0 %v1257
      %v1653 = vpop.f32.mrf.mxu0
      %v1654 = vadd.f32 %v705, %v1653
      %1655 = vmatmul.f32.gmra.mxu0 %v1260
      %v1656 = vpop.f32.mrf.mxu0
      %v1657 = vadd.f32 %v710, %v1656
      %1658 = vmatmul.f32.gmra.mxu0 %v1263
      %v1659 = vpop.f32.mrf.mxu0
      %v1660 = vadd.f32 %v715, %v1659
      %1661 = vmatmul.f32.gmra.mxu0 %v1266
      %v1662 = vpop.f32.mrf.mxu0
      %v1663 = vadd.f32 %v720, %v1662
      %1664 = vmatmul.f32.gmra.mxu0 %v1269
      %v1665 = vpop.f32.mrf.mxu0
      %v1666 = vadd.f32 %v725, %v1665
      %1667 = vmatmul.f32.gmra.mxu0 %v1272
      %v1668 = vpop.f32.mrf.mxu0
      %v1669 = vadd.f32 %v730, %v1668
      %1670 = vmatmul.f32.gmra.mxu0 %v1275
      %v1671 = vpop.f32.mrf.mxu0
      %v1672 = vadd.f32 %v735, %v1671
      %1673 = vmatmul.f32.gmra.mxu0 %v1278
      %v1674 = vpop.f32.mrf.mxu0
      %v1675 = vadd.f32 %v740, %v1674
      %1676 = vmatmul.f32.gmra.mxu0 %v1281
      %v1677 = vpop.f32.mrf.mxu0
      %v1678 = vadd.f32 %v745, %v1677
      %1679 = vmatmul.f32.gmra.mxu0 %v1284
      %v1680 = vpop.f32.mrf.mxu0
      %v1681 = vadd.f32 %v750, %v1680
      %1682 = vmatmul.f32.gmra.mxu0 %v1287
      %v1683 = vpop.f32.mrf.mxu0
      %v1684 = vadd.f32 %v755, %v1683
      %1685 = vmatmul.f32.gmra.mxu0 %v1290
      %v1686 = vpop.f32.mrf.mxu0
      %v1687 = vadd.f32 %v760, %v1686
      %1688 = vmatmul.f32.gmra.mxu0 %v1293
      %v1689 = vpop.f32.mrf.mxu0
      %v1690 = vadd.f32 %v765, %v1689
      %1691 = vmatmul.f32.gmra.mxu0 %v1296
      %v1692 = vpop.f32.mrf.mxu0
      %v1693 = vadd.f32 %v770, %v1692
      %1694 = vmatmul.f32.gmra.mxu0 %v1299
      %v1695 = vpop.f32.mrf.mxu0
      %v1696 = vadd.f32 %v775, %v1695
      %1697 = vmatmul.f32.gmra.mxu0 %v1302
      %v1698 = vpop.f32.mrf.mxu0
      %v1699 = vadd.f32 %v780, %v1698
      %1700 = vmatmul.f32.gmra.mxu0 %v1305
      %v1701 = vpop.f32.mrf.mxu0
      %v1702 = vadd.f32 %v785, %v1701
      %1703 = vmatmul.f32.gmra.mxu0 %v1308
      %v1704 = vpop.f32.mrf.mxu0
      %v1705 = vadd.f32 %v790, %v1704
      %1706 = vmatmul.f32.gmra.mxu0 %v1311
      %v1707 = vpop.f32.mrf.mxu0
      %v1708 = vadd.f32 %v795, %v1707
      %1709 = vmatmul.f32.gmra.mxu0 %v1314
      %v1710 = vpop.f32.mrf.mxu0
      %v1711 = vadd.f32 %v800, %v1710
      %1712 = vmatmul.f32.gmra.mxu0 %v1317
      %v1713 = vpop.f32.mrf.mxu0
      %v1714 = vadd.f32 %v805, %v1713
      %1715 = vmatmul.f32.gmra.mxu0 %v1320
      %v1716 = vpop.f32.mrf.mxu0
      %v1717 = vadd.f32 %v810, %v1716
      %1718 = vmatmul.f32.gmra.mxu0 %v1323
      %v1719 = vpop.f32.mrf.mxu0
      %v1720 = vadd.f32 %v815, %v1719
      %1721 = vmatmul.f32.gmra.mxu0 %v1326
      %v1722 = vpop.f32.mrf.mxu0
      %v1723 = vadd.f32 %v820, %v1722
      %1724 = vmatmul.f32.gmra.mxu0 %v1329
      %v1725 = vpop.f32.mrf.mxu0
      %v1726 = vadd.f32 %v825, %v1725
      %1727 = vmatmul.f32.gmra.mxu0 %v1332
      %v1728 = vpop.f32.mrf.mxu0
      %v1729 = vadd.f32 %v830, %v1728
      %1730 = vmatmul.f32.gmra.mxu0 %v1335
      %v1731 = vpop.f32.mrf.mxu0
      %v1732 = vadd.f32 %v835, %v1731
      %1733 = vmatmul.f32.gmra.mxu0 %v1338
      %v1734 = vpop.f32.mrf.mxu0
      %v1735 = vadd.f32 %v840, %v1734
      %1736 = vmatmul.f32.gmra.mxu0 %v1341
      %v1737 = vpop.f32.mrf.mxu0
      %v1738 = vadd.f32 %v845, %v1737
      %1739 = vmatmul.f32.gmra.mxu0 %v1344
      %v1740 = vpop.f32.mrf.mxu0
      %v1741 = vadd.f32 %v850, %v1740
      %1742 = vmatmul.f32.gmra.mxu0 %v1347
      %v1743 = vpop.f32.mrf.mxu0
      %v1744 = vadd.f32 %v855, %v1743
      %1745 = vmatmul.f32.gmra.mxu0 %v1350
      %v1746 = vpop.f32.mrf.mxu0
      %v1747 = vadd.f32 %v860, %v1746
      %1748 = vmatmul.f32.gmra.mxu0 %v1353
      %v1749 = vpop.f32.mrf.mxu0
      %v1750 = vadd.f32 %v865, %v1749
      %1751 = vmatmul.f32.gmra.mxu0 %v1356
      %v1752 = vpop.f32.mrf.mxu0
      %v1753 = vadd.f32 %v870, %v1752
      %1754 = vmatmul.f32.gmra.mxu0 %v1359
      %v1755 = vpop.f32.mrf.mxu0
      %v1756 = vadd.f32 %v875, %v1755
      %1757 = vmatmul.f32.gmra.mxu0 %v1362
      %v1758 = vpop.f32.mrf.mxu0
      %v1759 = vadd.f32 %v880, %v1758
      %1760 = vmatmul.f32.gmra.mxu0 %v1365
      %v1761 = vpop.f32.mrf.mxu0
      %v1762 = vadd.f32 %v885, %v1761
      %1763 = vmatmul.f32.gmra.mxu0 %v1368
      %v1764 = vpop.f32.mrf.mxu0
      %v1765 = vadd.f32 %v890, %v1764
      %1766 = vmatmul.f32.gmra.mxu0 %v1371
      %v1767 = vpop.f32.mrf.mxu0
      %v1768 = vadd.f32 %v895, %v1767
      %1769 = vmatmul.f32.gmra.mxu0 %v1374
      %v1770 = vpop.f32.mrf.mxu0
      %v1771 = vadd.f32 %v900, %v1770
      %1772 = vmatmul.f32.gmra.mxu0 %v1377
      %v1773 = vpop.f32.mrf.mxu0
      %v1774 = vadd.f32 %v905, %v1773
      %1775 = vmatmul.f32.gmra.mxu0 %v1380
      %v1776 = vpop.f32.mrf.mxu0
      %v1777 = vadd.f32 %v910, %v1776
      %1778 = vmatmul.f32.gmra.mxu0 %v1383
      %v1779 = vpop.f32.mrf.mxu0
      %v1780 = vadd.f32 %v915, %v1779
      %1781 = vmatmul.f32.gmra.mxu0 %v1386
      %v1782 = vpop.f32.mrf.mxu0
      %v1783 = vadd.f32 %v920, %v1782
      %1784 = vmatmul.f32.gmra.mxu0 %v1389
      %v1785 = vpop.f32.mrf.mxu0
      %v1786 = vadd.f32 %v925, %v1785
      %1787 = vmatmul.f32.gmra.mxu0 %v1392
      %v1788 = vpop.f32.mrf.mxu0
      %v1789 = vadd.f32 %v930, %v1788
      %1790 = vmatmul.f32.gmra.mxu0 %v1395
      %v1791 = vpop.f32.mrf.mxu0
      %v1792 = vadd.f32 %v935, %v1791
      %1793 = vmatmul.f32.gmra.mxu0 %v1398
      %v1794 = vpop.f32.mrf.mxu0
      %v1795 = vadd.f32 %v940, %v1794
      %1796 = vmatmul.f32.gmra.mxu0 %v1401
      %v1797 = vpop.f32.mrf.mxu0
      %v1798 = vadd.f32 %v945, %v1797
      %1799 = vmatmul.f32.gmra.mxu0 %v1404
      %v1800 = vpop.f32.mrf.mxu0
      %v1801 = vadd.f32 %v950, %v1800
      %1802 = vmatmul.f32.gmra.mxu0 %v1407
      %v1803 = vpop.f32.mrf.mxu0
      %v1804 = vadd.f32 %v955, %v1803
      %1805 = vmatmul.f32.gmra.mxu0 %v1410
      %v1806 = vpop.f32.mrf.mxu0
      %v1807 = vadd.f32 %v960, %v1806
      %1808 = vmatmul.f32.gmra.mxu0 %v1413
      %v1809 = vpop.f32.mrf.mxu0
      %v1810 = vadd.f32 %v965, %v1809
      %1811 = vmatmul.f32.gmra.mxu0 %v1416
      %v1812 = vpop.f32.mrf.mxu0
      %v1813 = vadd.f32 %v970, %v1812
      %1814 = vmatmul.f32.gmra.mxu0 %v1419
      %v1815 = vpop.f32.mrf.mxu0
      %v1816 = vadd.f32 %v975, %v1815
      %1817 = vmatmul.f32.gmra.mxu0 %v1422
      %v1818 = vpop.f32.mrf.mxu0
      %v1819 = vadd.f32 %v980, %v1818
      %1820 = vmatmul.f32.gmra.mxu0 %v1425
      %v1821 = vpop.f32.mrf.mxu0
      %v1822 = vadd.f32 %v985, %v1821
      %1823 = vmatmul.f32.gmra.mxu0 %v1428
      %v1824 = vpop.f32.mrf.mxu0
      %v1825 = vadd.f32 %v990, %v1824
      %1826 = vmatmul.f32.gmra.mxu0 %v1431
      %v1827 = vpop.f32.mrf.mxu0
      %v1828 = vadd.f32 %v995, %v1827
      %1829 = vmatmul.f32.gmra.mxu0 %v1434
      %v1830 = vpop.f32.mrf.mxu0
      %v1831 = vadd.f32 %v1000, %v1830
      %1832 = vmatmul.f32.gmra.mxu0 %v1437
      %v1833 = vpop.f32.mrf.mxu0
      %v1834 = vadd.f32 %v1005, %v1833
      %1835 = vmatmul.f32.gmra.mxu0 %v1440
      %v1836 = vpop.f32.mrf.mxu0
      %v1837 = vadd.f32 %v1010, %v1836
      %1838 = vmatmul.f32.gmra.mxu0 %v1443
      %v1839 = vpop.f32.mrf.mxu0
      %v1840 = vadd.f32 %v1015, %v1839
      %1841 = vmatmul.f32.gmra.mxu0 %v1446
      %v1842 = vpop.f32.mrf.mxu0
      %v1843 = vadd.f32 %v1020, %v1842
      %1844 = vmatmul.f32.gmra.mxu0 %v1449
      %v1845 = vpop.f32.mrf.mxu0
      %v1846 = vadd.f32 %v1025, %v1845
      %1847 = vmatmul.f32.gmra.mxu0 %v1452
      %v1848 = vpop.f32.mrf.mxu0
      %v1849 = vadd.f32 %v1030, %v1848
      %1850 = vmatmul.f32.gmra.mxu0 %v1455
      %v1851 = vpop.f32.mrf.mxu0
      %v1852 = vadd.f32 %v1035, %v1851
      %1853 = vmatmul.f32.gmra.mxu0 %v1458
      %v1854 = vpop.f32.mrf.mxu0
      %v1855 = vadd.f32 %v1040, %v1854
      %1856 = vmatmul.f32.gmra.mxu0 %v1461
      %v1857 = vpop.f32.mrf.mxu0
      %v1858 = vadd.f32 %v1045, %v1857
      %1859 = vmatmul.f32.gmra.mxu0 %v1464
      %v1860 = vpop.f32.mrf.mxu0
      %v1861 = vadd.f32 %v1050, %v1860
      %1862 = vmatmul.f32.gmra.mxu0 %v1467
      %v1863 = vpop.f32.mrf.mxu0
      %v1864 = vadd.f32 %v1055, %v1863
      %1865 = vmatmul.f32.gmra.mxu0 %v1470
      %v1866 = vpop.f32.mrf.mxu0
      %v1867 = vadd.f32 %v1060, %v1866
      %1868 = vmatmul.f32.gmra.mxu0 %v1473
      %v1869 = vpop.f32.mrf.mxu0
      %v1870 = vadd.f32 %v1065, %v1869
      %1871 = vmatmul.f32.gmra.mxu0 %v1476
      %v1872 = vpop.f32.mrf.mxu0
      %v1873 = vadd.f32 %v1070, %v1872
      %1874 = vmatmul.f32.gmra.mxu0 %v1479
      %v1875 = vpop.f32.mrf.mxu0
      %v1876 = vadd.f32 %v1075, %v1875
      %1877 = vmatmul.f32.gmra.mxu0 %v1482
      %v1878 = vpop.f32.mrf.mxu0
      %v1879 = vadd.f32 %v1080, %v1878
      %1880 = vmatmul.f32.gmra.mxu0 %v1485
      %v1881 = vpop.f32.mrf.mxu0
      %v1882 = vadd.f32 %v1085, %v1881
      %1883 = vmatmul.f32.gmra.mxu0 %v1488
      %v1884 = vpop.f32.mrf.mxu0
      %v1885 = vadd.f32 %v1090, %v1884
      %1886 = vmatmul.f32.gmra.mxu0 %v1491
      %v1887 = vpop.f32.mrf.mxu0
      %v1888 = vadd.f32 %v1095, %v1887
      %1889 = vmatmul.f32.gmra.mxu0 %v1494
      %v1890 = vpop.f32.mrf.mxu0
      %v1891 = vadd.f32 %v1100, %v1890
      %1892 = vmatmul.f32.gmra.mxu0 %v1497
      %v1893 = vpop.f32.mrf.mxu0
      %v1894 = vadd.f32 %v1105, %v1893
      %1895 = vmatmul.f32.gmra.mxu0 %v1500
      %v1896 = vpop.f32.mrf.mxu0
      %v1897 = vadd.f32 %v1110, %v1896
      %1898 = vmatmul.f32.gmra.mxu0 %v1503
      %v1899 = vpop.f32.mrf.mxu0
      %v1900 = vadd.f32 %v1115, %v1899
      %1901 = vmatmul.f32.gmra.mxu0 %v1506
      %v1902 = vpop.f32.mrf.mxu0
      %v1903 = vadd.f32 %v1120, %v1902
      %1904 = vmatmul.f32.gmra.mxu0 %v1509
      %v1905 = vpop.f32.mrf.mxu0
      %v1906 = vadd.f32 %v1125, %v1905
      %1907 = vmatmul.f32.gmra.mxu0 %v1512
      %v1908 = vpop.f32.mrf.mxu0
      %v1909 = vadd.f32 %v1130, %v1908
      %1910 = vmatmul.f32.gmra.mxu0 %v1515
      %v1911 = vpop.f32.mrf.mxu0
      %v1912 = vadd.f32 %v1135, %v1911
      %1913 = vdwg.mxu0
      %1914 = vmatpush.msra.mxu0 0.0
      %1915 = vmatpush.msra.mxu0 0.0
      %1916 = vmatpush.msra.mxu0 0.0
      %1917 = vmatpush.msra.mxu0 0.0
      %1918 = vmatpush.msra.mxu0 0.0
      %1919 = vmatpush.msra.mxu0 0.0
      %1920 = vmatpush.msra.mxu0 0.0
      %1921 = vmatpush.msra.mxu0 0.0
      %1922 = vmatpush.msra.mxu0 0.0
      %1923 = vmatpush.msra.mxu0 0.0
      %1924 = vmatpush.msra.mxu0 0.0
      %1925 = vmatpush.msra.mxu0 0.0
      %1926 = vmatpush.msra.mxu0 0.0
      %1927 = vmatpush.msra.mxu0 0.0
      %1928 = vmatpush.msra.mxu0 0.0
      %1929 = vmatpush.msra.mxu0 %v1520
      %1930 = vmatmul.f32.gmra.mxu0 %v1143
      %v1931 = vpop.f32.mrf.mxu0
      %v1932 = vadd.f32 %v515, %v1931
      %1933 = vmatmul.f32.gmra.mxu0 %v1146
      %v1934 = vpop.f32.mrf.mxu0
      %v1935 = vadd.f32 %v520, %v1934
      %1936 = vmatmul.f32.gmra.mxu0 %v1149
      %v1937 = vpop.f32.mrf.mxu0
      %v1938 = vadd.f32 %v525, %v1937
      %1939 = vmatmul.f32.gmra.mxu0 %v1152
      %v1940 = vpop.f32.mrf.mxu0
      %v1941 = vadd.f32 %v530, %v1940
      %1942 = vmatmul.f32.gmra.mxu0 %v1155
      %v1943 = vpop.f32.mrf.mxu0
      %v1944 = vadd.f32 %v535, %v1943
      %1945 = vmatmul.f32.gmra.mxu0 %v1158
      %v1946 = vpop.f32.mrf.mxu0
      %v1947 = vadd.f32 %v540, %v1946
      %1948 = vmatmul.f32.gmra.mxu0 %v1161
      %v1949 = vpop.f32.mrf.mxu0
      %v1950 = vadd.f32 %v545, %v1949
      %1951 = vmatmul.f32.gmra.mxu0 %v1164
      %v1952 = vpop.f32.mrf.mxu0
      %v1953 = vadd.f32 %v550, %v1952
      %1954 = vmatmul.f32.gmra.mxu0 %v1167
      %v1955 = vpop.f32.mrf.mxu0
      %v1956 = vadd.f32 %v555, %v1955
      %1957 = vmatmul.f32.gmra.mxu0 %v1170
      %v1958 = vpop.f32.mrf.mxu0
      %v1959 = vadd.f32 %v560, %v1958
      %1960 = vmatmul.f32.gmra.mxu0 %v1173
      %v1961 = vpop.f32.mrf.mxu0
      %v1962 = vadd.f32 %v565, %v1961
      %1963 = vmatmul.f32.gmra.mxu0 %v1176
      %v1964 = vpop.f32.mrf.mxu0
      %v1965 = vadd.f32 %v570, %v1964
      %1966 = vmatmul.f32.gmra.mxu0 %v1179
      %v1967 = vpop.f32.mrf.mxu0
      %v1968 = vadd.f32 %v575, %v1967
      %1969 = vmatmul.f32.gmra.mxu0 %v1182
      %v1970 = vpop.f32.mrf.mxu0
      %v1971 = vadd.f32 %v580, %v1970
      %1972 = vmatmul.f32.gmra.mxu0 %v1185
      %v1973 = vpop.f32.mrf.mxu0
      %v1974 = vadd.f32 %v585, %v1973
      %1975 = vmatmul.f32.gmra.mxu0 %v1188
      %v1976 = vpop.f32.mrf.mxu0
      %v1977 = vadd.f32 %v590, %v1976
      %1978 = vmatmul.f32.gmra.mxu0 %v1191
      %v1979 = vpop.f32.mrf.mxu0
      %v1980 = vadd.f32 %v595, %v1979
      %1981 = vmatmul.f32.gmra.mxu0 %v1194
      %v1982 = vpop.f32.mrf.mxu0
      %v1983 = vadd.f32 %v600, %v1982
      %1984 = vmatmul.f32.gmra.mxu0 %v1197
      %v1985 = vpop.f32.mrf.mxu0
      %v1986 = vadd.f32 %v605, %v1985
      %1987 = vmatmul.f32.gmra.mxu0 %v1200
      %v1988 = vpop.f32.mrf.mxu0
      %v1989 = vadd.f32 %v610, %v1988
      %1990 = vmatmul.f32.gmra.mxu0 %v1203
      %v1991 = vpop.f32.mrf.mxu0
      %v1992 = vadd.f32 %v615, %v1991
      %1993 = vmatmul.f32.gmra.mxu0 %v1206
      %v1994 = vpop.f32.mrf.mxu0
      %v1995 = vadd.f32 %v620, %v1994
      %1996 = vmatmul.f32.gmra.mxu0 %v1209
      %v1997 = vpop.f32.mrf.mxu0
      %v1998 = vadd.f32 %v625, %v1997
      %1999 = vmatmul.f32.gmra.mxu0 %v1212
      %v2000 = vpop.f32.mrf.mxu0
      %v2001 = vadd.f32 %v630, %v2000
      %2002 = vmatmul.f32.gmra.mxu0 %v1215
      %v2003 = vpop.f32.mrf.mxu0
      %v2004 = vadd.f32 %v635, %v2003
      %2005 = vmatmul.f32.gmra.mxu0 %v1218
      %v2006 = vpop.f32.mrf.mxu0
      %v2007 = vadd.f32 %v640, %v2006
      %2008 = vmatmul.f32.gmra.mxu0 %v1221
      %v2009 = vpop.f32.mrf.mxu0
      %v2010 = vadd.f32 %v645, %v2009
      %2011 = vmatmul.f32.gmra.mxu0 %v1224
      %v2012 = vpop.f32.mrf.mxu0
      %v2013 = vadd.f32 %v650, %v2012
      %2014 = vmatmul.f32.gmra.mxu0 %v1227
      %v2015 = vpop.f32.mrf.mxu0
      %v2016 = vadd.f32 %v655, %v2015
      %2017 = vmatmul.f32.gmra.mxu0 %v1230
      %v2018 = vpop.f32.mrf.mxu0
      %v2019 = vadd.f32 %v660, %v2018
      %2020 = vmatmul.f32.gmra.mxu0 %v1233
      %v2021 = vpop.f32.mrf.mxu0
      %v2022 = vadd.f32 %v665, %v2021
      %2023 = vmatmul.f32.gmra.mxu0 %v1236
      %v2024 = vpop.f32.mrf.mxu0
      %v2025 = vadd.f32 %v670, %v2024
      %2026 = vmatmul.f32.gmra.mxu0 %v1239
      %v2027 = vpop.f32.mrf.mxu0
      %v2028 = vadd.f32 %v675, %v2027
      %2029 = vmatmul.f32.gmra.mxu0 %v1242
      %v2030 = vpop.f32.mrf.mxu0
      %v2031 = vadd.f32 %v680, %v2030
      %2032 = vmatmul.f32.gmra.mxu0 %v1245
      %v2033 = vpop.f32.mrf.mxu0
      %v2034 = vadd.f32 %v685, %v2033
      %2035 = vmatmul.f32.gmra.mxu0 %v1248
      %v2036 = vpop.f32.mrf.mxu0
      %v2037 = vadd.f32 %v690, %v2036
      %2038 = vmatmul.f32.gmra.mxu0 %v1251
      %v2039 = vpop.f32.mrf.mxu0
      %v2040 = vadd.f32 %v695, %v2039
      %2041 = vmatmul.f32.gmra.mxu0 %v1254
      %v2042 = vpop.f32.mrf.mxu0
      %v2043 = vadd.f32 %v700, %v2042
      %2044 = vmatmul.f32.gmra.mxu0 %v1257
      %v2045 = vpop.f32.mrf.mxu0
      %v2046 = vadd.f32 %v705, %v2045
      %2047 = vmatmul.f32.gmra.mxu0 %v1260
      %v2048 = vpop.f32.mrf.mxu0
      %v2049 = vadd.f32 %v710, %v2048
      %2050 = vmatmul.f32.gmra.mxu0 %v1263
      %v2051 = vpop.f32.mrf.mxu0
      %v2052 = vadd.f32 %v715, %v2051
      %2053 = vmatmul.f32.gmra.mxu0 %v1266
      %v2054 = vpop.f32.mrf.mxu0
      %v2055 = vadd.f32 %v720, %v2054
      %2056 = vmatmul.f32.gmra.mxu0 %v1269
      %v2057 = vpop.f32.mrf.mxu0
      %v2058 = vadd.f32 %v725, %v2057
      %2059 = vmatmul.f32.gmra.mxu0 %v1272
      %v2060 = vpop.f32.mrf.mxu0
      %v2061 = vadd.f32 %v730, %v2060
      %2062 = vmatmul.f32.gmra.mxu0 %v1275
      %v2063 = vpop.f32.mrf.mxu0
      %v2064 = vadd.f32 %v735, %v2063
      %2065 = vmatmul.f32.gmra.mxu0 %v1278
      %v2066 = vpop.f32.mrf.mxu0
      %v2067 = vadd.f32 %v740, %v2066
      %2068 = vmatmul.f32.gmra.mxu0 %v1281
      %v2069 = vpop.f32.mrf.mxu0
      %v2070 = vadd.f32 %v745, %v2069
      %2071 = vmatmul.f32.gmra.mxu0 %v1284
      %v2072 = vpop.f32.mrf.mxu0
      %v2073 = vadd.f32 %v750, %v2072
      %2074 = vmatmul.f32.gmra.mxu0 %v1287
      %v2075 = vpop.f32.mrf.mxu0
      %v2076 = vadd.f32 %v755, %v2075
      %2077 = vmatmul.f32.gmra.mxu0 %v1290
      %v2078 = vpop.f32.mrf.mxu0
      %v2079 = vadd.f32 %v760, %v2078
      %2080 = vmatmul.f32.gmra.mxu0 %v1293
      %v2081 = vpop.f32.mrf.mxu0
      %v2082 = vadd.f32 %v765, %v2081
      %2083 = vmatmul.f32.gmra.mxu0 %v1296
      %v2084 = vpop.f32.mrf.mxu0
      %v2085 = vadd.f32 %v770, %v2084
      %2086 = vmatmul.f32.gmra.mxu0 %v1299
      %v2087 = vpop.f32.mrf.mxu0
      %v2088 = vadd.f32 %v775, %v2087
      %2089 = vmatmul.f32.gmra.mxu0 %v1302
      %v2090 = vpop.f32.mrf.mxu0
      %v2091 = vadd.f32 %v780, %v2090
      %2092 = vmatmul.f32.gmra.mxu0 %v1305
      %v2093 = vpop.f32.mrf.mxu0
      %v2094 = vadd.f32 %v785, %v2093
      %2095 = vmatmul.f32.gmra.mxu0 %v1308
      %v2096 = vpop.f32.mrf.mxu0
      %v2097 = vadd.f32 %v790, %v2096
      %2098 = vmatmul.f32.gmra.mxu0 %v1311
      %v2099 = vpop.f32.mrf.mxu0
      %v2100 = vadd.f32 %v795, %v2099
      %2101 = vmatmul.f32.gmra.mxu0 %v1314
      %v2102 = vpop.f32.mrf.mxu0
      %v2103 = vadd.f32 %v800, %v2102
      %2104 = vmatmul.f32.gmra.mxu0 %v1317
      %v2105 = vpop.f32.mrf.mxu0
      %v2106 = vadd.f32 %v805, %v2105
      %2107 = vmatmul.f32.gmra.mxu0 %v1320
      %v2108 = vpop.f32.mrf.mxu0
      %v2109 = vadd.f32 %v810, %v2108
      %2110 = vmatmul.f32.gmra.mxu0 %v1323
      %v2111 = vpop.f32.mrf.mxu0
      %v2112 = vadd.f32 %v815, %v2111
      %2113 = vmatmul.f32.gmra.mxu0 %v1326
      %v2114 = vpop.f32.mrf.mxu0
      %v2115 = vadd.f32 %v820, %v2114
      %2116 = vmatmul.f32.gmra.mxu0 %v1329
      %v2117 = vpop.f32.mrf.mxu0
      %v2118 = vadd.f32 %v825, %v2117
      %2119 = vmatmul.f32.gmra.mxu0 %v1332
      %v2120 = vpop.f32.mrf.mxu0
      %v2121 = vadd.f32 %v830, %v2120
      %2122 = vmatmul.f32.gmra.mxu0 %v1335
      %v2123 = vpop.f32.mrf.mxu0
      %v2124 = vadd.f32 %v835, %v2123
      %2125 = vmatmul.f32.gmra.mxu0 %v1338
      %v2126 = vpop.f32.mrf.mxu0
      %v2127 = vadd.f32 %v840, %v2126
      %2128 = vmatmul.f32.gmra.mxu0 %v1341
      %v2129 = vpop.f32.mrf.mxu0
      %v2130 = vadd.f32 %v845, %v2129
      %2131 = vmatmul.f32.gmra.mxu0 %v1344
      %v2132 = vpop.f32.mrf.mxu0
      %v2133 = vadd.f32 %v850, %v2132
      %2134 = vmatmul.f32.gmra.mxu0 %v1347
      %v2135 = vpop.f32.mrf.mxu0
      %v2136 = vadd.f32 %v855, %v2135
      %2137 = vmatmul.f32.gmra.mxu0 %v1350
      %v2138 = vpop.f32.mrf.mxu0
      %v2139 = vadd.f32 %v860, %v2138
      %2140 = vmatmul.f32.gmra.mxu0 %v1353
      %v2141 = vpop.f32.mrf.mxu0
      %v2142 = vadd.f32 %v865, %v2141
      %2143 = vmatmul.f32.gmra.mxu0 %v1356
      %v2144 = vpop.f32.mrf.mxu0
      %v2145 = vadd.f32 %v870, %v2144
      %2146 = vmatmul.f32.gmra.mxu0 %v1359
      %v2147 = vpop.f32.mrf.mxu0
      %v2148 = vadd.f32 %v875, %v2147
      %2149 = vmatmul.f32.gmra.mxu0 %v1362
      %v2150 = vpop.f32.mrf.mxu0
      %v2151 = vadd.f32 %v880, %v2150
      %2152 = vmatmul.f32.gmra.mxu0 %v1365
      %v2153 = vpop.f32.mrf.mxu0
      %v2154 = vadd.f32 %v885, %v2153
      %2155 = vmatmul.f32.gmra.mxu0 %v1368
      %v2156 = vpop.f32.mrf.mxu0
      %v2157 = vadd.f32 %v890, %v2156
      %2158 = vmatmul.f32.gmra.mxu0 %v1371
      %v2159 = vpop.f32.mrf.mxu0
      %v2160 = vadd.f32 %v895, %v2159
      %2161 = vmatmul.f32.gmra.mxu0 %v1374
      %v2162 = vpop.f32.mrf.mxu0
      %v2163 = vadd.f32 %v900, %v2162
      %2164 = vmatmul.f32.gmra.mxu0 %v1377
      %v2165 = vpop.f32.mrf.mxu0
      %v2166 = vadd.f32 %v905, %v2165
      %2167 = vmatmul.f32.gmra.mxu0 %v1380
      %v2168 = vpop.f32.mrf.mxu0
      %v2169 = vadd.f32 %v910, %v2168
      %2170 = vmatmul.f32.gmra.mxu0 %v1383
      %v2171 = vpop.f32.mrf.mxu0
      %v2172 = vadd.f32 %v915, %v2171
      %2173 = vmatmul.f32.gmra.mxu0 %v1386
      %v2174 = vpop.f32.mrf.mxu0
      %v2175 = vadd.f32 %v920, %v2174
      %2176 = vmatmul.f32.gmra.mxu0 %v1389
      %v2177 = vpop.f32.mrf.mxu0
      %v2178 = vadd.f32 %v925, %v2177
      %2179 = vmatmul.f32.gmra.mxu0 %v1392
      %v2180 = vpop.f32.mrf.mxu0
      %v2181 = vadd.f32 %v930, %v2180
      %2182 = vmatmul.f32.gmra.mxu0 %v1395
      %v2183 = vpop.f32.mrf.mxu0
      %v2184 = vadd.f32 %v935, %v2183
      %2185 = vmatmul.f32.gmra.mxu0 %v1398
      %v2186 = vpop.f32.mrf.mxu0
      %v2187 = vadd.f32 %v940, %v2186
      %2188 = vmatmul.f32.gmra.mxu0 %v1401
      %v2189 = vpop.f32.mrf.mxu0
      %v2190 = vadd.f32 %v945, %v2189
      %2191 = vmatmul.f32.gmra.mxu0 %v1404
      %v2192 = vpop.f32.mrf.mxu0
      %v2193 = vadd.f32 %v950, %v2192
      %2194 = vmatmul.f32.gmra.mxu0 %v1407
      %v2195 = vpop.f32.mrf.mxu0
      %v2196 = vadd.f32 %v955, %v2195
      %2197 = vmatmul.f32.gmra.mxu0 %v1410
      %v2198 = vpop.f32.mrf.mxu0
      %v2199 = vadd.f32 %v960, %v2198
      %2200 = vmatmul.f32.gmra.mxu0 %v1413
      %v2201 = vpop.f32.mrf.mxu0
      %v2202 = vadd.f32 %v965, %v2201
      %2203 = vmatmul.f32.gmra.mxu0 %v1416
      %v2204 = vpop.f32.mrf.mxu0
      %v2205 = vadd.f32 %v970, %v2204
      %2206 = vmatmul.f32.gmra.mxu0 %v1419
      %v2207 = vpop.f32.mrf.mxu0
      %v2208 = vadd.f32 %v975, %v2207
      %2209 = vmatmul.f32.gmra.mxu0 %v1422
      %v2210 = vpop.f32.mrf.mxu0
      %v2211 = vadd.f32 %v980, %v2210
      %2212 = vmatmul.f32.gmra.mxu0 %v1425
      %v2213 = vpop.f32.mrf.mxu0
      %v2214 = vadd.f32 %v985, %v2213
      %2215 = vmatmul.f32.gmra.mxu0 %v1428
      %v2216 = vpop.f32.mrf.mxu0
      %v2217 = vadd.f32 %v990, %v2216
      %2218 = vmatmul.f32.gmra.mxu0 %v1431
      %v2219 = vpop.f32.mrf.mxu0
      %v2220 = vadd.f32 %v995, %v2219
      %2221 = vmatmul.f32.gmra.mxu0 %v1434
      %v2222 = vpop.f32.mrf.mxu0
      %v2223 = vadd.f32 %v1000, %v2222
      %2224 = vmatmul.f32.gmra.mxu0 %v1437
      %v2225 = vpop.f32.mrf.mxu0
      %v2226 = vadd.f32 %v1005, %v2225
      %2227 = vmatmul.f32.gmra.mxu0 %v1440
      %v2228 = vpop.f32.mrf.mxu0
      %v2229 = vadd.f32 %v1010, %v2228
      %2230 = vmatmul.f32.gmra.mxu0 %v1443
      %v2231 = vpop.f32.mrf.mxu0
      %v2232 = vadd.f32 %v1015, %v2231
      %2233 = vmatmul.f32.gmra.mxu0 %v1446
      %v2234 = vpop.f32.mrf.mxu0
      %v2235 = vadd.f32 %v1020, %v2234
      %2236 = vmatmul.f32.gmra.mxu0 %v1449
      %v2237 = vpop.f32.mrf.mxu0
      %v2238 = vadd.f32 %v1025, %v2237
      %2239 = vmatmul.f32.gmra.mxu0 %v1452
      %v2240 = vpop.f32.mrf.mxu0
      %v2241 = vadd.f32 %v1030, %v2240
      %2242 = vmatmul.f32.gmra.mxu0 %v1455
      %v2243 = vpop.f32.mrf.mxu0
      %v2244 = vadd.f32 %v1035, %v2243
      %2245 = vmatmul.f32.gmra.mxu0 %v1458
      %v2246 = vpop.f32.mrf.mxu0
      %v2247 = vadd.f32 %v1040, %v2246
      %2248 = vmatmul.f32.gmra.mxu0 %v1461
      %v2249 = vpop.f32.mrf.mxu0
      %v2250 = vadd.f32 %v1045, %v2249
      %2251 = vmatmul.f32.gmra.mxu0 %v1464
      %v2252 = vpop.f32.mrf.mxu0
      %v2253 = vadd.f32 %v1050, %v2252
      %2254 = vmatmul.f32.gmra.mxu0 %v1467
      %v2255 = vpop.f32.mrf.mxu0
      %v2256 = vadd.f32 %v1055, %v2255
      %2257 = vmatmul.f32.gmra.mxu0 %v1470
      %v2258 = vpop.f32.mrf.mxu0
      %v2259 = vadd.f32 %v1060, %v2258
      %2260 = vmatmul.f32.gmra.mxu0 %v1473
      %v2261 = vpop.f32.mrf.mxu0
      %v2262 = vadd.f32 %v1065, %v2261
      %2263 = vmatmul.f32.gmra.mxu0 %v1476
      %v2264 = vpop.f32.mrf.mxu0
      %v2265 = vadd.f32 %v1070, %v2264
      %2266 = vmatmul.f32.gmra.mxu0 %v1479
      %v2267 = vpop.f32.mrf.mxu0
      %v2268 = vadd.f32 %v1075, %v2267
      %2269 = vmatmul.f32.gmra.mxu0 %v1482
      %v2270 = vpop.f32.mrf.mxu0
      %v2271 = vadd.f32 %v1080, %v2270
      %2272 = vmatmul.f32.gmra.mxu0 %v1485
      %v2273 = vpop.f32.mrf.mxu0
      %v2274 = vadd.f32 %v1085, %v2273
      %2275 = vmatmul.f32.gmra.mxu0 %v1488
      %v2276 = vpop.f32.mrf.mxu0
      %v2277 = vadd.f32 %v1090, %v2276
      %2278 = vmatmul.f32.gmra.mxu0 %v1491
      %v2279 = vpop.f32.mrf.mxu0
      %v2280 = vadd.f32 %v1095, %v2279
      %2281 = vmatmul.f32.gmra.mxu0 %v1494
      %v2282 = vpop.f32.mrf.mxu0
      %v2283 = vadd.f32 %v1100, %v2282
      %2284 = vmatmul.f32.gmra.mxu0 %v1497
      %v2285 = vpop.f32.mrf.mxu0
      %v2286 = vadd.f32 %v1105, %v2285
      %2287 = vmatmul.f32.gmra.mxu0 %v1500
      %v2288 = vpop.f32.mrf.mxu0
      %v2289 = vadd.f32 %v1110, %v2288
      %2290 = vmatmul.f32.gmra.mxu0 %v1503
      %v2291 = vpop.f32.mrf.mxu0
      %v2292 = vadd.f32 %v1115, %v2291
      %2293 = vmatmul.f32.gmra.mxu0 %v1506
      %v2294 = vpop.f32.mrf.mxu0
      %v2295 = vadd.f32 %v1120, %v2294
      %2296 = vmatmul.f32.gmra.mxu0 %v1509
      %v2297 = vpop.f32.mrf.mxu0
      %v2298 = vadd.f32 %v1125, %v2297
      %2299 = vmatmul.f32.gmra.mxu0 %v1512
      %v2300 = vpop.f32.mrf.mxu0
      %v2301 = vadd.f32 %v1130, %v2300
      %2302 = vmatmul.f32.gmra.mxu0 %v1515
      %v2303 = vpop.f32.mrf.mxu0
      %v2304 = vadd.f32 %v1135, %v2303
      %2305 = vdwg.mxu0
      %2306 = vst [vmem:[%s249] sm:$0xff] %v1540
      %2307 = vst [vmem:[%s249 + $0x8] sm:$0xff] %v1932
      %2308 = vst [vmem:[%s249 + $0x10] sm:$0xff] %v1543
      %2309 = vst [vmem:[%s249 + $0x18] sm:$0xff] %v1935
      %2310 = vst [vmem:[%s249 + $0x20] sm:$0xff] %v1546
      %2311 = vst [vmem:[%s249 + $0x28] sm:$0xff] %v1938
      %2312 = vst [vmem:[%s249 + $0x30] sm:$0xff] %v1549
      %2313 = vst [vmem:[%s249 + $0x38] sm:$0xff] %v1941
      %2314 = vst [vmem:[%s249 + $0x40] sm:$0xff] %v1552
      %2315 = vst [vmem:[%s249 + $0x48] sm:$0xff] %v1944
      %2316 = vst [vmem:[%s249 + $0x50] sm:$0xff] %v1555
      %2317 = vst [vmem:[%s249 + $0x58] sm:$0xff] %v1947
      %2318 = vst [vmem:[%s249 + $0x60] sm:$0xff] %v1558
      %2319 = vst [vmem:[%s249 + $0x68] sm:$0xff] %v1950
      %2320 = vst [vmem:[%s249 + $0x70] sm:$0xff] %v1561
      %2321 = vst [vmem:[%s249 + $0x78] sm:$0xff] %v1953
      %2322 = vst [vmem:[%s249 + $0x80] sm:$0xff] %v1564
      %2323 = vst [vmem:[%s249 + $0x88] sm:$0xff] %v1956
      %2324 = vst [vmem:[%s249 + $0x90] sm:$0xff] %v1567
      %2325 = vst [vmem:[%s249 + $0x98] sm:$0xff] %v1959
      %2326 = vst [vmem:[%s249 + $0xa0] sm:$0xff] %v1570
      %2327 = vst [vmem:[%s249 + $0xa8] sm:$0xff] %v1962
      %2328 = vst [vmem:[%s249 + $0xb0] sm:$0xff] %v1573
      %2329 = vst [vmem:[%s249 + $0xb8] sm:$0xff] %v1965
      %2330 = vst [vmem:[%s249 + $0xc0] sm:$0xff] %v1576
      %2331 = vst [vmem:[%s249 + $0xc8] sm:$0xff] %v1968
      %2332 = vst [vmem:[%s249 + $0xd0] sm:$0xff] %v1579
      %2333 = vst [vmem:[%s249 + $0xd8] sm:$0xff] %v1971
      %2334 = vst [vmem:[%s249 + $0xe0] sm:$0xff] %v1582
      %2335 = vst [vmem:[%s249 + $0xe8] sm:$0xff] %v1974
      %2336 = vst [vmem:[%s249 + $0xf0] sm:$0xff] %v1585
      %2337 = vst [vmem:[%s249 + $0xf8] sm:$0xff] %v1977
      %2338 = vst [vmem:[%s249 + $0x100] sm:$0xff] %v1588
      %2339 = vst [vmem:[%s249 + $0x108] sm:$0xff] %v1980
      %2340 = vst [vmem:[%s249 + $0x110] sm:$0xff] %v1591
      %2341 = vst [vmem:[%s249 + $0x118] sm:$0xff] %v1983
      %2342 = vst [vmem:[%s249 + $0x120] sm:$0xff] %v1594
      %2343 = vst [vmem:[%s249 + $0x128] sm:$0xff] %v1986
      %2344 = vst [vmem:[%s249 + $0x130] sm:$0xff] %v1597
      %2345 = vst [vmem:[%s249 + $0x138] sm:$0xff] %v1989
      %2346 = vst [vmem:[%s249 + $0x140] sm:$0xff] %v1600
      %2347 = vst [vmem:[%s249 + $0x148] sm:$0xff] %v1992
      %2348 = vst [vmem:[%s249 + $0x150] sm:$0xff] %v1603
      %2349 = vst [vmem:[%s249 + $0x158] sm:$0xff] %v1995
      %2350 = vst [vmem:[%s249 + $0x160] sm:$0xff] %v1606
      %2351 = vst [vmem:[%s249 + $0x168] sm:$0xff] %v1998
      %2352 = vst [vmem:[%s249 + $0x170] sm:$0xff] %v1609
      %2353 = vst [vmem:[%s249 + $0x178] sm:$0xff] %v2001
      %2354 = vst [vmem:[%s249 + $0x180] sm:$0xff] %v1612
      %2355 = vst [vmem:[%s249 + $0x188] sm:$0xff] %v2004
      %2356 = vst [vmem:[%s249 + $0x190] sm:$0xff] %v1615
      %2357 = vst [vmem:[%s249 + $0x198] sm:$0xff] %v2007
      %2358 = vst [vmem:[%s249 + $0x1a0] sm:$0xff] %v1618
      %2359 = vst [vmem:[%s249 + $0x1a8] sm:$0xff] %v2010
      %2360 = vst [vmem:[%s249 + $0x1b0] sm:$0xff] %v1621
      %2361 = vst [vmem:[%s249 + $0x1b8] sm:$0xff] %v2013
      %2362 = vst [vmem:[%s249 + $0x1c0] sm:$0xff] %v1624
      %2363 = vst [vmem:[%s249 + $0x1c8] sm:$0xff] %v2016
      %2364 = vst [vmem:[%s249 + $0x1d0] sm:$0xff] %v1627
      %2365 = vst [vmem:[%s249 + $0x1d8] sm:$0xff] %v2019
      %2366 = vst [vmem:[%s249 + $0x1e0] sm:$0xff] %v1630
      %2367 = vst [vmem:[%s249 + $0x1e8] sm:$0xff] %v2022
      %2368 = vst [vmem:[%s249 + $0x1f0] sm:$0xff] %v1633
      %2369 = vst [vmem:[%s249 + $0x1f8] sm:$0xff] %v2025
      %2370 = vst [vmem:[%s249 + $0x200] sm:$0xff] %v1636
      %2371 = vst [vmem:[%s249 + $0x208] sm:$0xff] %v2028
      %2372 = vst [vmem:[%s249 + $0x210] sm:$0xff] %v1639
      %2373 = vst [vmem:[%s249 + $0x218] sm:$0xff] %v2031
      %2374 = vst [vmem:[%s249 + $0x220] sm:$0xff] %v1642
      %2375 = vst [vmem:[%s249 + $0x228] sm:$0xff] %v2034
      %2376 = vst [vmem:[%s249 + $0x230] sm:$0xff] %v1645
      %2377 = vst [vmem:[%s249 + $0x238] sm:$0xff] %v2037
      %2378 = vst [vmem:[%s249 + $0x240] sm:$0xff] %v1648
      %2379 = vst [vmem:[%s249 + $0x248] sm:$0xff] %v2040
      %2380 = vst [vmem:[%s249 + $0x250] sm:$0xff] %v1651
      %2381 = vst [vmem:[%s249 + $0x258] sm:$0xff] %v2043
      %2382 = vst [vmem:[%s249 + $0x260] sm:$0xff] %v1654
      %2383 = vst [vmem:[%s249 + $0x268] sm:$0xff] %v2046
      %2384 = vst [vmem:[%s249 + $0x270] sm:$0xff] %v1657
      %2385 = vst [vmem:[%s249 + $0x278] sm:$0xff] %v2049
      %2386 = vst [vmem:[%s249 + $0x280] sm:$0xff] %v1660
      %2387 = vst [vmem:[%s249 + $0x288] sm:$0xff] %v2052
      %2388 = vst [vmem:[%s249 + $0x290] sm:$0xff] %v1663
      %2389 = vst [vmem:[%s249 + $0x298] sm:$0xff] %v2055
      %2390 = vst [vmem:[%s249 + $0x2a0] sm:$0xff] %v1666
      %2391 = vst [vmem:[%s249 + $0x2a8] sm:$0xff] %v2058
      %2392 = vst [vmem:[%s249 + $0x2b0] sm:$0xff] %v1669
      %2393 = vst [vmem:[%s249 + $0x2b8] sm:$0xff] %v2061
      %2394 = vst [vmem:[%s249 + $0x2c0] sm:$0xff] %v1672
      %2395 = vst [vmem:[%s249 + $0x2c8] sm:$0xff] %v2064
      %2396 = vst [vmem:[%s249 + $0x2d0] sm:$0xff] %v1675
      %2397 = vst [vmem:[%s249 + $0x2d8] sm:$0xff] %v2067
      %2398 = vst [vmem:[%s249 + $0x2e0] sm:$0xff] %v1678
      %2399 = vst [vmem:[%s249 + $0x2e8] sm:$0xff] %v2070
      %2400 = vst [vmem:[%s249 + $0x2f0] sm:$0xff] %v1681
      %2401 = vst [vmem:[%s249 + $0x2f8] sm:$0xff] %v2073
      %2402 = vst [vmem:[%s249 + $0x300] sm:$0xff] %v1684
      %2403 = vst [vmem:[%s249 + $0x308] sm:$0xff] %v2076
      %2404 = vst [vmem:[%s249 + $0x310] sm:$0xff] %v1687
      %2405 = vst [vmem:[%s249 + $0x318] sm:$0xff] %v2079
      %2406 = vst [vmem:[%s249 + $0x320] sm:$0xff] %v1690
      %2407 = vst [vmem:[%s249 + $0x328] sm:$0xff] %v2082
      %2408 = vst [vmem:[%s249 + $0x330] sm:$0xff] %v1693
      %2409 = vst [vmem:[%s249 + $0x338] sm:$0xff] %v2085
      %2410 = vst [vmem:[%s249 + $0x340] sm:$0xff] %v1696
      %2411 = vst [vmem:[%s249 + $0x348] sm:$0xff] %v2088
      %2412 = vst [vmem:[%s249 + $0x350] sm:$0xff] %v1699
      %2413 = vst [vmem:[%s249 + $0x358] sm:$0xff] %v2091
      %2414 = vst [vmem:[%s249 + $0x360] sm:$0xff] %v1702
      %2415 = vst [vmem:[%s249 + $0x368] sm:$0xff] %v2094
      %2416 = vst [vmem:[%s249 + $0x370] sm:$0xff] %v1705
      %2417 = vst [vmem:[%s249 + $0x378] sm:$0xff] %v2097
      %2418 = vst [vmem:[%s249 + $0x380] sm:$0xff] %v1708
      %2419 = vst [vmem:[%s249 + $0x388] sm:$0xff] %v2100
      %2420 = vst [vmem:[%s249 + $0x390] sm:$0xff] %v1711
      %2421 = vst [vmem:[%s249 + $0x398] sm:$0xff] %v2103
      %2422 = vst [vmem:[%s249 + $0x3a0] sm:$0xff] %v1714
      %2423 = vst [vmem:[%s249 + $0x3a8] sm:$0xff] %v2106
      %2424 = vst [vmem:[%s249 + $0x3b0] sm:$0xff] %v1717
      %2425 = vst [vmem:[%s249 + $0x3b8] sm:$0xff] %v2109
      %2426 = vst [vmem:[%s249 + $0x3c0] sm:$0xff] %v1720
      %2427 = vst [vmem:[%s249 + $0x3c8] sm:$0xff] %v2112
      %2428 = vst [vmem:[%s249 + $0x3d0] sm:$0xff] %v1723
      %2429 = vst [vmem:[%s249 + $0x3d8] sm:$0xff] %v2115
      %2430 = vst [vmem:[%s249 + $0x3e0] sm:$0xff] %v1726
      %2431 = vst [vmem:[%s249 + $0x3e8] sm:$0xff] %v2118
      %2432 = vst [vmem:[%s249 + $0x3f0] sm:$0xff] %v1729
      %2433 = vst [vmem:[%s249 + $0x3f8] sm:$0xff] %v2121
      %2434 = vst [vmem:[%s249 + $0x400] sm:$0xff] %v1732
      %2435 = vst [vmem:[%s249 + $0x408] sm:$0xff] %v2124
      %2436 = vst [vmem:[%s249 + $0x410] sm:$0xff] %v1735
      %2437 = vst [vmem:[%s249 + $0x418] sm:$0xff] %v2127
      %2438 = vst [vmem:[%s249 + $0x420] sm:$0xff] %v1738
      %2439 = vst [vmem:[%s249 + $0x428] sm:$0xff] %v2130
      %2440 = vst [vmem:[%s249 + $0x430] sm:$0xff] %v1741
      %2441 = vst [vmem:[%s249 + $0x438] sm:$0xff] %v2133
      %2442 = vst [vmem:[%s249 + $0x440] sm:$0xff] %v1744
      %2443 = vst [vmem:[%s249 + $0x448] sm:$0xff] %v2136
      %2444 = vst [vmem:[%s249 + $0x450] sm:$0xff] %v1747
      %2445 = vst [vmem:[%s249 + $0x458] sm:$0xff] %v2139
      %2446 = vst [vmem:[%s249 + $0x460] sm:$0xff] %v1750
      %2447 = vst [vmem:[%s249 + $0x468] sm:$0xff] %v2142
      %2448 = vst [vmem:[%s249 + $0x470] sm:$0xff] %v1753
      %2449 = vst [vmem:[%s249 + $0x478] sm:$0xff] %v2145
      %2450 = vst [vmem:[%s249 + $0x480] sm:$0xff] %v1756
      %2451 = vst [vmem:[%s249 + $0x488] sm:$0xff] %v2148
      %2452 = vst [vmem:[%s249 + $0x490] sm:$0xff] %v1759
      %2453 = vst [vmem:[%s249 + $0x498] sm:$0xff] %v2151
      %2454 = vst [vmem:[%s249 + $0x4a0] sm:$0xff] %v1762
      %2455 = vst [vmem:[%s249 + $0x4a8] sm:$0xff] %v2154
      %2456 = vst [vmem:[%s249 + $0x4b0] sm:$0xff] %v1765
      %2457 = vst [vmem:[%s249 + $0x4b8] sm:$0xff] %v2157
      %2458 = vst [vmem:[%s249 + $0x4c0] sm:$0xff] %v1768
      %2459 = vst [vmem:[%s249 + $0x4c8] sm:$0xff] %v2160
      %2460 = vst [vmem:[%s249 + $0x4d0] sm:$0xff] %v1771
      %2461 = vst [vmem:[%s249 + $0x4d8] sm:$0xff] %v2163
      %2462 = vst [vmem:[%s249 + $0x4e0] sm:$0xff] %v1774
      %2463 = vst [vmem:[%s249 + $0x4e8] sm:$0xff] %v2166
      %2464 = vst [vmem:[%s249 + $0x4f0] sm:$0xff] %v1777
      %2465 = vst [vmem:[%s249 + $0x4f8] sm:$0xff] %v2169
      %2466 = vst [vmem:[%s249 + $0x500] sm:$0xff] %v1780
      %2467 = vst [vmem:[%s249 + $0x508] sm:$0xff] %v2172
      %2468 = vst [vmem:[%s249 + $0x510] sm:$0xff] %v1783
      %2469 = vst [vmem:[%s249 + $0x518] sm:$0xff] %v2175
      %2470 = vst [vmem:[%s249 + $0x520] sm:$0xff] %v1786
      %2471 = vst [vmem:[%s249 + $0x528] sm:$0xff] %v2178
      %2472 = vst [vmem:[%s249 + $0x530] sm:$0xff] %v1789
      %2473 = vst [vmem:[%s249 + $0x538] sm:$0xff] %v2181
      %2474 = vst [vmem:[%s249 + $0x540] sm:$0xff] %v1792
      %2475 = vst [vmem:[%s249 + $0x548] sm:$0xff] %v2184
      %2476 = vst [vmem:[%s249 + $0x550] sm:$0xff] %v1795
      %2477 = vst [vmem:[%s249 + $0x558] sm:$0xff] %v2187
      %2478 = vst [vmem:[%s249 + $0x560] sm:$0xff] %v1798
      %2479 = vst [vmem:[%s249 + $0x568] sm:$0xff] %v2190
      %2480 = vst [vmem:[%s249 + $0x570] sm:$0xff] %v1801
      %2481 = vst [vmem:[%s249 + $0x578] sm:$0xff] %v2193
      %2482 = vst [vmem:[%s249 + $0x580] sm:$0xff] %v1804
      %2483 = vst [vmem:[%s249 + $0x588] sm:$0xff] %v2196
      %2484 = vst [vmem:[%s249 + $0x590] sm:$0xff] %v1807
      %2485 = vst [vmem:[%s249 + $0x598] sm:$0xff] %v2199
      %2486 = vst [vmem:[%s249 + $0x5a0] sm:$0xff] %v1810
      %2487 = vst [vmem:[%s249 + $0x5a8] sm:$0xff] %v2202
      %2488 = vst [vmem:[%s249 + $0x5b0] sm:$0xff] %v1813
      %2489 = vst [vmem:[%s249 + $0x5b8] sm:$0xff] %v2205
      %2490 = vst [vmem:[%s249 + $0x5c0] sm:$0xff] %v1816
      %2491 = vst [vmem:[%s249 + $0x5c8] sm:$0xff] %v2208
      %2492 = vst [vmem:[%s249 + $0x5d0] sm:$0xff] %v1819
      %2493 = vst [vmem:[%s249 + $0x5d8] sm:$0xff] %v2211
      %2494 = vst [vmem:[%s249 + $0x5e0] sm:$0xff] %v1822
      %2495 = vst [vmem:[%s249 + $0x5e8] sm:$0xff] %v2214
      %2496 = vst [vmem:[%s249 + $0x5f0] sm:$0xff] %v1825
      %2497 = vst [vmem:[%s249 + $0x5f8] sm:$0xff] %v2217
      %2498 = vst [vmem:[%s249 + $0x600] sm:$0xff] %v1828
      %2499 = vst [vmem:[%s249 + $0x608] sm:$0xff] %v2220
      %2500 = vst [vmem:[%s249 + $0x610] sm:$0xff] %v1831
      %2501 = vst [vmem:[%s249 + $0x618] sm:$0xff] %v2223
      %2502 = vst [vmem:[%s249 + $0x620] sm:$0xff] %v1834
      %2503 = vst [vmem:[%s249 + $0x628] sm:$0xff] %v2226
      %2504 = vst [vmem:[%s249 + $0x630] sm:$0xff] %v1837
      %2505 = vst [vmem:[%s249 + $0x638] sm:$0xff] %v2229
      %2506 = vst [vmem:[%s249 + $0x640] sm:$0xff] %v1840
      %2507 = vst [vmem:[%s249 + $0x648] sm:$0xff] %v2232
      %2508 = vst [vmem:[%s249 + $0x650] sm:$0xff] %v1843
      %2509 = vst [vmem:[%s249 + $0x658] sm:$0xff] %v2235
      %2510 = vst [vmem:[%s249 + $0x660] sm:$0xff] %v1846
      %2511 = vst [vmem:[%s249 + $0x668] sm:$0xff] %v2238
      %2512 = vst [vmem:[%s249 + $0x670] sm:$0xff] %v1849
      %2513 = vst [vmem:[%s249 + $0x678] sm:$0xff] %v2241
      %2514 = vst [vmem:[%s249 + $0x680] sm:$0xff] %v1852
      %2515 = vst [vmem:[%s249 + $0x688] sm:$0xff] %v2244
      %2516 = vst [vmem:[%s249 + $0x690] sm:$0xff] %v1855
      %2517 = vst [vmem:[%s249 + $0x698] sm:$0xff] %v2247
      %2518 = vst [vmem:[%s249 + $0x6a0] sm:$0xff] %v1858
      %2519 = vst [vmem:[%s249 + $0x6a8] sm:$0xff] %v2250
      %2520 = vst [vmem:[%s249 + $0x6b0] sm:$0xff] %v1861
      %2521 = vst [vmem:[%s249 + $0x6b8] sm:$0xff] %v2253
      %2522 = vst [vmem:[%s249 + $0x6c0] sm:$0xff] %v1864
      %2523 = vst [vmem:[%s249 + $0x6c8] sm:$0xff] %v2256
      %2524 = vst [vmem:[%s249 + $0x6d0] sm:$0xff] %v1867
      %2525 = vst [vmem:[%s249 + $0x6d8] sm:$0xff] %v2259
      %2526 = vst [vmem:[%s249 + $0x6e0] sm:$0xff] %v1870
      %2527 = vst [vmem:[%s249 + $0x6e8] sm:$0xff] %v2262
      %2528 = vst [vmem:[%s249 + $0x6f0] sm:$0xff] %v1873
      %2529 = vst [vmem:[%s249 + $0x6f8] sm:$0xff] %v2265
      %2530 = vst [vmem:[%s249 + $0x700] sm:$0xff] %v1876
      %2531 = vst [vmem:[%s249 + $0x708] sm:$0xff] %v2268
      %2532 = vst [vmem:[%s249 + $0x710] sm:$0xff] %v1879
      %2533 = vst [vmem:[%s249 + $0x718] sm:$0xff] %v2271
      %2534 = vst [vmem:[%s249 + $0x720] sm:$0xff] %v1882
      %2535 = vst [vmem:[%s249 + $0x728] sm:$0xff] %v2274
      %2536 = vst [vmem:[%s249 + $0x730] sm:$0xff] %v1885
      %2537 = vst [vmem:[%s249 + $0x738] sm:$0xff] %v2277
      %2538 = vst [vmem:[%s249 + $0x740] sm:$0xff] %v1888
      %2539 = vst [vmem:[%s249 + $0x748] sm:$0xff] %v2280
      %2540 = vst [vmem:[%s249 + $0x750] sm:$0xff] %v1891
      %2541 = vst [vmem:[%s249 + $0x758] sm:$0xff] %v2283
      %2542 = vst [vmem:[%s249 + $0x760] sm:$0xff] %v1894
      %2543 = vst [vmem:[%s249 + $0x768] sm:$0xff] %v2286
      %2544 = vst [vmem:[%s249 + $0x770] sm:$0xff] %v1897
      %2545 = vst [vmem:[%s249 + $0x778] sm:$0xff] %v2289
      %2546 = vst [vmem:[%s249 + $0x780] sm:$0xff] %v1900
      %2547 = vst [vmem:[%s249 + $0x788] sm:$0xff] %v2292
      %2548 = vst [vmem:[%s249 + $0x790] sm:$0xff] %v1903
      %2549 = vst [vmem:[%s249 + $0x798] sm:$0xff] %v2295
      %2550 = vst [vmem:[%s249 + $0x7a0] sm:$0xff] %v1906
      %2551 = vst [vmem:[%s249 + $0x7a8] sm:$0xff] %v2298
      %2552 = vst [vmem:[%s249 + $0x7b0] sm:$0xff] %v1909
      %2553 = vst [vmem:[%s249 + $0x7b8] sm:$0xff] %v2301
      %2554 = vst [vmem:[%s249 + $0x7c0] sm:$0xff] %v1912
      %2555 = vst [vmem:[%s249 + $0x7c8] sm:$0xff] %v2304
      %v2556 = vmul.f32 %v1540, 0.5
      %v2557 = vmul.f32 %v1932, 0.5
      %v2558 = vmul.f32 %v1543, 0.5
      %v2559 = vmul.f32 %v1935, 0.5
      %v2560 = vmul.f32 %v1546, 0.5
      %v2561 = vmul.f32 %v1938, 0.5
      %v2562 = vmul.f32 %v1549, 0.5
      %v2563 = vmul.f32 %v1941, 0.5
      %v2564 = vmul.f32 %v1552, 0.5
      %v2565 = vmul.f32 %v1944, 0.5
      %v2566 = vmul.f32 %v1555, 0.5
      %v2567 = vmul.f32 %v1947, 0.5
      %v2568 = vmul.f32 %v1558, 0.5
      %v2569 = vmul.f32 %v1950, 0.5
      %v2570 = vmul.f32 %v1561, 0.5
      %v2571 = vmul.f32 %v1953, 0.5
      %v2572 = vmul.f32 %v1564, 0.5
      %v2573 = vmul.f32 %v1956, 0.5
      %v2574 = vmul.f32 %v1567, 0.5
      %v2575 = vmul.f32 %v1959, 0.5
      %v2576 = vmul.f32 %v1570, 0.5
      %v2577 = vmul.f32 %v1962, 0.5
      %v2578 = vmul.f32 %v1573, 0.5
      %v2579 = vmul.f32 %v1965, 0.5
      %v2580 = vmul.f32 %v1576, 0.5
      %v2581 = vmul.f32 %v1968, 0.5
      %v2582 = vmul.f32 %v1579, 0.5
      %v2583 = vmul.f32 %v1971, 0.5
      %v2584 = vmul.f32 %v1582, 0.5
      %v2585 = vmul.f32 %v1974, 0.5
      %v2586 = vmul.f32 %v1585, 0.5
      %v2587 = vmul.f32 %v1977, 0.5
      %v2588 = vmul.f32 %v1588, 0.5
      %v2589 = vmul.f32 %v1980, 0.5
      %v2590 = vmul.f32 %v1591, 0.5
      %v2591 = vmul.f32 %v1983, 0.5
      %v2592 = vmul.f32 %v1594, 0.5
      %v2593 = vmul.f32 %v1986, 0.5
      %v2594 = vmul.f32 %v1597, 0.5
      %v2595 = vmul.f32 %v1989, 0.5
      %v2596 = vmul.f32 %v1600, 0.5
      %v2597 = vmul.f32 %v1992, 0.5
      %v2598 = vmul.f32 %v1603, 0.5
      %v2599 = vmul.f32 %v1995, 0.5
      %v2600 = vmul.f32 %v1606, 0.5
      %v2601 = vmul.f32 %v1998, 0.5
      %v2602 = vmul.f32 %v1609, 0.5
      %v2603 = vmul.f32 %v2001, 0.5
      %v2604 = vmul.f32 %v1612, 0.5
      %v2605 = vmul.f32 %v2004, 0.5
      %v2606 = vmul.f32 %v1615, 0.5
      %v2607 = vmul.f32 %v2007, 0.5
      %v2608 = vmul.f32 %v1618, 0.5
      %v2609 = vmul.f32 %v2010, 0.5
      %v2610 = vmul.f32 %v1621, 0.5
      %v2611 = vmul.f32 %v2013, 0.5
      %v2612 = vmul.f32 %v1624, 0.5
      %v2613 = vmul.f32 %v2016, 0.5
      %v2614 = vmul.f32 %v1627, 0.5
      %v2615 = vmul.f32 %v2019, 0.5
      %v2616 = vmul.f32 %v1630, 0.5
      %v2617 = vmul.f32 %v2022, 0.5
      %v2618 = vmul.f32 %v1633, 0.5
      %v2619 = vmul.f32 %v2025, 0.5
      %v2620 = vmul.f32 %v1636, 0.5
      %v2621 = vmul.f32 %v2028, 0.5
      %v2622 = vmul.f32 %v1639, 0.5
      %v2623 = vmul.f32 %v2031, 0.5
      %v2624 = vmul.f32 %v1642, 0.5
      %v2625 = vmul.f32 %v2034, 0.5
      %v2626 = vmul.f32 %v1645, 0.5
      %v2627 = vmul.f32 %v2037, 0.5
      %v2628 = vmul.f32 %v1648, 0.5
      %v2629 = vmul.f32 %v2040, 0.5
      %v2630 = vmul.f32 %v1651, 0.5
      %v2631 = vmul.f32 %v2043, 0.5
      %v2632 = vmul.f32 %v1654, 0.5
      %v2633 = vmul.f32 %v2046, 0.5
      %v2634 = vmul.f32 %v1657, 0.5
      %v2635 = vmul.f32 %v2049, 0.5
      %v2636 = vmul.f32 %v1660, 0.5
      %v2637 = vmul.f32 %v2052, 0.5
      %v2638 = vmul.f32 %v1663, 0.5
      %v2639 = vmul.f32 %v2055, 0.5
      %v2640 = vmul.f32 %v1666, 0.5
      %v2641 = vmul.f32 %v2058, 0.5
      %v2642 = vmul.f32 %v1669, 0.5
      %v2643 = vmul.f32 %v2061, 0.5
      %v2644 = vmul.f32 %v1672, 0.5
      %v2645 = vmul.f32 %v2064, 0.5
      %v2646 = vmul.f32 %v1675, 0.5
      %v2647 = vmul.f32 %v2067, 0.5
      %v2648 = vmul.f32 %v1678, 0.5
      %v2649 = vmul.f32 %v2070, 0.5
      %v2650 = vmul.f32 %v1681, 0.5
      %v2651 = vmul.f32 %v2073, 0.5
      %v2652 = vmul.f32 %v1684, 0.5
      %v2653 = vmul.f32 %v2076, 0.5
      %v2654 = vmul.f32 %v1687, 0.5
      %v2655 = vmul.f32 %v2079, 0.5
      %v2656 = vmul.f32 %v1690, 0.5
      %v2657 = vmul.f32 %v2082, 0.5
      %v2658 = vmul.f32 %v1693, 0.5
      %v2659 = vmul.f32 %v2085, 0.5
      %v2660 = vmul.f32 %v1696, 0.5
      %v2661 = vmul.f32 %v2088, 0.5
      %v2662 = vmul.f32 %v1699, 0.5
      %v2663 = vmul.f32 %v2091, 0.5
      %v2664 = vmul.f32 %v1702, 0.5
      %v2665 = vmul.f32 %v2094, 0.5
      %v2666 = vmul.f32 %v1705, 0.5
      %v2667 = vmul.f32 %v2097, 0.5
      %v2668 = vmul.f32 %v1708, 0.5
      %v2669 = vmul.f32 %v2100, 0.5
      %v2670 = vmul.f32 %v1711, 0.5
      %v2671 = vmul.f32 %v2103, 0.5
      %v2672 = vmul.f32 %v1714, 0.5
      %v2673 = vmul.f32 %v2106, 0.5
      %v2674 = vmul.f32 %v1717, 0.5
      %v2675 = vmul.f32 %v2109, 0.5
      %v2676 = vmul.f32 %v1720, 0.5
      %v2677 = vmul.f32 %v2112, 0.5
      %v2678 = vmul.f32 %v1723, 0.5
      %v2679 = vmul.f32 %v2115, 0.5
      %v2680 = vmul.f32 %v1726, 0.5
      %v2681 = vmul.f32 %v2118, 0.5
      %v2682 = vmul.f32 %v1729, 0.5
      %v2683 = vmul.f32 %v2121, 0.5
      %v2684 = vmul.f32 %v1732, 0.5
      %v2685 = vmul.f32 %v2124, 0.5
      %v2686 = vmul.f32 %v1735, 0.5
      %v2687 = vmul.f32 %v2127, 0.5
      %v2688 = vmul.f32 %v1738, 0.5
      %v2689 = vmul.f32 %v2130, 0.5
      %v2690 = vmul.f32 %v1741, 0.5
      %v2691 = vmul.f32 %v2133, 0.5
      %v2692 = vmul.f32 %v1744, 0.5
      %v2693 = vmul.f32 %v2136, 0.5
      %v2694 = vmul.f32 %v1747, 0.5
      %v2695 = vmul.f32 %v2139, 0.5
      %v2696 = vmul.f32 %v1750, 0.5
      %v2697 = vmul.f32 %v2142, 0.5
      %v2698 = vmul.f32 %v1753, 0.5
      %v2699 = vmul.f32 %v2145, 0.5
      %v2700 = vmul.f32 %v1756, 0.5
      %v2701 = vmul.f32 %v2148, 0.5
      %v2702 = vmul.f32 %v1759, 0.5
      %v2703 = vmul.f32 %v2151, 0.5
      %v2704 = vmul.f32 %v1762, 0.5
      %v2705 = vmul.f32 %v2154, 0.5
      %v2706 = vmul.f32 %v1765, 0.5
      %v2707 = vmul.f32 %v2157, 0.5
      %v2708 = vmul.f32 %v1768, 0.5
      %v2709 = vmul.f32 %v2160, 0.5
      %v2710 = vmul.f32 %v1771, 0.5
      %v2711 = vmul.f32 %v2163, 0.5
      %v2712 = vmul.f32 %v1774, 0.5
      %v2713 = vmul.f32 %v2166, 0.5
      %v2714 = vmul.f32 %v1777, 0.5
      %v2715 = vmul.f32 %v2169, 0.5
      %v2716 = vmul.f32 %v1780, 0.5
      %v2717 = vmul.f32 %v2172, 0.5
      %v2718 = vmul.f32 %v1783, 0.5
      %v2719 = vmul.f32 %v2175, 0.5
      %v2720 = vmul.f32 %v1786, 0.5
      %v2721 = vmul.f32 %v2178, 0.5
      %v2722 = vmul.f32 %v1789, 0.5
      %v2723 = vmul.f32 %v2181, 0.5
      %v2724 = vmul.f32 %v1792, 0.5
      %v2725 = vmul.f32 %v2184, 0.5
      %v2726 = vmul.f32 %v1795, 0.5
      %v2727 = vmul.f32 %v2187, 0.5
      %v2728 = vmul.f32 %v1798, 0.5
      %v2729 = vmul.f32 %v2190, 0.5
      %v2730 = vmul.f32 %v1801, 0.5
      %v2731 = vmul.f32 %v2193, 0.5
      %v2732 = vmul.f32 %v1804, 0.5
      %v2733 = vmul.f32 %v2196, 0.5
      %v2734 = vmul.f32 %v1807, 0.5
      %v2735 = vmul.f32 %v2199, 0.5
      %v2736 = vmul.f32 %v1810, 0.5
      %v2737 = vmul.f32 %v2202, 0.5
      %v2738 = vmul.f32 %v1813, 0.5
      %v2739 = vmul.f32 %v2205, 0.5
      %v2740 = vmul.f32 %v1816, 0.5
      %v2741 = vmul.f32 %v2208, 0.5
      %v2742 = vmul.f32 %v1819, 0.5
      %v2743 = vmul.f32 %v2211, 0.5
      %v2744 = vmul.f32 %v1822, 0.5
      %v2745 = vmul.f32 %v2214, 0.5
      %v2746 = vmul.f32 %v1825, 0.5
      %v2747 = vmul.f32 %v2217, 0.5
      %v2748 = vmul.f32 %v1828, 0.5
      %v2749 = vmul.f32 %v2220, 0.5
      %v2750 = vmul.f32 %v1831, 0.5
      %v2751 = vmul.f32 %v2223, 0.5
      %v2752 = vmul.f32 %v1834, 0.5
      %v2753 = vmul.f32 %v2226, 0.5
      %v2754 = vmul.f32 %v1837, 0.5
      %v2755 = vmul.f32 %v2229, 0.5
      %v2756 = vmul.f32 %v1840, 0.5
      %v2757 = vmul.f32 %v2232, 0.5
      %v2758 = vmul.f32 %v1843, 0.5
      %v2759 = vmul.f32 %v2235, 0.5
      %v2760 = vmul.f32 %v1846, 0.5
      %v2761 = vmul.f32 %v2238, 0.5
      %v2762 = vmul.f32 %v1849, 0.5
      %v2763 = vmul.f32 %v2241, 0.5
      %v2764 = vmul.f32 %v1852, 0.5
      %v2765 = vmul.f32 %v2244, 0.5
      %v2766 = vmul.f32 %v1855, 0.5
      %v2767 = vmul.f32 %v2247, 0.5
      %v2768 = vmul.f32 %v1858, 0.5
      %v2769 = vmul.f32 %v2250, 0.5
      %v2770 = vmul.f32 %v1861, 0.5
      %v2771 = vmul.f32 %v2253, 0.5
      %v2772 = vmul.f32 %v1864, 0.5
      %v2773 = vmul.f32 %v2256, 0.5
      %v2774 = vmul.f32 %v1867, 0.5
      %v2775 = vmul.f32 %v2259, 0.5
      %v2776 = vmul.f32 %v1870, 0.5
      %v2777 = vmul.f32 %v2262, 0.5
      %v2778 = vmul.f32 %v1873, 0.5
      %v2779 = vmul.f32 %v2265, 0.5
      %v2780 = vmul.f32 %v1876, 0.5
      %v2781 = vmul.f32 %v2268, 0.5
      %v2782 = vmul.f32 %v1879, 0.5
      %v2783 = vmul.f32 %v2271, 0.5
      %v2784 = vmul.f32 %v1882, 0.5
      %v2785 = vmul.f32 %v2274, 0.5
      %v2786 = vmul.f32 %v1885, 0.5
      %v2787 = vmul.f32 %v2277, 0.5
      %v2788 = vmul.f32 %v1888, 0.5
      %v2789 = vmul.f32 %v2280, 0.5
      %v2790 = vmul.f32 %v1891, 0.5
      %v2791 = vmul.f32 %v2283, 0.5
      %v2792 = vmul.f32 %v1894, 0.5
      %v2793 = vmul.f32 %v2286, 0.5
      %v2794 = vmul.f32 %v1897, 0.5
      %v2795 = vmul.f32 %v2289, 0.5
      %v2796 = vmul.f32 %v1900, 0.5
      %v2797 = vmul.f32 %v2292, 0.5
      %v2798 = vmul.f32 %v1903, 0.5
      %v2799 = vmul.f32 %v2295, 0.5
      %v2800 = vmul.f32 %v1906, 0.5
      %v2801 = vmul.f32 %v2298, 0.5
      %v2802 = vmul.f32 %v1909, 0.5
      %v2803 = vmul.f32 %v2301, 0.5
      %v2804 = vmul.f32 %v1912, 0.5
      %v2805 = vmul.f32 %v2304, 0.5
      %v2806 = vtanh.pop %v2556
      %v2807 = vtanh.pop %v2557
      %v2808 = vtanh.pop %v2558
      %v2809 = vtanh.pop %v2559
      %v2810 = vtanh.pop %v2560
      %v2811 = vtanh.pop %v2561
      %v2812 = vtanh.pop %v2562
      %v2813 = vtanh.pop %v2563
      %v2814 = vtanh.pop %v2564
      %v2815 = vtanh.pop %v2565
      %v2816 = vtanh.pop %v2566
      %v2817 = vtanh.pop %v2567
      %v2818 = vtanh.pop %v2568
      %v2819 = vtanh.pop %v2569
      %v2820 = vtanh.pop %v2570
      %v2821 = vtanh.pop %v2571
      %v2822 = vtanh.pop %v2572
      %v2823 = vtanh.pop %v2573
      %v2824 = vtanh.pop %v2574
      %v2825 = vtanh.pop %v2575
      %v2826 = vtanh.pop %v2576
      %v2827 = vtanh.pop %v2577
      %v2828 = vtanh.pop %v2578
      %v2829 = vtanh.pop %v2579
      %v2830 = vtanh.pop %v2580
      %v2831 = vtanh.pop %v2581
      %v2832 = vtanh.pop %v2582
      %v2833 = vtanh.pop %v2583
      %v2834 = vtanh.pop %v2584
      %v2835 = vtanh.pop %v2585
      %v2836 = vtanh.pop %v2586
      %v2837 = vtanh.pop %v2587
      %v2838 = vtanh.pop %v2588
      %v2839 = vtanh.pop %v2589
      %v2840 = vtanh.pop %v2590
      %v2841 = vtanh.pop %v2591
      %v2842 = vtanh.pop %v2592
      %v2843 = vtanh.pop %v2593
      %v2844 = vtanh.pop %v2594
      %v2845 = vtanh.pop %v2595
      %v2846 = vtanh.pop %v2596
      %v2847 = vtanh.pop %v2597
      %v2848 = vtanh.pop %v2598
      %v2849 = vtanh.pop %v2599
      %v2850 = vtanh.pop %v2600
      %v2851 = vtanh.pop %v2601
      %v2852 = vtanh.pop %v2602
      %v2853 = vtanh.pop %v2603
      %v2854 = vtanh.pop %v2604
      %v2855 = vtanh.pop %v2605
      %v2856 = vtanh.pop %v2606
      %v2857 = vtanh.pop %v2607
      %v2858 = vtanh.pop %v2608
      %v2859 = vtanh.pop %v2609
      %v2860 = vtanh.pop %v2610
      %v2861 = vtanh.pop %v2611
      %v2862 = vtanh.pop %v2612
      %v2863 = vtanh.pop %v2613
      %v2864 = vtanh.pop %v2614
      %v2865 = vtanh.pop %v2615
      %v2866 = vtanh.pop %v2616
      %v2867 = vtanh.pop %v2617
      %v2868 = vtanh.pop %v2618
      %v2869 = vtanh.pop %v2619
      %v2870 = vtanh.pop %v2620
      %v2871 = vtanh.pop %v2621
      %v2872 = vtanh.pop %v2622
      %v2873 = vtanh.pop %v2623
      %v2874 = vtanh.pop %v2624
      %v2875 = vtanh.pop %v2625
      %v2876 = vtanh.pop %v2626
      %v2877 = vtanh.pop %v2627
      %v2878 = vtanh.pop %v2628
      %v2879 = vtanh.pop %v2629
      %v2880 = vtanh.pop %v2630
      %v2881 = vtanh.pop %v2631
      %v2882 = vtanh.pop %v2632
      %v2883 = vtanh.pop %v2633
      %v2884 = vtanh.pop %v2634
      %v2885 = vtanh.pop %v2635
      %v2886 = vtanh.pop %v2636
      %v2887 = vtanh.pop %v2637
      %v2888 = vtanh.pop %v2638
      %v2889 = vtanh.pop %v2639
      %v2890 = vtanh.pop %v2640
      %v2891 = vtanh.pop %v2641
      %v2892 = vtanh.pop %v2642
      %v2893 = vtanh.pop %v2643
      %v2894 = vtanh.pop %v2644
      %v2895 = vtanh.pop %v2645
      %v2896 = vtanh.pop %v2646
      %v2897 = vtanh.pop %v2647
      %v2898 = vtanh.pop %v2648
      %v2899 = vtanh.pop %v2649
      %v2900 = vtanh.pop %v2650
      %v2901 = vtanh.pop %v2651
      %v2902 = vtanh.pop %v2652
      %v2903 = vtanh.pop %v2653
      %v2904 = vtanh.pop %v2654
      %v2905 = vtanh.pop %v2655
      %v2906 = vtanh.pop %v2656
      %v2907 = vtanh.pop %v2657
      %v2908 = vtanh.pop %v2658
      %v2909 = vtanh.pop %v2659
      %v2910 = vtanh.pop %v2660
      %v2911 = vtanh.pop %v2661
      %v2912 = vtanh.pop %v2662
      %v2913 = vtanh.pop %v2663
      %v2914 = vtanh.pop %v2664
      %v2915 = vtanh.pop %v2665
      %v2916 = vtanh.pop %v2666
      %v2917 = vtanh.pop %v2667
      %v2918 = vtanh.pop %v2668
      %v2919 = vtanh.pop %v2669
      %v2920 = vtanh.pop %v2670
      %v2921 = vtanh.pop %v2671
      %v2922 = vtanh.pop %v2672
      %v2923 = vtanh.pop %v2673
      %v2924 = vtanh.pop %v2674
      %v2925 = vtanh.pop %v2675
      %v2926 = vtanh.pop %v2676
      %v2927 = vtanh.pop %v2677
      %v2928 = vtanh.pop %v2678
      %v2929 = vtanh.pop %v2679
      %v2930 = vtanh.pop %v2680
      %v2931 = vtanh.pop %v2681
      %v2932 = vtanh.pop %v2682
      %v2933 = vtanh.pop %v2683
      %v2934 = vtanh.pop %v2684
      %v2935 = vtanh.pop %v2685
      %v2936 = vtanh.pop %v2686
      %v2937 = vtanh.pop %v2687
      %v2938 = vtanh.pop %v2688
      %v2939 = vtanh.pop %v2689
      %v2940 = vtanh.pop %v2690
      %v2941 = vtanh.pop %v2691
      %v2942 = vtanh.pop %v2692
      %v2943 = vtanh.pop %v2693
      %v2944 = vtanh.pop %v2694
      %v2945 = vtanh.pop %v2695
      %v2946 = vtanh.pop %v2696
      %v2947 = vtanh.pop %v2697
      %v2948 = vtanh.pop %v2698
      %v2949 = vtanh.pop %v2699
      %v2950 = vtanh.pop %v2700
      %v2951 = vtanh.pop %v2701
      %v2952 = vtanh.pop %v2702
      %v2953 = vtanh.pop %v2703
      %v2954 = vtanh.pop %v2704
      %v2955 = vtanh.pop %v2705
      %v2956 = vtanh.pop %v2706
      %v2957 = vtanh.pop %v2707
      %v2958 = vtanh.pop %v2708
      %v2959 = vtanh.pop %v2709
      %v2960 = vtanh.pop %v2710
      %v2961 = vtanh.pop %v2711
      %v2962 = vtanh.pop %v2712
      %v2963 = vtanh.pop %v2713
      %v2964 = vtanh.pop %v2714
      %v2965 = vtanh.pop %v2715
      %v2966 = vtanh.pop %v2716
      %v2967 = vtanh.pop %v2717
      %v2968 = vtanh.pop %v2718
      %v2969 = vtanh.pop %v2719
      %v2970 = vtanh.pop %v2720
      %v2971 = vtanh.pop %v2721
      %v2972 = vtanh.pop %v2722
      %v2973 = vtanh.pop %v2723
      %v2974 = vtanh.pop %v2724
      %v2975 = vtanh.pop %v2725
      %v2976 = vtanh.pop %v2726
      %v2977 = vtanh.pop %v2727
      %v2978 = vtanh.pop %v2728
      %v2979 = vtanh.pop %v2729
      %v2980 = vtanh.pop %v2730
      %v2981 = vtanh.pop %v2731
      %v2982 = vtanh.pop %v2732
      %v2983 = vtanh.pop %v2733
      %v2984 = vtanh.pop %v2734
      %v2985 = vtanh.pop %v2735
      %v2986 = vtanh.pop %v2736
      %v2987 = vtanh.pop %v2737
      %v2988 = vtanh.pop %v2738
      %v2989 = vtanh.pop %v2739
      %v2990 = vtanh.pop %v2740
      %v2991 = vtanh.pop %v2741
      %v2992 = vtanh.pop %v2742
      %v2993 = vtanh.pop %v2743
      %v2994 = vtanh.pop %v2744
      %v2995 = vtanh.pop %v2745
      %v2996 = vtanh.pop %v2746
      %v2997 = vtanh.pop %v2747
      %v2998 = vtanh.pop %v2748
      %v2999 = vtanh.pop %v2749
      %v3000 = vtanh.pop %v2750
      %v3001 = vtanh.pop %v2751
      %v3002 = vtanh.pop %v2752
      %v3003 = vtanh.pop %v2753
      %v3004 = vtanh.pop %v2754
      %v3005 = vtanh.pop %v2755
      %v3006 = vtanh.pop %v2756
      %v3007 = vtanh.pop %v2757
      %v3008 = vtanh.pop %v2758
      %v3009 = vtanh.pop %v2759
      %v3010 = vtanh.pop %v2760
      %v3011 = vtanh.pop %v2761
      %v3012 = vtanh.pop %v2762
      %v3013 = vtanh.pop %v2763
      %v3014 = vtanh.pop %v2764
      %v3015 = vtanh.pop %v2765
      %v3016 = vtanh.pop %v2766
      %v3017 = vtanh.pop %v2767
      %v3018 = vtanh.pop %v2768
      %v3019 = vtanh.pop %v2769
      %v3020 = vtanh.pop %v2770
      %v3021 = vtanh.pop %v2771
      %v3022 = vtanh.pop %v2772
      %v3023 = vtanh.pop %v2773
      %v3024 = vtanh.pop %v2774
      %v3025 = vtanh.pop %v2775
      %v3026 = vtanh.pop %v2776
      %v3027 = vtanh.pop %v2777
      %v3028 = vtanh.pop %v2778
      %v3029 = vtanh.pop %v2779
      %v3030 = vtanh.pop %v2780
      %v3031 = vtanh.pop %v2781
      %v3032 = vtanh.pop %v2782
      %v3033 = vtanh.pop %v2783
      %v3034 = vtanh.pop %v2784
      %v3035 = vtanh.pop %v2785
      %v3036 = vtanh.pop %v2786
      %v3037 = vtanh.pop %v2787
      %v3038 = vtanh.pop %v2788
      %v3039 = vtanh.pop %v2789
      %v3040 = vtanh.pop %v2790
      %v3041 = vtanh.pop %v2791
      %v3042 = vtanh.pop %v2792
      %v3043 = vtanh.pop %v2793
      %v3044 = vtanh.pop %v2794
      %v3045 = vtanh.pop %v2795
      %v3046 = vtanh.pop %v2796
      %v3047 = vtanh.pop %v2797
      %v3048 = vtanh.pop %v2798
      %v3049 = vtanh.pop %v2799
      %v3050 = vtanh.pop %v2800
      %v3051 = vtanh.pop %v2801
      %v3052 = vtanh.pop %v2802
      %v3053 = vtanh.pop %v2803
      %v3054 = vtanh.pop %v2804
      %v3055 = vtanh.pop %v2805
      %v3056 = vmul.f32 %v2806, 0.5
      %v3057 = vmul.f32 %v2807, 0.5
      %v3058 = vmul.f32 %v2808, 0.5
      %v3059 = vmul.f32 %v2809, 0.5
      %v3060 = vmul.f32 %v2810, 0.5
      %v3061 = vmul.f32 %v2811, 0.5
      %v3062 = vmul.f32 %v2812, 0.5
      %v3063 = vmul.f32 %v2813, 0.5
      %v3064 = vmul.f32 %v2814, 0.5
      %v3065 = vmul.f32 %v2815, 0.5
      %v3066 = vmul.f32 %v2816, 0.5
      %v3067 = vmul.f32 %v2817, 0.5
      %v3068 = vmul.f32 %v2818, 0.5
      %v3069 = vmul.f32 %v2819, 0.5
      %v3070 = vmul.f32 %v2820, 0.5
      %v3071 = vmul.f32 %v2821, 0.5
      %v3072 = vmul.f32 %v2822, 0.5
      %v3073 = vmul.f32 %v2823, 0.5
      %v3074 = vmul.f32 %v2824, 0.5
      %v3075 = vmul.f32 %v2825, 0.5
      %v3076 = vmul.f32 %v2826, 0.5
      %v3077 = vmul.f32 %v2827, 0.5
      %v3078 = vmul.f32 %v2828, 0.5
      %v3079 = vmul.f32 %v2829, 0.5
      %v3080 = vmul.f32 %v2830, 0.5
      %v3081 = vmul.f32 %v2831, 0.5
      %v3082 = vmul.f32 %v2832, 0.5
      %v3083 = vmul.f32 %v2833, 0.5
      %v3084 = vmul.f32 %v2834, 0.5
      %v3085 = vmul.f32 %v2835, 0.5
      %v3086 = vmul.f32 %v2836, 0.5
      %v3087 = vmul.f32 %v2837, 0.5
      %v3088 = vmul.f32 %v2838, 0.5
      %v3089 = vmul.f32 %v2839, 0.5
      %v3090 = vmul.f32 %v2840, 0.5
      %v3091 = vmul.f32 %v2841, 0.5
      %v3092 = vmul.f32 %v2842, 0.5
      %v3093 = vmul.f32 %v2843, 0.5
      %v3094 = vmul.f32 %v2844, 0.5
      %v3095 = vmul.f32 %v2845, 0.5
      %v3096 = vmul.f32 %v2846, 0.5
      %v3097 = vmul.f32 %v2847, 0.5
      %v3098 = vmul.f32 %v2848, 0.5
      %v3099 = vmul.f32 %v2849, 0.5
      %v3100 = vmul.f32 %v2850, 0.5
      %v3101 = vmul.f32 %v2851, 0.5
      %v3102 = vmul.f32 %v2852, 0.5
      %v3103 = vmul.f32 %v2853, 0.5
      %v3104 = vmul.f32 %v2854, 0.5
      %v3105 = vmul.f32 %v2855, 0.5
      %v3106 = vmul.f32 %v2856, 0.5
      %v3107 = vmul.f32 %v2857, 0.5
      %v3108 = vmul.f32 %v2858, 0.5
      %v3109 = vmul.f32 %v2859, 0.5
      %v3110 = vmul.f32 %v2860, 0.5
      %v3111 = vmul.f32 %v2861, 0.5
      %v3112 = vmul.f32 %v2862, 0.5
      %v3113 = vmul.f32 %v2863, 0.5
      %v3114 = vmul.f32 %v2864, 0.5
      %v3115 = vmul.f32 %v2865, 0.5
      %v3116 = vmul.f32 %v2866, 0.5
      %v3117 = vmul.f32 %v2867, 0.5
      %v3118 = vmul.f32 %v2868, 0.5
      %v3119 = vmul.f32 %v2869, 0.5
      %v3120 = vmul.f32 %v2870, 0.5
      %v3121 = vmul.f32 %v2871, 0.5
      %v3122 = vmul.f32 %v2872, 0.5
      %v3123 = vmul.f32 %v2873, 0.5
      %v3124 = vmul.f32 %v2874, 0.5
      %v3125 = vmul.f32 %v2875, 0.5
      %v3126 = vmul.f32 %v2876, 0.5
      %v3127 = vmul.f32 %v2877, 0.5
      %v3128 = vmul.f32 %v2878, 0.5
      %v3129 = vmul.f32 %v2879, 0.5
      %v3130 = vmul.f32 %v2880, 0.5
      %v3131 = vmul.f32 %v2881, 0.5
      %v3132 = vmul.f32 %v2882, 0.5
      %v3133 = vmul.f32 %v2883, 0.5
      %v3134 = vmul.f32 %v2884, 0.5
      %v3135 = vmul.f32 %v2885, 0.5
      %v3136 = vmul.f32 %v2886, 0.5
      %v3137 = vmul.f32 %v2887, 0.5
      %v3138 = vmul.f32 %v2888, 0.5
      %v3139 = vmul.f32 %v2889, 0.5
      %v3140 = vmul.f32 %v2890, 0.5
      %v3141 = vmul.f32 %v2891, 0.5
      %v3142 = vmul.f32 %v2892, 0.5
      %v3143 = vmul.f32 %v2893, 0.5
      %v3144 = vmul.f32 %v2894, 0.5
      %v3145 = vmul.f32 %v2895, 0.5
      %v3146 = vmul.f32 %v2896, 0.5
      %v3147 = vmul.f32 %v2897, 0.5
      %v3148 = vmul.f32 %v2898, 0.5
      %v3149 = vmul.f32 %v2899, 0.5
      %v3150 = vmul.f32 %v2900, 0.5
      %v3151 = vmul.f32 %v2901, 0.5
      %v3152 = vmul.f32 %v2902, 0.5
      %v3153 = vmul.f32 %v2903, 0.5
      %v3154 = vmul.f32 %v2904, 0.5
      %v3155 = vmul.f32 %v2905, 0.5
      %v3156 = vmul.f32 %v2906, 0.5
      %v3157 = vmul.f32 %v2907, 0.5
      %v3158 = vmul.f32 %v2908, 0.5
      %v3159 = vmul.f32 %v2909, 0.5
      %v3160 = vmul.f32 %v2910, 0.5
      %v3161 = vmul.f32 %v2911, 0.5
      %v3162 = vmul.f32 %v2912, 0.5
      %v3163 = vmul.f32 %v2913, 0.5
      %v3164 = vmul.f32 %v2914, 0.5
      %v3165 = vmul.f32 %v2915, 0.5
      %v3166 = vmul.f32 %v2916, 0.5
      %v3167 = vmul.f32 %v2917, 0.5
      %v3168 = vmul.f32 %v2918, 0.5
      %v3169 = vmul.f32 %v2919, 0.5
      %v3170 = vmul.f32 %v2920, 0.5
      %v3171 = vmul.f32 %v2921, 0.5
      %v3172 = vmul.f32 %v2922, 0.5
      %v3173 = vmul.f32 %v2923, 0.5
      %v3174 = vmul.f32 %v2924, 0.5
      %v3175 = vmul.f32 %v2925, 0.5
      %v3176 = vmul.f32 %v2926, 0.5
      %v3177 = vmul.f32 %v2927, 0.5
      %v3178 = vmul.f32 %v2928, 0.5
      %v3179 = vmul.f32 %v2929, 0.5
      %v3180 = vmul.f32 %v2930, 0.5
      %v3181 = vmul.f32 %v2931, 0.5
      %v3182 = vmul.f32 %v2932, 0.5
      %v3183 = vmul.f32 %v2933, 0.5
      %v3184 = vmul.f32 %v2934, 0.5
      %v3185 = vmul.f32 %v2935, 0.5
      %v3186 = vmul.f32 %v2936, 0.5
      %v3187 = vmul.f32 %v2937, 0.5
      %v3188 = vmul.f32 %v2938, 0.5
      %v3189 = vmul.f32 %v2939, 0.5
      %v3190 = vmul.f32 %v2940, 0.5
      %v3191 = vmul.f32 %v2941, 0.5
      %v3192 = vmul.f32 %v2942, 0.5
      %v3193 = vmul.f32 %v2943, 0.5
      %v3194 = vmul.f32 %v2944, 0.5
      %v3195 = vmul.f32 %v2945, 0.5
      %v3196 = vmul.f32 %v2946, 0.5
      %v3197 = vmul.f32 %v2947, 0.5
      %v3198 = vmul.f32 %v2948, 0.5
      %v3199 = vmul.f32 %v2949, 0.5
      %v3200 = vmul.f32 %v2950, 0.5
      %v3201 = vmul.f32 %v2951, 0.5
      %v3202 = vmul.f32 %v2952, 0.5
      %v3203 = vmul.f32 %v2953, 0.5
      %v3204 = vmul.f32 %v2954, 0.5
      %v3205 = vmul.f32 %v2955, 0.5
      %v3206 = vmul.f32 %v2956, 0.5
      %v3207 = vmul.f32 %v2957, 0.5
      %v3208 = vmul.f32 %v2958, 0.5
      %v3209 = vmul.f32 %v2959, 0.5
      %v3210 = vmul.f32 %v2960, 0.5
      %v3211 = vmul.f32 %v2961, 0.5
      %v3212 = vmul.f32 %v2962, 0.5
      %v3213 = vmul.f32 %v2963, 0.5
      %v3214 = vmul.f32 %v2964, 0.5
      %v3215 = vmul.f32 %v2965, 0.5
      %v3216 = vmul.f32 %v2966, 0.5
      %v3217 = vmul.f32 %v2967, 0.5
      %v3218 = vmul.f32 %v2968, 0.5
      %v3219 = vmul.f32 %v2969, 0.5
      %v3220 = vmul.f32 %v2970, 0.5
      %v3221 = vmul.f32 %v2971, 0.5
      %v3222 = vmul.f32 %v2972, 0.5
      %v3223 = vmul.f32 %v2973, 0.5
      %v3224 = vmul.f32 %v2974, 0.5
      %v3225 = vmul.f32 %v2975, 0.5
      %v3226 = vmul.f32 %v2976, 0.5
      %v3227 = vmul.f32 %v2977, 0.5
      %v3228 = vmul.f32 %v2978, 0.5
      %v3229 = vmul.f32 %v2979, 0.5
      %v3230 = vmul.f32 %v2980, 0.5
      %v3231 = vmul.f32 %v2981, 0.5
      %v3232 = vmul.f32 %v2982, 0.5
      %v3233 = vmul.f32 %v2983, 0.5
      %v3234 = vmul.f32 %v2984, 0.5
      %v3235 = vmul.f32 %v2985, 0.5
      %v3236 = vmul.f32 %v2986, 0.5
      %v3237 = vmul.f32 %v2987, 0.5
      %v3238 = vmul.f32 %v2988, 0.5
      %v3239 = vmul.f32 %v2989, 0.5
      %v3240 = vmul.f32 %v2990, 0.5
      %v3241 = vmul.f32 %v2991, 0.5
      %v3242 = vmul.f32 %v2992, 0.5
      %v3243 = vmul.f32 %v2993, 0.5
      %v3244 = vmul.f32 %v2994, 0.5
      %v3245 = vmul.f32 %v2995, 0.5
      %v3246 = vmul.f32 %v2996, 0.5
      %v3247 = vmul.f32 %v2997, 0.5
      %v3248 = vmul.f32 %v2998, 0.5
      %v3249 = vmul.f32 %v2999, 0.5
      %v3250 = vmul.f32 %v3000, 0.5
      %v3251 = vmul.f32 %v3001, 0.5
      %v3252 = vmul.f32 %v3002, 0.5
      %v3253 = vmul.f32 %v3003, 0.5
      %v3254 = vmul.f32 %v3004, 0.5
      %v3255 = vmul.f32 %v3005, 0.5
      %v3256 = vmul.f32 %v3006, 0.5
      %v3257 = vmul.f32 %v3007, 0.5
      %v3258 = vmul.f32 %v3008, 0.5
      %v3259 = vmul.f32 %v3009, 0.5
      %v3260 = vmul.f32 %v3010, 0.5
      %v3261 = vmul.f32 %v3011, 0.5
      %v3262 = vmul.f32 %v3012, 0.5
      %v3263 = vmul.f32 %v3013, 0.5
      %v3264 = vmul.f32 %v3014, 0.5
      %v3265 = vmul.f32 %v3015, 0.5
      %v3266 = vmul.f32 %v3016, 0.5
      %v3267 = vmul.f32 %v3017, 0.5
      %v3268 = vmul.f32 %v3018, 0.5
      %v3269 = vmul.f32 %v3019, 0.5
      %v3270 = vmul.f32 %v3020, 0.5
      %v3271 = vmul.f32 %v3021, 0.5
      %v3272 = vmul.f32 %v3022, 0.5
      %v3273 = vmul.f32 %v3023, 0.5
      %v3274 = vmul.f32 %v3024, 0.5
      %v3275 = vmul.f32 %v3025, 0.5
      %v3276 = vmul.f32 %v3026, 0.5
      %v3277 = vmul.f32 %v3027, 0.5
      %v3278 = vmul.f32 %v3028, 0.5
      %v3279 = vmul.f32 %v3029, 0.5
      %v3280 = vmul.f32 %v3030, 0.5
      %v3281 = vmul.f32 %v3031, 0.5
      %v3282 = vmul.f32 %v3032, 0.5
      %v3283 = vmul.f32 %v3033, 0.5
      %v3284 = vmul.f32 %v3034, 0.5
      %v3285 = vmul.f32 %v3035, 0.5
      %v3286 = vmul.f32 %v3036, 0.5
      %v3287 = vmul.f32 %v3037, 0.5
      %v3288 = vmul.f32 %v3038, 0.5
      %v3289 = vmul.f32 %v3039, 0.5
      %v3290 = vmul.f32 %v3040, 0.5
      %v3291 = vmul.f32 %v3041, 0.5
      %v3292 = vmul.f32 %v3042, 0.5
      %v3293 = vmul.f32 %v3043, 0.5
      %v3294 = vmul.f32 %v3044, 0.5
      %v3295 = vmul.f32 %v3045, 0.5
      %v3296 = vmul.f32 %v3046, 0.5
      %v3297 = vmul.f32 %v3047, 0.5
      %v3298 = vmul.f32 %v3048, 0.5
      %v3299 = vmul.f32 %v3049, 0.5
      %v3300 = vmul.f32 %v3050, 0.5
      %v3301 = vmul.f32 %v3051, 0.5
      %v3302 = vmul.f32 %v3052, 0.5
      %v3303 = vmul.f32 %v3053, 0.5
      %v3304 = vmul.f32 %v3054, 0.5
      %v3305 = vmul.f32 %v3055, 0.5
      %v3306 = vadd.f32 %v3056, 0.5
      %v3307 = vadd.f32 %v3057, 0.5
      %v3308 = vadd.f32 %v3058, 0.5
      %v3309 = vadd.f32 %v3059, 0.5
      %v3310 = vadd.f32 %v3060, 0.5
      %v3311 = vadd.f32 %v3061, 0.5
      %v3312 = vadd.f32 %v3062, 0.5
      %v3313 = vadd.f32 %v3063, 0.5
      %v3314 = vadd.f32 %v3064, 0.5
      %v3315 = vadd.f32 %v3065, 0.5
      %v3316 = vadd.f32 %v3066, 0.5
      %v3317 = vadd.f32 %v3067, 0.5
      %v3318 = vadd.f32 %v3068, 0.5
      %v3319 = vadd.f32 %v3069, 0.5
      %v3320 = vadd.f32 %v3070, 0.5
      %v3321 = vadd.f32 %v3071, 0.5
      %v3322 = vadd.f32 %v3072, 0.5
      %v3323 = vadd.f32 %v3073, 0.5
      %v3324 = vadd.f32 %v3074, 0.5
      %v3325 = vadd.f32 %v3075, 0.5
      %v3326 = vadd.f32 %v3076, 0.5
      %v3327 = vadd.f32 %v3077, 0.5
      %v3328 = vadd.f32 %v3078, 0.5
      %v3329 = vadd.f32 %v3079, 0.5
      %v3330 = vadd.f32 %v3080, 0.5
      %v3331 = vadd.f32 %v3081, 0.5
      %v3332 = vadd.f32 %v3082, 0.5
      %v3333 = vadd.f32 %v3083, 0.5
      %v3334 = vadd.f32 %v3084, 0.5
      %v3335 = vadd.f32 %v3085, 0.5
      %v3336 = vadd.f32 %v3086, 0.5
      %v3337 = vadd.f32 %v3087, 0.5
      %v3338 = vadd.f32 %v3088, 0.5
      %v3339 = vadd.f32 %v3089, 0.5
      %v3340 = vadd.f32 %v3090, 0.5
      %v3341 = vadd.f32 %v3091, 0.5
      %v3342 = vadd.f32 %v3092, 0.5
      %v3343 = vadd.f32 %v3093, 0.5
      %v3344 = vadd.f32 %v3094, 0.5
      %v3345 = vadd.f32 %v3095, 0.5
      %v3346 = vadd.f32 %v3096, 0.5
      %v3347 = vadd.f32 %v3097, 0.5
      %v3348 = vadd.f32 %v3098, 0.5
      %v3349 = vadd.f32 %v3099, 0.5
      %v3350 = vadd.f32 %v3100, 0.5
      %v3351 = vadd.f32 %v3101, 0.5
      %v3352 = vadd.f32 %v3102, 0.5
      %v3353 = vadd.f32 %v3103, 0.5
      %v3354 = vadd.f32 %v3104, 0.5
      %v3355 = vadd.f32 %v3105, 0.5
      %v3356 = vadd.f32 %v3106, 0.5
      %v3357 = vadd.f32 %v3107, 0.5
      %v3358 = vadd.f32 %v3108, 0.5
      %v3359 = vadd.f32 %v3109, 0.5
      %v3360 = vadd.f32 %v3110, 0.5
      %v3361 = vadd.f32 %v3111, 0.5
      %v3362 = vadd.f32 %v3112, 0.5
      %v3363 = vadd.f32 %v3113, 0.5
      %v3364 = vadd.f32 %v3114, 0.5
      %v3365 = vadd.f32 %v3115, 0.5
      %v3366 = vadd.f32 %v3116, 0.5
      %v3367 = vadd.f32 %v3117, 0.5
      %v3368 = vadd.f32 %v3118, 0.5
      %v3369 = vadd.f32 %v3119, 0.5
      %v3370 = vadd.f32 %v3120, 0.5
      %v3371 = vadd.f32 %v3121, 0.5
      %v3372 = vadd.f32 %v3122, 0.5
      %v3373 = vadd.f32 %v3123, 0.5
      %v3374 = vadd.f32 %v3124, 0.5
      %v3375 = vadd.f32 %v3125, 0.5
      %v3376 = vadd.f32 %v3126, 0.5
      %v3377 = vadd.f32 %v3127, 0.5
      %v3378 = vadd.f32 %v3128, 0.5
      %v3379 = vadd.f32 %v3129, 0.5
      %v3380 = vadd.f32 %v3130, 0.5
      %v3381 = vadd.f32 %v3131, 0.5
      %v3382 = vadd.f32 %v3132, 0.5
      %v3383 = vadd.f32 %v3133, 0.5
      %v3384 = vadd.f32 %v3134, 0.5
      %v3385 = vadd.f32 %v3135, 0.5
      %v3386 = vadd.f32 %v3136, 0.5
      %v3387 = vadd.f32 %v3137, 0.5
      %v3388 = vadd.f32 %v3138, 0.5
      %v3389 = vadd.f32 %v3139, 0.5
      %v3390 = vadd.f32 %v3140, 0.5
      %v3391 = vadd.f32 %v3141, 0.5
      %v3392 = vadd.f32 %v3142, 0.5
      %v3393 = vadd.f32 %v3143, 0.5
      %v3394 = vadd.f32 %v3144, 0.5
      %v3395 = vadd.f32 %v3145, 0.5
      %v3396 = vadd.f32 %v3146, 0.5
      %v3397 = vadd.f32 %v3147, 0.5
      %v3398 = vadd.f32 %v3148, 0.5
      %v3399 = vadd.f32 %v3149, 0.5
      %v3400 = vadd.f32 %v3150, 0.5
      %v3401 = vadd.f32 %v3151, 0.5
      %v3402 = vadd.f32 %v3152, 0.5
      %v3403 = vadd.f32 %v3153, 0.5
      %v3404 = vadd.f32 %v3154, 0.5
      %v3405 = vadd.f32 %v3155, 0.5
      %v3406 = vadd.f32 %v3156, 0.5
      %v3407 = vadd.f32 %v3157, 0.5
      %v3408 = vadd.f32 %v3158, 0.5
      %v3409 = vadd.f32 %v3159, 0.5
      %v3410 = vadd.f32 %v3160, 0.5
      %v3411 = vadd.f32 %v3161, 0.5
      %v3412 = vadd.f32 %v3162, 0.5
      %v3413 = vadd.f32 %v3163, 0.5
      %v3414 = vadd.f32 %v3164, 0.5
      %v3415 = vadd.f32 %v3165, 0.5
      %v3416 = vadd.f32 %v3166, 0.5
      %v3417 = vadd.f32 %v3167, 0.5
      %v3418 = vadd.f32 %v3168, 0.5
      %v3419 = vadd.f32 %v3169, 0.5
      %v3420 = vadd.f32 %v3170, 0.5
      %v3421 = vadd.f32 %v3171, 0.5
      %v3422 = vadd.f32 %v3172, 0.5
      %v3423 = vadd.f32 %v3173, 0.5
      %v3424 = vadd.f32 %v3174, 0.5
      %v3425 = vadd.f32 %v3175, 0.5
      %v3426 = vadd.f32 %v3176, 0.5
      %v3427 = vadd.f32 %v3177, 0.5
      %v3428 = vadd.f32 %v3178, 0.5
      %v3429 = vadd.f32 %v3179, 0.5
      %v3430 = vadd.f32 %v3180, 0.5
      %v3431 = vadd.f32 %v3181, 0.5
      %v3432 = vadd.f32 %v3182, 0.5
      %v3433 = vadd.f32 %v3183, 0.5
      %v3434 = vadd.f32 %v3184, 0.5
      %v3435 = vadd.f32 %v3185, 0.5
      %v3436 = vadd.f32 %v3186, 0.5
      %v3437 = vadd.f32 %v3187, 0.5
      %v3438 = vadd.f32 %v3188, 0.5
      %v3439 = vadd.f32 %v3189, 0.5
      %v3440 = vadd.f32 %v3190, 0.5
      %v3441 = vadd.f32 %v3191, 0.5
      %v3442 = vadd.f32 %v3192, 0.5
      %v3443 = vadd.f32 %v3193, 0.5
      %v3444 = vadd.f32 %v3194, 0.5
      %v3445 = vadd.f32 %v3195, 0.5
      %v3446 = vadd.f32 %v3196, 0.5
      %v3447 = vadd.f32 %v3197, 0.5
      %v3448 = vadd.f32 %v3198, 0.5
      %v3449 = vadd.f32 %v3199, 0.5
      %v3450 = vadd.f32 %v3200, 0.5
      %v3451 = vadd.f32 %v3201, 0.5
      %v3452 = vadd.f32 %v3202, 0.5
      %v3453 = vadd.f32 %v3203, 0.5
      %v3454 = vadd.f32 %v3204, 0.5
      %v3455 = vadd.f32 %v3205, 0.5
      %v3456 = vadd.f32 %v3206, 0.5
      %v3457 = vadd.f32 %v3207, 0.5
      %v3458 = vadd.f32 %v3208, 0.5
      %v3459 = vadd.f32 %v3209, 0.5
      %v3460 = vadd.f32 %v3210, 0.5
      %v3461 = vadd.f32 %v3211, 0.5
      %v3462 = vadd.f32 %v3212, 0.5
      %v3463 = vadd.f32 %v3213, 0.5
      %v3464 = vadd.f32 %v3214, 0.5
      %v3465 = vadd.f32 %v3215, 0.5
      %v3466 = vadd.f32 %v3216, 0.5
      %v3467 = vadd.f32 %v3217, 0.5
      %v3468 = vadd.f32 %v3218, 0.5
      %v3469 = vadd.f32 %v3219, 0.5
      %v3470 = vadd.f32 %v3220, 0.5
      %v3471 = vadd.f32 %v3221, 0.5
      %v3472 = vadd.f32 %v3222, 0.5
      %v3473 = vadd.f32 %v3223, 0.5
      %v3474 = vadd.f32 %v3224, 0.5
      %v3475 = vadd.f32 %v3225, 0.5
      %v3476 = vadd.f32 %v3226, 0.5
      %v3477 = vadd.f32 %v3227, 0.5
      %v3478 = vadd.f32 %v3228, 0.5
      %v3479 = vadd.f32 %v3229, 0.5
      %v3480 = vadd.f32 %v3230, 0.5
      %v3481 = vadd.f32 %v3231, 0.5
      %v3482 = vadd.f32 %v3232, 0.5
      %v3483 = vadd.f32 %v3233, 0.5
      %v3484 = vadd.f32 %v3234, 0.5
      %v3485 = vadd.f32 %v3235, 0.5
      %v3486 = vadd.f32 %v3236, 0.5
      %v3487 = vadd.f32 %v3237, 0.5
      %v3488 = vadd.f32 %v3238, 0.5
      %v3489 = vadd.f32 %v3239, 0.5
      %v3490 = vadd.f32 %v3240, 0.5
      %v3491 = vadd.f32 %v3241, 0.5
      %v3492 = vadd.f32 %v3242, 0.5
      %v3493 = vadd.f32 %v3243, 0.5
      %v3494 = vadd.f32 %v3244, 0.5
      %v3495 = vadd.f32 %v3245, 0.5
      %v3496 = vadd.f32 %v3246, 0.5
      %v3497 = vadd.f32 %v3247, 0.5
      %v3498 = vadd.f32 %v3248, 0.5
      %v3499 = vadd.f32 %v3249, 0.5
      %v3500 = vadd.f32 %v3250, 0.5
      %v3501 = vadd.f32 %v3251, 0.5
      %v3502 = vadd.f32 %v3252, 0.5
      %v3503 = vadd.f32 %v3253, 0.5
      %v3504 = vadd.f32 %v3254, 0.5
      %v3505 = vadd.f32 %v3255, 0.5
      %v3506 = vadd.f32 %v3256, 0.5
      %v3507 = vadd.f32 %v3257, 0.5
      %v3508 = vadd.f32 %v3258, 0.5
      %v3509 = vadd.f32 %v3259, 0.5
      %v3510 = vadd.f32 %v3260, 0.5
      %v3511 = vadd.f32 %v3261, 0.5
      %v3512 = vadd.f32 %v3262, 0.5
      %v3513 = vadd.f32 %v3263, 0.5
      %v3514 = vadd.f32 %v3264, 0.5
      %v3515 = vadd.f32 %v3265, 0.5
      %v3516 = vadd.f32 %v3266, 0.5
      %v3517 = vadd.f32 %v3267, 0.5
      %v3518 = vadd.f32 %v3268, 0.5
      %v3519 = vadd.f32 %v3269, 0.5
      %v3520 = vadd.f32 %v3270, 0.5
      %v3521 = vadd.f32 %v3271, 0.5
      %v3522 = vadd.f32 %v3272, 0.5
      %v3523 = vadd.f32 %v3273, 0.5
      %v3524 = vadd.f32 %v3274, 0.5
      %v3525 = vadd.f32 %v3275, 0.5
      %v3526 = vadd.f32 %v3276, 0.5
      %v3527 = vadd.f32 %v3277, 0.5
      %v3528 = vadd.f32 %v3278, 0.5
      %v3529 = vadd.f32 %v3279, 0.5
      %v3530 = vadd.f32 %v3280, 0.5
      %v3531 = vadd.f32 %v3281, 0.5
      %v3532 = vadd.f32 %v3282, 0.5
      %v3533 = vadd.f32 %v3283, 0.5
      %v3534 = vadd.f32 %v3284, 0.5
      %v3535 = vadd.f32 %v3285, 0.5
      %v3536 = vadd.f32 %v3286, 0.5
      %v3537 = vadd.f32 %v3287, 0.5
      %v3538 = vadd.f32 %v3288, 0.5
      %v3539 = vadd.f32 %v3289, 0.5
      %v3540 = vadd.f32 %v3290, 0.5
      %v3541 = vadd.f32 %v3291, 0.5
      %v3542 = vadd.f32 %v3292, 0.5
      %v3543 = vadd.f32 %v3293, 0.5
      %v3544 = vadd.f32 %v3294, 0.5
      %v3545 = vadd.f32 %v3295, 0.5
      %v3546 = vadd.f32 %v3296, 0.5
      %v3547 = vadd.f32 %v3297, 0.5
      %v3548 = vadd.f32 %v3298, 0.5
      %v3549 = vadd.f32 %v3299, 0.5
      %v3550 = vadd.f32 %v3300, 0.5
      %v3551 = vadd.f32 %v3301, 0.5
      %v3552 = vadd.f32 %v3302, 0.5
      %v3553 = vadd.f32 %v3303, 0.5
      %v3554 = vadd.f32 %v3304, 0.5
      %v3555 = vadd.f32 %v3305, 0.5
      %3556 = vst [vmem:[%s259] sm:$0xff] %v3306
      %3557 = vst [vmem:[%s259 + $0x8] sm:$0xff] %v3307
      %3558 = vst [vmem:[%s259 + $0x10] sm:$0xff] %v3308
      %3559 = vst [vmem:[%s259 + $0x18] sm:$0xff] %v3309
      %3560 = vst [vmem:[%s259 + $0x20] sm:$0xff] %v3310
      %3561 = vst [vmem:[%s259 + $0x28] sm:$0xff] %v3311
      %3562 = vst [vmem:[%s259 + $0x30] sm:$0xff] %v3312
      %3563 = vst [vmem:[%s259 + $0x38] sm:$0xff] %v3313
      %3564 = vst [vmem:[%s259 + $0x40] sm:$0xff] %v3314
      %3565 = vst [vmem:[%s259 + $0x48] sm:$0xff] %v3315
      %3566 = vst [vmem:[%s259 + $0x50] sm:$0xff] %v3316
      %3567 = vst [vmem:[%s259 + $0x58] sm:$0xff] %v3317
      %3568 = vst [vmem:[%s259 + $0x60] sm:$0xff] %v3318
      %3569 = vst [vmem:[%s259 + $0x68] sm:$0xff] %v3319
      %3570 = vst [vmem:[%s259 + $0x70] sm:$0xff] %v3320
      %3571 = vst [vmem:[%s259 + $0x78] sm:$0xff] %v3321
      %3572 = vst [vmem:[%s259 + $0x80] sm:$0xff] %v3322
      %3573 = vst [vmem:[%s259 + $0x88] sm:$0xff] %v3323
      %3574 = vst [vmem:[%s259 + $0x90] sm:$0xff] %v3324
      %3575 = vst [vmem:[%s259 + $0x98] sm:$0xff] %v3325
      %3576 = vst [vmem:[%s259 + $0xa0] sm:$0xff] %v3326
      %3577 = vst [vmem:[%s259 + $0xa8] sm:$0xff] %v3327
      %3578 = vst [vmem:[%s259 + $0xb0] sm:$0xff] %v3328
      %3579 = vst [vmem:[%s259 + $0xb8] sm:$0xff] %v3329
      %3580 = vst [vmem:[%s259 + $0xc0] sm:$0xff] %v3330
      %3581 = vst [vmem:[%s259 + $0xc8] sm:$0xff] %v3331
      %3582 = vst [vmem:[%s259 + $0xd0] sm:$0xff] %v3332
      %3583 = vst [vmem:[%s259 + $0xd8] sm:$0xff] %v3333
      %3584 = vst [vmem:[%s259 + $0xe0] sm:$0xff] %v3334
      %3585 = vst [vmem:[%s259 + $0xe8] sm:$0xff] %v3335
      %3586 = vst [vmem:[%s259 + $0xf0] sm:$0xff] %v3336
      %3587 = vst [vmem:[%s259 + $0xf8] sm:$0xff] %v3337
      %3588 = vst [vmem:[%s259 + $0x100] sm:$0xff] %v3338
      %3589 = vst [vmem:[%s259 + $0x108] sm:$0xff] %v3339
      %3590 = vst [vmem:[%s259 + $0x110] sm:$0xff] %v3340
      %3591 = vst [vmem:[%s259 + $0x118] sm:$0xff] %v3341
      %3592 = vst [vmem:[%s259 + $0x120] sm:$0xff] %v3342
      %3593 = vst [vmem:[%s259 + $0x128] sm:$0xff] %v3343
      %3594 = vst [vmem:[%s259 + $0x130] sm:$0xff] %v3344
      %3595 = vst [vmem:[%s259 + $0x138] sm:$0xff] %v3345
      %3596 = vst [vmem:[%s259 + $0x140] sm:$0xff] %v3346
      %3597 = vst [vmem:[%s259 + $0x148] sm:$0xff] %v3347
      %3598 = vst [vmem:[%s259 + $0x150] sm:$0xff] %v3348
      %3599 = vst [vmem:[%s259 + $0x158] sm:$0xff] %v3349
      %3600 = vst [vmem:[%s259 + $0x160] sm:$0xff] %v3350
      %3601 = vst [vmem:[%s259 + $0x168] sm:$0xff] %v3351
      %3602 = vst [vmem:[%s259 + $0x170] sm:$0xff] %v3352
      %3603 = vst [vmem:[%s259 + $0x178] sm:$0xff] %v3353
      %3604 = vst [vmem:[%s259 + $0x180] sm:$0xff] %v3354
      %3605 = vst [vmem:[%s259 + $0x188] sm:$0xff] %v3355
      %3606 = vst [vmem:[%s259 + $0x190] sm:$0xff] %v3356
      %3607 = vst [vmem:[%s259 + $0x198] sm:$0xff] %v3357
      %3608 = vst [vmem:[%s259 + $0x1a0] sm:$0xff] %v3358
      %3609 = vst [vmem:[%s259 + $0x1a8] sm:$0xff] %v3359
      %3610 = vst [vmem:[%s259 + $0x1b0] sm:$0xff] %v3360
      %3611 = vst [vmem:[%s259 + $0x1b8] sm:$0xff] %v3361
      %3612 = vst [vmem:[%s259 + $0x1c0] sm:$0xff] %v3362
      %3613 = vst [vmem:[%s259 + $0x1c8] sm:$0xff] %v3363
      %3614 = vst [vmem:[%s259 + $0x1d0] sm:$0xff] %v3364
      %3615 = vst [vmem:[%s259 + $0x1d8] sm:$0xff] %v3365
      %3616 = vst [vmem:[%s259 + $0x1e0] sm:$0xff] %v3366
      %3617 = vst [vmem:[%s259 + $0x1e8] sm:$0xff] %v3367
      %3618 = vst [vmem:[%s259 + $0x1f0] sm:$0xff] %v3368
      %3619 = vst [vmem:[%s259 + $0x1f8] sm:$0xff] %v3369
      %3620 = vst [vmem:[%s259 + $0x200] sm:$0xff] %v3370
      %3621 = vst [vmem:[%s259 + $0x208] sm:$0xff] %v3371
      %3622 = vst [vmem:[%s259 + $0x210] sm:$0xff] %v3372
      %3623 = vst [vmem:[%s259 + $0x218] sm:$0xff] %v3373
      %3624 = vst [vmem:[%s259 + $0x220] sm:$0xff] %v3374
      %3625 = vst [vmem:[%s259 + $0x228] sm:$0xff] %v3375
      %3626 = vst [vmem:[%s259 + $0x230] sm:$0xff] %v3376
      %3627 = vst [vmem:[%s259 + $0x238] sm:$0xff] %v3377
      %3628 = vst [vmem:[%s259 + $0x240] sm:$0xff] %v3378
      %3629 = vst [vmem:[%s259 + $0x248] sm:$0xff] %v3379
      %3630 = vst [vmem:[%s259 + $0x250] sm:$0xff] %v3380
      %3631 = vst [vmem:[%s259 + $0x258] sm:$0xff] %v3381
      %3632 = vst [vmem:[%s259 + $0x260] sm:$0xff] %v3382
      %3633 = vst [vmem:[%s259 + $0x268] sm:$0xff] %v3383
      %3634 = vst [vmem:[%s259 + $0x270] sm:$0xff] %v3384
      %3635 = vst [vmem:[%s259 + $0x278] sm:$0xff] %v3385
      %3636 = vst [vmem:[%s259 + $0x280] sm:$0xff] %v3386
      %3637 = vst [vmem:[%s259 + $0x288] sm:$0xff] %v3387
      %3638 = vst [vmem:[%s259 + $0x290] sm:$0xff] %v3388
      %3639 = vst [vmem:[%s259 + $0x298] sm:$0xff] %v3389
      %3640 = vst [vmem:[%s259 + $0x2a0] sm:$0xff] %v3390
      %3641 = vst [vmem:[%s259 + $0x2a8] sm:$0xff] %v3391
      %3642 = vst [vmem:[%s259 + $0x2b0] sm:$0xff] %v3392
      %3643 = vst [vmem:[%s259 + $0x2b8] sm:$0xff] %v3393
      %3644 = vst [vmem:[%s259 + $0x2c0] sm:$0xff] %v3394
      %3645 = vst [vmem:[%s259 + $0x2c8] sm:$0xff] %v3395
      %3646 = vst [vmem:[%s259 + $0x2d0] sm:$0xff] %v3396
      %3647 = vst [vmem:[%s259 + $0x2d8] sm:$0xff] %v3397
      %3648 = vst [vmem:[%s259 + $0x2e0] sm:$0xff] %v3398
      %3649 = vst [vmem:[%s259 + $0x2e8] sm:$0xff] %v3399
      %3650 = vst [vmem:[%s259 + $0x2f0] sm:$0xff] %v3400
      %3651 = vst [vmem:[%s259 + $0x2f8] sm:$0xff] %v3401
      %3652 = vst [vmem:[%s259 + $0x300] sm:$0xff] %v3402
      %3653 = vst [vmem:[%s259 + $0x308] sm:$0xff] %v3403
      %3654 = vst [vmem:[%s259 + $0x310] sm:$0xff] %v3404
      %3655 = vst [vmem:[%s259 + $0x318] sm:$0xff] %v3405
      %3656 = vst [vmem:[%s259 + $0x320] sm:$0xff] %v3406
      %3657 = vst [vmem:[%s259 + $0x328] sm:$0xff] %v3407
      %3658 = vst [vmem:[%s259 + $0x330] sm:$0xff] %v3408
      %3659 = vst [vmem:[%s259 + $0x338] sm:$0xff] %v3409
      %3660 = vst [vmem:[%s259 + $0x340] sm:$0xff] %v3410
      %3661 = vst [vmem:[%s259 + $0x348] sm:$0xff] %v3411
      %3662 = vst [vmem:[%s259 + $0x350] sm:$0xff] %v3412
      %3663 = vst [vmem:[%s259 + $0x358] sm:$0xff] %v3413
      %3664 = vst [vmem:[%s259 + $0x360] sm:$0xff] %v3414
      %3665 = vst [vmem:[%s259 + $0x368] sm:$0xff] %v3415
      %3666 = vst [vmem:[%s259 + $0x370] sm:$0xff] %v3416
      %3667 = vst [vmem:[%s259 + $0x378] sm:$0xff] %v3417
      %3668 = vst [vmem:[%s259 + $0x380] sm:$0xff] %v3418
      %3669 = vst [vmem:[%s259 + $0x388] sm:$0xff] %v3419
      %3670 = vst [vmem:[%s259 + $0x390] sm:$0xff] %v3420
      %3671 = vst [vmem:[%s259 + $0x398] sm:$0xff] %v3421
      %3672 = vst [vmem:[%s259 + $0x3a0] sm:$0xff] %v3422
      %3673 = vst [vmem:[%s259 + $0x3a8] sm:$0xff] %v3423
      %3674 = vst [vmem:[%s259 + $0x3b0] sm:$0xff] %v3424
      %3675 = vst [vmem:[%s259 + $0x3b8] sm:$0xff] %v3425
      %3676 = vst [vmem:[%s259 + $0x3c0] sm:$0xff] %v3426
      %3677 = vst [vmem:[%s259 + $0x3c8] sm:$0xff] %v3427
      %3678 = vst [vmem:[%s259 + $0x3d0] sm:$0xff] %v3428
      %3679 = vst [vmem:[%s259 + $0x3d8] sm:$0xff] %v3429
      %3680 = vst [vmem:[%s259 + $0x3e0] sm:$0xff] %v3430
      %3681 = vst [vmem:[%s259 + $0x3e8] sm:$0xff] %v3431
      %3682 = vst [vmem:[%s259 + $0x3f0] sm:$0xff] %v3432
      %3683 = vst [vmem:[%s259 + $0x3f8] sm:$0xff] %v3433
      %3684 = vst [vmem:[%s259 + $0x400] sm:$0xff] %v3434
      %3685 = vst [vmem:[%s259 + $0x408] sm:$0xff] %v3435
      %3686 = vst [vmem:[%s259 + $0x410] sm:$0xff] %v3436
      %3687 = vst [vmem:[%s259 + $0x418] sm:$0xff] %v3437
      %3688 = vst [vmem:[%s259 + $0x420] sm:$0xff] %v3438
      %3689 = vst [vmem:[%s259 + $0x428] sm:$0xff] %v3439
      %3690 = vst [vmem:[%s259 + $0x430] sm:$0xff] %v3440
      %3691 = vst [vmem:[%s259 + $0x438] sm:$0xff] %v3441
      %3692 = vst [vmem:[%s259 + $0x440] sm:$0xff] %v3442
      %3693 = vst [vmem:[%s259 + $0x448] sm:$0xff] %v3443
      %3694 = vst [vmem:[%s259 + $0x450] sm:$0xff] %v3444
      %3695 = vst [vmem:[%s259 + $0x458] sm:$0xff] %v3445
      %3696 = vst [vmem:[%s259 + $0x460] sm:$0xff] %v3446
      %3697 = vst [vmem:[%s259 + $0x468] sm:$0xff] %v3447
      %3698 = vst [vmem:[%s259 + $0x470] sm:$0xff] %v3448
      %3699 = vst [vmem:[%s259 + $0x478] sm:$0xff] %v3449
      %3700 = vst [vmem:[%s259 + $0x480] sm:$0xff] %v3450
      %3701 = vst [vmem:[%s259 + $0x488] sm:$0xff] %v3451
      %3702 = vst [vmem:[%s259 + $0x490] sm:$0xff] %v3452
      %3703 = vst [vmem:[%s259 + $0x498] sm:$0xff] %v3453
      %3704 = vst [vmem:[%s259 + $0x4a0] sm:$0xff] %v3454
      %3705 = vst [vmem:[%s259 + $0x4a8] sm:$0xff] %v3455
      %3706 = vst [vmem:[%s259 + $0x4b0] sm:$0xff] %v3456
      %3707 = vst [vmem:[%s259 + $0x4b8] sm:$0xff] %v3457
      %3708 = vst [vmem:[%s259 + $0x4c0] sm:$0xff] %v3458
      %3709 = vst [vmem:[%s259 + $0x4c8] sm:$0xff] %v3459
      %3710 = vst [vmem:[%s259 + $0x4d0] sm:$0xff] %v3460
      %3711 = vst [vmem:[%s259 + $0x4d8] sm:$0xff] %v3461
      %3712 = vst [vmem:[%s259 + $0x4e0] sm:$0xff] %v3462
      %3713 = vst [vmem:[%s259 + $0x4e8] sm:$0xff] %v3463
      %3714 = vst [vmem:[%s259 + $0x4f0] sm:$0xff] %v3464
      %3715 = vst [vmem:[%s259 + $0x4f8] sm:$0xff] %v3465
      %3716 = vst [vmem:[%s259 + $0x500] sm:$0xff] %v3466
      %3717 = vst [vmem:[%s259 + $0x508] sm:$0xff] %v3467
      %3718 = vst [vmem:[%s259 + $0x510] sm:$0xff] %v3468
      %3719 = vst [vmem:[%s259 + $0x518] sm:$0xff] %v3469
      %3720 = vst [vmem:[%s259 + $0x520] sm:$0xff] %v3470
      %3721 = vst [vmem:[%s259 + $0x528] sm:$0xff] %v3471
      %3722 = vst [vmem:[%s259 + $0x530] sm:$0xff] %v3472
      %3723 = vst [vmem:[%s259 + $0x538] sm:$0xff] %v3473
      %3724 = vst [vmem:[%s259 + $0x540] sm:$0xff] %v3474
      %3725 = vst [vmem:[%s259 + $0x548] sm:$0xff] %v3475
      %3726 = vst [vmem:[%s259 + $0x550] sm:$0xff] %v3476
      %3727 = vst [vmem:[%s259 + $0x558] sm:$0xff] %v3477
      %3728 = vst [vmem:[%s259 + $0x560] sm:$0xff] %v3478
      %3729 = vst [vmem:[%s259 + $0x568] sm:$0xff] %v3479
      %3730 = vst [vmem:[%s259 + $0x570] sm:$0xff] %v3480
      %3731 = vst [vmem:[%s259 + $0x578] sm:$0xff] %v3481
      %3732 = vst [vmem:[%s259 + $0x580] sm:$0xff] %v3482
      %3733 = vst [vmem:[%s259 + $0x588] sm:$0xff] %v3483
      %3734 = vst [vmem:[%s259 + $0x590] sm:$0xff] %v3484
      %3735 = vst [vmem:[%s259 + $0x598] sm:$0xff] %v3485
      %3736 = vst [vmem:[%s259 + $0x5a0] sm:$0xff] %v3486
      %3737 = vst [vmem:[%s259 + $0x5a8] sm:$0xff] %v3487
      %3738 = vst [vmem:[%s259 + $0x5b0] sm:$0xff] %v3488
      %3739 = vst [vmem:[%s259 + $0x5b8] sm:$0xff] %v3489
      %3740 = vst [vmem:[%s259 + $0x5c0] sm:$0xff] %v3490
      %3741 = vst [vmem:[%s259 + $0x5c8] sm:$0xff] %v3491
      %3742 = vst [vmem:[%s259 + $0x5d0] sm:$0xff] %v3492
      %3743 = vst [vmem:[%s259 + $0x5d8] sm:$0xff] %v3493
      %3744 = vst [vmem:[%s259 + $0x5e0] sm:$0xff] %v3494
      %3745 = vst [vmem:[%s259 + $0x5e8] sm:$0xff] %v3495
      %3746 = vst [vmem:[%s259 + $0x5f0] sm:$0xff] %v3496
      %3747 = vst [vmem:[%s259 + $0x5f8] sm:$0xff] %v3497
      %3748 = vst [vmem:[%s259 + $0x600] sm:$0xff] %v3498
      %3749 = vst [vmem:[%s259 + $0x608] sm:$0xff] %v3499
      %3750 = vst [vmem:[%s259 + $0x610] sm:$0xff] %v3500
      %3751 = vst [vmem:[%s259 + $0x618] sm:$0xff] %v3501
      %3752 = vst [vmem:[%s259 + $0x620] sm:$0xff] %v3502
      %3753 = vst [vmem:[%s259 + $0x628] sm:$0xff] %v3503
      %3754 = vst [vmem:[%s259 + $0x630] sm:$0xff] %v3504
      %3755 = vst [vmem:[%s259 + $0x638] sm:$0xff] %v3505
      %3756 = vst [vmem:[%s259 + $0x640] sm:$0xff] %v3506
      %3757 = vst [vmem:[%s259 + $0x648] sm:$0xff] %v3507
      %3758 = vst [vmem:[%s259 + $0x650] sm:$0xff] %v3508
      %3759 = vst [vmem:[%s259 + $0x658] sm:$0xff] %v3509
      %3760 = vst [vmem:[%s259 + $0x660] sm:$0xff] %v3510
      %3761 = vst [vmem:[%s259 + $0x668] sm:$0xff] %v3511
      %3762 = vst [vmem:[%s259 + $0x670] sm:$0xff] %v3512
      %3763 = vst [vmem:[%s259 + $0x678] sm:$0xff] %v3513
      %3764 = vst [vmem:[%s259 + $0x680] sm:$0xff] %v3514
      %3765 = vst [vmem:[%s259 + $0x688] sm:$0xff] %v3515
      %3766 = vst [vmem:[%s259 + $0x690] sm:$0xff] %v3516
      %3767 = vst [vmem:[%s259 + $0x698] sm:$0xff] %v3517
      %3768 = vst [vmem:[%s259 + $0x6a0] sm:$0xff] %v3518
      %3769 = vst [vmem:[%s259 + $0x6a8] sm:$0xff] %v3519
      %3770 = vst [vmem:[%s259 + $0x6b0] sm:$0xff] %v3520
      %3771 = vst [vmem:[%s259 + $0x6b8] sm:$0xff] %v3521
      %3772 = vst [vmem:[%s259 + $0x6c0] sm:$0xff] %v3522
      %3773 = vst [vmem:[%s259 + $0x6c8] sm:$0xff] %v3523
      %3774 = vst [vmem:[%s259 + $0x6d0] sm:$0xff] %v3524
      %3775 = vst [vmem:[%s259 + $0x6d8] sm:$0xff] %v3525
      %3776 = vst [vmem:[%s259 + $0x6e0] sm:$0xff] %v3526
      %3777 = vst [vmem:[%s259 + $0x6e8] sm:$0xff] %v3527
      %3778 = vst [vmem:[%s259 + $0x6f0] sm:$0xff] %v3528
      %3779 = vst [vmem:[%s259 + $0x6f8] sm:$0xff] %v3529
      %3780 = vst [vmem:[%s259 + $0x700] sm:$0xff] %v3530
      %3781 = vst [vmem:[%s259 + $0x708] sm:$0xff] %v3531
      %3782 = vst [vmem:[%s259 + $0x710] sm:$0xff] %v3532
      %3783 = vst [vmem:[%s259 + $0x718] sm:$0xff] %v3533
      %3784 = vst [vmem:[%s259 + $0x720] sm:$0xff] %v3534
      %3785 = vst [vmem:[%s259 + $0x728] sm:$0xff] %v3535
      %3786 = vst [vmem:[%s259 + $0x730] sm:$0xff] %v3536
      %3787 = vst [vmem:[%s259 + $0x738] sm:$0xff] %v3537
      %3788 = vst [vmem:[%s259 + $0x740] sm:$0xff] %v3538
      %3789 = vst [vmem:[%s259 + $0x748] sm:$0xff] %v3539
      %3790 = vst [vmem:[%s259 + $0x750] sm:$0xff] %v3540
      %3791 = vst [vmem:[%s259 + $0x758] sm:$0xff] %v3541
      %3792 = vst [vmem:[%s259 + $0x760] sm:$0xff] %v3542
      %3793 = vst [vmem:[%s259 + $0x768] sm:$0xff] %v3543
      %3794 = vst [vmem:[%s259 + $0x770] sm:$0xff] %v3544
      %3795 = vst [vmem:[%s259 + $0x778] sm:$0xff] %v3545
      %3796 = vst [vmem:[%s259 + $0x780] sm:$0xff] %v3546
      %3797 = vst [vmem:[%s259 + $0x788] sm:$0xff] %v3547
      %3798 = vst [vmem:[%s259 + $0x790] sm:$0xff] %v3548
      %3799 = vst [vmem:[%s259 + $0x798] sm:$0xff] %v3549
      %3800 = vst [vmem:[%s259 + $0x7a0] sm:$0xff] %v3550
      %3801 = vst [vmem:[%s259 + $0x7a8] sm:$0xff] %v3551
      %3802 = vst [vmem:[%s259 + $0x7b0] sm:$0xff] %v3552
      %3803 = vst [vmem:[%s259 + $0x7b8] sm:$0xff] %v3553
      %3804 = vst [vmem:[%s259 + $0x7c0] sm:$0xff] %v3554
      %3805 = vst [vmem:[%s259 + $0x7c8] sm:$0xff] %v3555
      %s3806 = smul.u32 2, %s21
      %p3807 = scmp.lt.s32.totalorder %s20, 1
      %s3808 = scalar_select %p3807, %s20, 1
      %p3809 = scmp.lt.s32.totalorder %s3806, 1
      %s3810 = scalar_select %p3809, %s3806, 1
      %s3811 = smul.addr %s3808, 250
      %s3812 = sadd.s32 %s3810, %s3811
      %s3813 = smul.addr %s3812, 8
      %s3814 = scalar_lea.vmem %s3, %s3813
      %s3815 = smul.u32 2, %s21
      %p3816 = scmp.lt.s32.totalorder %s20, 1
      %s3817 = scalar_select %p3816, %s20, 1
      %p3818 = scmp.lt.s32.totalorder %s3815, 1
      %s3819 = scalar_select %p3818, %s3815, 1
      %s3820 = smul.addr %s3817, 250
      %s3821 = sadd.s32 %s3819, %s3820
      %s3822 = smul.addr %s3821, 8
      %s3823 = scalar_lea.vmem %s4, %s3822
      // Predicated region
      $region33: #{attention_mechanism_m.1} parent=31 // pred_check
        %p3824 = pneg %p118
      $region34: #{attention_mechanism_m.1} parent=31 // pred_check_branch
        %3826 = sbr.rel (%p3824) target = $region36
      $region35: #{attention_mechanism_m.1} parent=31 // pred_region
        %s3827 = smul.u32 2, %s21
      $region36: #{attention_mechanism_m.1} parent=31 // pred_fallthru
        _
      // Predicated region
      $region37: #{attention_mechanism_m.1} parent=31 // pred_check
        %p3828 = pneg %p146
      $region38: #{attention_mechanism_m.1} parent=31 // pred_check_branch
        %3830 = sbr.rel (%p3828) target = $region40
      $region39: #{attention_mechanism_m.1} parent=31 // pred_region
        %s3831 = smul.u32 2, %s21
      $region40: #{attention_mechanism_m.1} parent=31 // pred_fallthru
        _
    $region32: #{attention_mechanism_m.1} parent=5 // pred_fallthru
      _
    %p3832 = scmp.le.s32.totalorder 2, %s11
    // Predicated region
    $region41: #{attention_mechanism_m.1} parent=5 // pred_check
      %p3833 = pneg %p3832
    $region42: #{attention_mechanism_m.1} parent=5 // pred_check_branch
      %3835 = sbr.rel (%p3833) target = $region44
    $region43: #{attention_mechanism_m.1} parent=5 // pred_region
      %s3836 = ssub.s32 %s11, 2
      // Predicated region
      $region45: #{attention_mechanism_m.1} parent=43 // pred_check
        %p3837 = pneg %p124
      $region46: #{attention_mechanism_m.1} parent=43 // pred_check_branch
        %3839 = sbr.rel (%p3837) target = $region48
      $region47: #{attention_mechanism_m.1} parent=43 // pred_region
        %s3840 = smul.u32 2, %s23
        %p3841 = scmp.lt.s32.totalorder %s22, 1
        %s3842 = scalar_select %p3841, %s22, 1
        %p3843 = scmp.lt.s32.totalorder %s3840, 1
        %s3844 = scalar_select %p3843, %s3840, 1
        %s3845 = smul.addr %s3842, 250
        %s3846 = sadd.s32 %s3844, %s3845
        %s3847 = smul.addr %s3846, 8
        %s3848 = scalar_lea.vmem %s3, %s3847
      $region48: #{attention_mechanism_m.1} parent=43 // pred_fallthru
        _
      // Predicated region
      $region49: #{attention_mechanism_m.1} parent=43 // pred_check
        %p3849 = pneg %p152
      $region50: #{attention_mechanism_m.1} parent=43 // pred_check_branch
        %3851 = sbr.rel (%p3849) target = $region52
      $region51: #{attention_mechanism_m.1} parent=43 // pred_region
        %s3852 = smul.u32 2, %s23
        %p3853 = scmp.lt.s32.totalorder %s22, 1
        %s3854 = scalar_select %p3853, %s22, 1
        %p3855 = scmp.lt.s32.totalorder %s3852, 1
        %s3856 = scalar_select %p3855, %s3852, 1
        %s3857 = smul.addr %s3854, 250
        %s3858 = sadd.s32 %s3856, %s3857
        %s3859 = smul.addr %s3858, 8
        %s3860 = scalar_lea.vmem %s4, %s3859
      $region52: #{attention_mechanism_m.1} parent=43 // pred_fallthru
        _
    $region44: #{attention_mechanism_m.1} parent=5 // pred_fallthru
      _
  $region6: #{attention_mechanism_m.1} parent=0 // loop_footer
    %s15 = sadd.s32 1, %s11
  $region7: #{attention_mechanism_m.1} parent=0 // loop_footer_branch
    %10 = sbr.rel target = $region3
  $region8: #{attention_mechanism_m.1} parent=0 // loop_exit
    _

</llo_original>
